<compile_context>
chip_gen: v7x
topology: tpu7x:2x2x1
jax: 0.10.0
libtpu: 0.0.40
codegen_flags: <defaults>
</compile_context>

<pallas_src>
import functools

import jax
import jax.numpy as jnp
from jax import lax
from jax.experimental import pallas as pl
from jax.experimental.pallas import tpu as pltpu

K = 4                      # conv kernel size
S = 2                      # conv stride
H0 = 98                    # input spatial size (forced by fc_layers' 23*23 input)
H1 = (H0 - K) // S + 1     # 48
H2 = (H1 - K) // S + 1     # 23
N2P = H1 // S              # 24: conv2 rows computed per image (row 23 is junk, skipped in FC)
NCLS = 10


def _fold_selection(w, in_size, out_size):
    """Weight-folded column-selection matrices.

    B[ki, v, p] = sum_kj w[ki, kj] * [v == S*p + kj], so that
    conv(x)[o, p] = sum_ki  x[S*o + ki, :] @ B[ki]            (valid, stride S).
    Built once in plain JAX in the wrapper (tiny), resident in VMEM for the kernel.
    """
    v = jnp.arange(in_size)[:, None]
    p = jnp.arange(out_size)[None, :]
    mats = []
    for ki in range(K):
        m = jnp.zeros((in_size, out_size), jnp.float32)
        for kj in range(K):
            m = m + w[ki, kj] * (v == S * p + kj).astype(jnp.float32)
        mats.append(m)
    return jnp.stack(mats, axis=0)                       # (K, in_size, out_size)


def _baseline_kernel(bblk, x_ref, b1_ref, b2_ref, w3_ref, bias_ref, out_ref, h1_scr):
    # ---------------- conv1: 98x98 -> 48x48 (stride 2) + ReLU -----------------------
    # Row taps via sublane stride-2 loads; column taps + weights via one matmul per ki.
    acc1 = None
    for ki in range(K):
        xs = x_ref[:, pl.ds(ki, H1, stride=S), :]        # (bblk, 48, 98) strided sublane load
        xs = xs.reshape(bblk * H1, H0)                   # free: 48 % 8 == 0
        m = jnp.dot(xs, b1_ref[ki], preferred_element_type=jnp.float32)   # (bblk*48, 48)
        acc1 = m if acc1 is None else acc1 + m
    h1_scr[0:bblk * H1, :] = jnp.maximum(acc1, 0.0)      # relu(conv1), rows = (b, o1)
    # zero the scratch tail so the stride-2 reads below never see stale VMEM
    h1_scr[bblk * H1:bblk * H1 + 8, :] = jnp.zeros((8, H1), jnp.float32)

    # ---------------- conv2: 48x48 -> 23x23 (stride 2) + ReLU -----------------------
    # 48 rows/image == 2 * 24 positions/image, so a single stride-2 slice over the
    # batch-flattened scratch stays image-aligned; the 24th row per image is junk
    # (reads the next image / zero tail) and is skipped by the FC loop below.
    acc2 = None
    for ki in range(K):
        hs = h1_scr[pl.ds(ki, bblk * N2P, stride=S), :]  # (bblk*24, 48)
        m = jnp.dot(hs, b2_ref[ki], preferred_element_type=jnp.float32)   # (bblk*24, 23)
        acc2 = m if acc2 is None else acc2 + m
    h2 = jnp.maximum(acc2, 0.0).reshape(bblk, N2P, H2)   # (bblk, 24, 23)

    # ---------------- Linear(529, 10) on the MXU ------------------------------------
    # out[b, c] = sum_{o2<23} h2[b, o2, :] @ W3[o2] + bias
    acc = jnp.zeros((bblk, NCLS), jnp.float32)
    for o2 in range(H2):                                 # o2 = 23 (junk row) never read
        acc = acc + jnp.dot(h2[:, o2, :], w3_ref[o2],
                            preferred_element_type=jnp.float32)           # (bblk, 10)
    out_ref[...] = acc + bias_ref[...]                   # (bblk, 10), lane-dense per step


@functools.partial(jax.jit, static_argnames=("block_b",))
def baseline_forward(x, w1, w2, fc_w, fc_b, *, block_b=8):
    """x: (B, 1, 98, 98) f32; returns (B, 10) f32."""
    B = x.shape[0]
    x = x.astype(jnp.float32).reshape(B, H0, H0)         # drop channel=1 (plain JAX)
    Bp = ((B + block_b - 1) // block_b) * block_b
    if Bp != B:
        x = jnp.pad(x, ((0, Bp - B), (0, 0), (0, 0)))

    # Grid-invariant operands, built once in the wrapper (weights folded in).
    w1 = w1.reshape(K, K).astype(jnp.float32)
    w2 = w2.reshape(K, K).astype(jnp.float32)
    b1 = _fold_selection(w1, H0, H1)                     # (4, 98, 48)
    b2 = _fold_selection(w2, H1, H2)                     # (4, 48, 23)
    w3 = fc_w.astype(jnp.float32).T.reshape(H2, H2, NCLS)  # (23, 23, 10): torch row-major flatten
    bias = fc_b.astype(jnp.float32).reshape(1, NCLS)     # (1, 10)

    kernel = functools.partial(_baseline_kernel, block_b)
    out = pl.pallas_call(
        kernel,
        out_shape=jax.ShapeDtypeStruct((Bp, NCLS), jnp.float32),
        grid=(Bp // block_b,),
        in_specs=[
            pl.BlockSpec((block_b, H0, H0), lambda i: (i, 0, 0)),   # x, batch-blocked
            pl.BlockSpec((K, H0, H1), lambda i: (0, 0, 0)),         # b1, resident
            pl.BlockSpec((K, H1, H2), lambda i: (0, 0, 0)),         # b2, resident
            pl.BlockSpec((H2, H2, NCLS), lambda i: (0, 0, 0)),      # fc weight, resident
            pl.BlockSpec((1, NCLS), lambda i: (0, 0)),              # fc bias, resident
        ],
        out_specs=pl.BlockSpec((block_b, NCLS), lambda i: (i, 0)),
        scratch_shapes=[pltpu.VMEM((block_b * H1 + 8, H1), jnp.float32)],
        compiler_params=pltpu.CompilerParams(dimension_semantics=("parallel",)),
    )(x, b1, b2, w3, bias)
    return out[:B]


def reference_forward(x, w1, w2, fc_w, fc_b):
    """Pure-JAX reference matching the PyTorch module (high precision)."""
    def conv(h, w):
        return lax.conv_general_dilated(
            h, w.reshape(1, 1, K, K), window_strides=(S, S), padding="VALID",
            dimension_numbers=("NCHW", "OIHW", "NCHW"),
            precision=lax.Precision.HIGHEST)
    h = jnp.maximum(conv(x, w1), 0.0)
    h = jnp.maximum(conv(h, w2), 0.0)
    flat = h.reshape(h.shape[0], -1)                      # (B, 529), row-major like torch .view
    return jnp.dot(flat, fc_w.T, precision=lax.Precision.HIGHEST) + fc_b


if __name__ == "__main__":
    key = jax.random.PRNGKey(0)
    kx, k1, k2, kw, kb = jax.random.split(key, 5)

    B = 16
    x = jax.random.normal(kx, (B, 1, H0, H0), dtype=jnp.float32)
    w1 = 0.25 * jax.random.normal(k1, (K, K), dtype=jnp.float32)             # Conv2d #1 (1,1,4,4)
    w2 = 0.25 * jax.random.normal(k2, (K, K), dtype=jnp.float32)             # Conv2d #2 (1,1,4,4)
    fc_w = 0.05 * jax.random.normal(kw, (NCLS, H2 * H2), dtype=jnp.float32)  # Linear weight (10,529)
    fc_b = 0.1 * jax.random.normal(kb, (NCLS,), dtype=jnp.float32)           # Linear bias (10,)

    out = baseline_forward(x, w1, w2, fc_w, fc_b, block_b=8)
    out = jax.block_until_ready(out)

    ref = reference_forward(x, w1, w2, fc_w, fc_b)
    assert out.shape == (B, NCLS), out.shape
    # Tolerance accounts for MXU default-precision (bf16-class) passes in the kernel
    # matmuls vs. the HIGHEST-precision reference; structural bugs would be O(0.1-1).
    assert jnp.allclose(out, ref, atol=2e-2, rtol=2e-2), (out, ref)

    print("KERNEL_OK")
</pallas_src>

<mosaic_0001>
module attributes {stable_mosaic.version = 11 : i64} {
  func.func @_baseline_kernel(%arg0: i32, %arg1: memref<8x98x98xf32, #tpu.memory_space<vmem>>, %arg2: memref<4x98x48xf32, #tpu.memory_space<vmem>>, %arg3: memref<4x48x23xf32, #tpu.memory_space<vmem>>, %arg4: memref<23x23x10xf32, #tpu.memory_space<vmem>>, %arg5: memref<1x10xf32, #tpu.memory_space<vmem>>, %arg6: memref<8x10xf32, #tpu.memory_space<vmem>>, %arg7: memref<392x48xf32, #tpu.memory_space<vmem>>) attributes {dimension_semantics = [#tpu.dimension_semantics<parallel>], iteration_bounds = array<i64: 2>, scalar_prefetch = 0 : i64, scratch_operands = 1 : i64, tpu.core_type = #tpu.core_type<tc>, window_params = [{transform_indices = @transform_0, window_bounds = array<i64: 8, 98, 98>}, {pipeline_mode = #tpu.pipeline_mode<synchronous>, transform_indices = @transform_1, window_bounds = array<i64: 4, 98, 48>}, {pipeline_mode = #tpu.pipeline_mode<synchronous>, transform_indices = @transform_2, window_bounds = array<i64: 4, 48, 23>}, {pipeline_mode = #tpu.pipeline_mode<synchronous>, transform_indices = @transform_3, window_bounds = array<i64: 23, 23, 10>}, {pipeline_mode = #tpu.pipeline_mode<synchronous>, transform_indices = @transform_4, window_bounds = array<i64: 1, 10>}, {transform_indices = @transform_5, window_bounds = array<i64: 8, 10>}]} {
    %c0 = arith.constant 0 : index
    %c0_0 = arith.constant 0 : index
    %c0_1 = arith.constant 0 : index
    %0 = tpu.strided_load %arg1[%c0, %c0_0, %c0_1] {strides = array<i32: 1, 2, 1>} : memref<8x98x98xf32, #tpu.memory_space<vmem>>, vector<8x48x98xf32>
    %1 = vector.shape_cast %0 : vector<8x48x98xf32> to vector<384x98xf32>
    %c0_2 = arith.constant 0 : index
    %c0_3 = arith.constant 0 : index
    %c0_4 = arith.constant 0 : index
    %2 = vector.load %arg2[%c0_2, %c0_3, %c0_4] : memref<4x98x48xf32, #tpu.memory_space<vmem>>, vector<1x98x48xf32>
    %3 = vector.shape_cast %2 : vector<1x98x48xf32> to vector<98x48xf32>
    %cst = arith.constant dense<0.000000e+00> : vector<384x48xf32>
    %4 = tpu.matmul %1, %3, %cst {dimension_numbers = #tpu.dot_dimension_numbers<[1], [0], [0], [1], [0, 0, 1, 1], [], []>} : vector<384x98xf32>, vector<98x48xf32>, vector<384x48xf32> -> vector<384x48xf32>
    %c0_5 = arith.constant 0 : index
    %c1 = arith.constant 1 : index
    %c0_6 = arith.constant 0 : index
    %5 = tpu.strided_load %arg1[%c0_5, %c1, %c0_6] {strides = array<i32: 1, 2, 1>} : memref<8x98x98xf32, #tpu.memory_space<vmem>>, vector<8x48x98xf32>
    %6 = vector.shape_cast %5 : vector<8x48x98xf32> to vector<384x98xf32>
    %c1_7 = arith.constant 1 : index
    %c0_8 = arith.constant 0 : index
    %c0_9 = arith.constant 0 : index
    %7 = vector.load %arg2[%c1_7, %c0_8, %c0_9] : memref<4x98x48xf32, #tpu.memory_space<vmem>>, vector<1x98x48xf32>
    %8 = vector.shape_cast %7 : vector<1x98x48xf32> to vector<98x48xf32>
    %cst_10 = arith.constant dense<0.000000e+00> : vector<384x48xf32>
    %9 = tpu.matmul %6, %8, %cst_10 {dimension_numbers = #tpu.dot_dimension_numbers<[1], [0], [0], [1], [0, 0, 1, 1], [], []>} : vector<384x98xf32>, vector<98x48xf32>, vector<384x48xf32> -> vector<384x48xf32>
    %10 = arith.addf %4, %9 : vector<384x48xf32>
    %c0_11 = arith.constant 0 : index
    %c2 = arith.constant 2 : index
    %c0_12 = arith.constant 0 : index
    %11 = tpu.strided_load %arg1[%c0_11, %c2, %c0_12] {strides = array<i32: 1, 2, 1>} : memref<8x98x98xf32, #tpu.memory_space<vmem>>, vector<8x48x98xf32>
    %12 = vector.shape_cast %11 : vector<8x48x98xf32> to vector<384x98xf32>
    %c2_13 = arith.constant 2 : index
    %c0_14 = arith.constant 0 : index
    %c0_15 = arith.constant 0 : index
    %13 = vector.load %arg2[%c2_13, %c0_14, %c0_15] : memref<4x98x48xf32, #tpu.memory_space<vmem>>, vector<1x98x48xf32>
    %14 = vector.shape_cast %13 : vector<1x98x48xf32> to vector<98x48xf32>
    %cst_16 = arith.constant dense<0.000000e+00> : vector<384x48xf32>
    %15 = tpu.matmul %12, %14, %cst_16 {dimension_numbers = #tpu.dot_dimension_numbers<[1], [0], [0], [1], [0, 0, 1, 1], [], []>} : vector<384x98xf32>, vector<98x48xf32>, vector<384x48xf32> -> vector<384x48xf32>
    %16 = arith.addf %10, %15 : vector<384x48xf32>
    %c0_17 = arith.constant 0 : index
    %c3 = arith.constant 3 : index
    %c0_18 = arith.constant 0 : index
    %17 = tpu.strided_load %arg1[%c0_17, %c3, %c0_18] {strides = array<i32: 1, 2, 1>} : memref<8x98x98xf32, #tpu.memory_space<vmem>>, vector<8x48x98xf32>
    %18 = vector.shape_cast %17 : vector<8x48x98xf32> to vector<384x98xf32>
    %c3_19 = arith.constant 3 : index
    %c0_20 = arith.constant 0 : index
    %c0_21 = arith.constant 0 : index
    %19 = vector.load %arg2[%c3_19, %c0_20, %c0_21] : memref<4x98x48xf32, #tpu.memory_space<vmem>>, vector<1x98x48xf32>
    %20 = vector.shape_cast %19 : vector<1x98x48xf32> to vector<98x48xf32>
    %cst_22 = arith.constant dense<0.000000e+00> : vector<384x48xf32>
    %21 = tpu.matmul %18, %20, %cst_22 {dimension_numbers = #tpu.dot_dimension_numbers<[1], [0], [0], [1], [0, 0, 1, 1], [], []>} : vector<384x98xf32>, vector<98x48xf32>, vector<384x48xf32> -> vector<384x48xf32>
    %22 = arith.addf %16, %21 : vector<384x48xf32>
    %cst_23 = arith.constant 0.000000e+00 : f32
    %23 = vector.broadcast %cst_23 : f32 to vector<384x48xf32>
    %24 = arith.maximumf %22, %23 : vector<384x48xf32>
    %c0_24 = arith.constant 0 : index
    %c0_25 = arith.constant 0 : index
    %25 = vector.load %arg7[%c0_24, %c0_25] : memref<392x48xf32, #tpu.memory_space<vmem>>, vector<384x48xf32>
    tpu.vector_store %arg7[%c0_24, %c0_25], %24 {strides = array<i32>} : memref<392x48xf32, #tpu.memory_space<vmem>>, vector<384x48xf32>,
    %cst_26 = arith.constant 0.000000e+00 : f32
    %26 = vector.broadcast %cst_26 : f32 to vector<8x48xf32>
    %c384 = arith.constant 384 : index
    %c0_27 = arith.constant 0 : index
    %27 = vector.load %arg7[%c384, %c0_27] : memref<392x48xf32, #tpu.memory_space<vmem>>, vector<8x48xf32>
    tpu.vector_store %arg7[%c384, %c0_27], %26 {strides = array<i32>} : memref<392x48xf32, #tpu.memory_space<vmem>>, vector<8x48xf32>,
    %c0_28 = arith.constant 0 : index
    %c0_29 = arith.constant 0 : index
    %28 = tpu.strided_load %arg7[%c0_28, %c0_29] {strides = array<i32: 2, 1>} : memref<392x48xf32, #tpu.memory_space<vmem>>, vector<192x48xf32>
    %c0_30 = arith.constant 0 : index
    %c0_31 = arith.constant 0 : index
    %c0_32 = arith.constant 0 : index
    %29 = vector.load %arg3[%c0_30, %c0_31, %c0_32] : memref<4x48x23xf32, #tpu.memory_space<vmem>>, vector<1x48x23xf32>
    %30 = vector.shape_cast %29 : vector<1x48x23xf32> to vector<48x23xf32>
    %cst_33 = arith.constant dense<0.000000e+00> : vector<192x23xf32>
    %31 = tpu.matmul %28, %30, %cst_33 {dimension_numbers = #tpu.dot_dimension_numbers<[1], [0], [0], [1], [0, 0, 1, 1], [], []>} : vector<192x48xf32>, vector<48x23xf32>, vector<192x23xf32> -> vector<192x23xf32>
    %c1_34 = arith.constant 1 : index
    %c0_35 = arith.constant 0 : index
    %32 = tpu.strided_load %arg7[%c1_34, %c0_35] {strides = array<i32: 2, 1>} : memref<392x48xf32, #tpu.memory_space<vmem>>, vector<192x48xf32>
    %c1_36 = arith.constant 1 : index
    %c0_37 = arith.constant 0 : index
    %c0_38 = arith.constant 0 : index
    %33 = vector.load %arg3[%c1_36, %c0_37, %c0_38] : memref<4x48x23xf32, #tpu.memory_space<vmem>>, vector<1x48x23xf32>
    %34 = vector.shape_cast %33 : vector<1x48x23xf32> to vector<48x23xf32>
    %cst_39 = arith.constant dense<0.000000e+00> : vector<192x23xf32>
    %35 = tpu.matmul %32, %34, %cst_39 {dimension_numbers = #tpu.dot_dimension_numbers<[1], [0], [0], [1], [0, 0, 1, 1], [], []>} : vector<192x48xf32>, vector<48x23xf32>, vector<192x23xf32> -> vector<192x23xf32>
    %36 = arith.addf %31, %35 : vector<192x23xf32>
    %c2_40 = arith.constant 2 : index
    %c0_41 = arith.constant 0 : index
    %37 = tpu.strided_load %arg7[%c2_40, %c0_41] {strides = array<i32: 2, 1>} : memref<392x48xf32, #tpu.memory_space<vmem>>, vector<192x48xf32>
    %c2_42 = arith.constant 2 : index
    %c0_43 = arith.constant 0 : index
    %c0_44 = arith.constant 0 : index
    %38 = vector.load %arg3[%c2_42, %c0_43, %c0_44] : memref<4x48x23xf32, #tpu.memory_space<vmem>>, vector<1x48x23xf32>
    %39 = vector.shape_cast %38 : vector<1x48x23xf32> to vector<48x23xf32>
    %cst_45 = arith.constant dense<0.000000e+00> : vector<192x23xf32>
    %40 = tpu.matmul %37, %39, %cst_45 {dimension_numbers = #tpu.dot_dimension_numbers<[1], [0], [0], [1], [0, 0, 1, 1], [], []>} : vector<192x48xf32>, vector<48x23xf32>, vector<192x23xf32> -> vector<192x23xf32>
    %41 = arith.addf %36, %40 : vector<192x23xf32>
    %c3_46 = arith.constant 3 : index
    %c0_47 = arith.constant 0 : index
    %42 = tpu.strided_load %arg7[%c3_46, %c0_47] {strides = array<i32: 2, 1>} : memref<392x48xf32, #tpu.memory_space<vmem>>, vector<192x48xf32>
    %c3_48 = arith.constant 3 : index
    %c0_49 = arith.constant 0 : index
    %c0_50 = arith.constant 0 : index
    %43 = vector.load %arg3[%c3_48, %c0_49, %c0_50] : memref<4x48x23xf32, #tpu.memory_space<vmem>>, vector<1x48x23xf32>
    %44 = vector.shape_cast %43 : vector<1x48x23xf32> to vector<48x23xf32>
    %cst_51 = arith.constant dense<0.000000e+00> : vector<192x23xf32>
    %45 = tpu.matmul %42, %44, %cst_51 {dimension_numbers = #tpu.dot_dimension_numbers<[1], [0], [0], [1], [0, 0, 1, 1], [], []>} : vector<192x48xf32>, vector<48x23xf32>, vector<192x23xf32> -> vector<192x23xf32>
    %46 = arith.addf %41, %45 : vector<192x23xf32>
    %cst_52 = arith.constant 0.000000e+00 : f32
    %47 = vector.broadcast %cst_52 : f32 to vector<192x23xf32>
    %48 = arith.maximumf %46, %47 : vector<192x23xf32>
    %49 = vector.shape_cast %48 : vector<192x23xf32> to vector<8x24x23xf32>
    %cst_53 = arith.constant 0.000000e+00 : f32
    %50 = vector.broadcast %cst_53 : f32 to vector<8x10xf32>
    %51 = vector.extract_strided_slice %49 {offsets = [0, 0, 0], sizes = [8, 1, 23], strides = [1, 1, 1]} : vector<8x24x23xf32> to vector<8x1x23xf32>
    %52 = vector.shape_cast %51 : vector<8x1x23xf32> to vector<8x23xf32>
    %c0_54 = arith.constant 0 : index
    %c0_55 = arith.constant 0 : index
    %c0_56 = arith.constant 0 : index
    %53 = vector.load %arg4[%c0_54, %c0_55, %c0_56] : memref<23x23x10xf32, #tpu.memory_space<vmem>>, vector<1x23x10xf32>
    %54 = vector.shape_cast %53 : vector<1x23x10xf32> to vector<23x10xf32>
    %cst_57 = arith.constant dense<0.000000e+00> : vector<8x10xf32>
    %55 = tpu.matmul %52, %54, %cst_57 {dimension_numbers = #tpu.dot_dimension_numbers<[1], [0], [0], [1], [0, 0, 1, 1], [], []>} : vector<8x23xf32>, vector<23x10xf32>, vector<8x10xf32> -> vector<8x10xf32>
    %56 = arith.addf %50, %55 : vector<8x10xf32>
    %57 = vector.extract_strided_slice %49 {offsets = [0, 1, 0], sizes = [8, 1, 23], strides = [1, 1, 1]} : vector<8x24x23xf32> to vector<8x1x23xf32>
    %58 = vector.shape_cast %57 : vector<8x1x23xf32> to vector<8x23xf32>
    %c1_58 = arith.constant 1 : index
    %c0_59 = arith.constant 0 : index
    %c0_60 = arith.constant 0 : index
    %59 = vector.load %arg4[%c1_58, %c0_59, %c0_60] : memref<23x23x10xf32, #tpu.memory_space<vmem>>, vector<1x23x10xf32>
    %60 = vector.shape_cast %59 : vector<1x23x10xf32> to vector<23x10xf32>
    %cst_61 = arith.constant dense<0.000000e+00> : vector<8x10xf32>
    %61 = tpu.matmul %58, %60, %cst_61 {dimension_numbers = #tpu.dot_dimension_numbers<[1], [0], [0], [1], [0, 0, 1, 1], [], []>} : vector<8x23xf32>, vector<23x10xf32>, vector<8x10xf32> -> vector<8x10xf32>
    %62 = arith.addf %56, %61 : vector<8x10xf32>
    %63 = vector.extract_strided_slice %49 {offsets = [0, 2, 0], sizes = [8, 1, 23], strides = [1, 1, 1]} : vector<8x24x23xf32> to vector<8x1x23xf32>
    %64 = vector.shape_cast %63 : vector<8x1x23xf32> to vector<8x23xf32>
    %c2_62 = arith.constant 2 : index
    %c0_63 = arith.constant 0 : index
    %c0_64 = arith.constant 0 : index
    %65 = vector.load %arg4[%c2_62, %c0_63, %c0_64] : memref<23x23x10xf32, #tpu.memory_space<vmem>>, vector<1x23x10xf32>
    %66 = vector.shape_cast %65 : vector<1x23x10xf32> to vector<23x10xf32>
    %cst_65 = arith.constant dense<0.000000e+00> : vector<8x10xf32>
    %67 = tpu.matmul %64, %66, %cst_65 {dimension_numbers = #tpu.dot_dimension_numbers<[1], [0], [0], [1], [0, 0, 1, 1], [], []>} : vector<8x23xf32>, vector<23x10xf32>, vector<8x10xf32> -> vector<8x10xf32>
    %68 = arith.addf %62, %67 : vector<8x10xf32>
    %69 = vector.extract_strided_slice %49 {offsets = [0, 3, 0], sizes = [8, 1, 23], strides = [1, 1, 1]} : vector<8x24x23xf32> to vector<8x1x23xf32>
    %70 = vector.shape_cast %69 : vector<8x1x23xf32> to vector<8x23xf32>
    %c3_66 = arith.constant 3 : index
    %c0_67 = arith.constant 0 : index
    %c0_68 = arith.constant 0 : index
    %71 = vector.load %arg4[%c3_66, %c0_67, %c0_68] : memref<23x23x10xf32, #tpu.memory_space<vmem>>, vector<1x23x10xf32>
    %72 = vector.shape_cast %71 : vector<1x23x10xf32> to vector<23x10xf32>
    %cst_69 = arith.constant dense<0.000000e+00> : vector<8x10xf32>
    %73 = tpu.matmul %70, %72, %cst_69 {dimension_numbers = #tpu.dot_dimension_numbers<[1], [0], [0], [1], [0, 0, 1, 1], [], []>} : vector<8x23xf32>, vector<23x10xf32>, vector<8x10xf32> -> vector<8x10xf32>
    %74 = arith.addf %68, %73 : vector<8x10xf32>
    %75 = vector.extract_strided_slice %49 {offsets = [0, 4, 0], sizes = [8, 1, 23], strides = [1, 1, 1]} : vector<8x24x23xf32> to vector<8x1x23xf32>
    %76 = vector.shape_cast %75 : vector<8x1x23xf32> to vector<8x23xf32>
    %c4 = arith.constant 4 : index
    %c0_70 = arith.constant 0 : index
    %c0_71 = arith.constant 0 : index
    %77 = vector.load %arg4[%c4, %c0_70, %c0_71] : memref<23x23x10xf32, #tpu.memory_space<vmem>>, vector<1x23x10xf32>
    %78 = vector.shape_cast %77 : vector<1x23x10xf32> to vector<23x10xf32>
    %cst_72 = arith.constant dense<0.000000e+00> : vector<8x10xf32>
    %79 = tpu.matmul %76, %78, %cst_72 {dimension_numbers = #tpu.dot_dimension_numbers<[1], [0], [0], [1], [0, 0, 1, 1], [], []>} : vector<8x23xf32>, vector<23x10xf32>, vector<8x10xf32> -> vector<8x10xf32>
    %80 = arith.addf %74, %79 : vector<8x10xf32>
    %81 = vector.extract_strided_slice %49 {offsets = [0, 5, 0], sizes = [8, 1, 23], strides = [1, 1, 1]} : vector<8x24x23xf32> to vector<8x1x23xf32>
    %82 = vector.shape_cast %81 : vector<8x1x23xf32> to vector<8x23xf32>
    %c5 = arith.constant 5 : index
    %c0_73 = arith.constant 0 : index
    %c0_74 = arith.constant 0 : index
    %83 = vector.load %arg4[%c5, %c0_73, %c0_74] : memref<23x23x10xf32, #tpu.memory_space<vmem>>, vector<1x23x10xf32>
    %84 = vector.shape_cast %83 : vector<1x23x10xf32> to vector<23x10xf32>
    %cst_75 = arith.constant dense<0.000000e+00> : vector<8x10xf32>
    %85 = tpu.matmul %82, %84, %cst_75 {dimension_numbers = #tpu.dot_dimension_numbers<[1], [0], [0], [1], [0, 0, 1, 1], [], []>} : vector<8x23xf32>, vector<23x10xf32>, vector<8x10xf32> -> vector<8x10xf32>
    %86 = arith.addf %80, %85 : vector<8x10xf32>
    %87 = vector.extract_strided_slice %49 {offsets = [0, 6, 0], sizes = [8, 1, 23], strides = [1, 1, 1]} : vector<8x24x23xf32> to vector<8x1x23xf32>
    %88 = vector.shape_cast %87 : vector<8x1x23xf32> to vector<8x23xf32>
    %c6 = arith.constant 6 : index
    %c0_76 = arith.constant 0 : index
    %c0_77 = arith.constant 0 : index
    %89 = vector.load %arg4[%c6, %c0_76, %c0_77] : memref<23x23x10xf32, #tpu.memory_space<vmem>>, vector<1x23x10xf32>
    %90 = vector.shape_cast %89 : vector<1x23x10xf32> to vector<23x10xf32>
    %cst_78 = arith.constant dense<0.000000e+00> : vector<8x10xf32>
    %91 = tpu.matmul %88, %90, %cst_78 {dimension_numbers = #tpu.dot_dimension_numbers<[1], [0], [0], [1], [0, 0, 1, 1], [], []>} : vector<8x23xf32>, vector<23x10xf32>, vector<8x10xf32> -> vector<8x10xf32>
    %92 = arith.addf %86, %91 : vector<8x10xf32>
    %93 = vector.extract_strided_slice %49 {offsets = [0, 7, 0], sizes = [8, 1, 23], strides = [1, 1, 1]} : vector<8x24x23xf32> to vector<8x1x23xf32>
    %94 = vector.shape_cast %93 : vector<8x1x23xf32> to vector<8x23xf32>
    %c7 = arith.constant 7 : index
    %c0_79 = arith.constant 0 : index
    %c0_80 = arith.constant 0 : index
    %95 = vector.load %arg4[%c7, %c0_79, %c0_80] : memref<23x23x10xf32, #tpu.memory_space<vmem>>, vector<1x23x10xf32>
    %96 = vector.shape_cast %95 : vector<1x23x10xf32> to vector<23x10xf32>
    %cst_81 = arith.constant dense<0.000000e+00> : vector<8x10xf32>
    %97 = tpu.matmul %94, %96, %cst_81 {dimension_numbers = #tpu.dot_dimension_numbers<[1], [0], [0], [1], [0, 0, 1, 1], [], []>} : vector<8x23xf32>, vector<23x10xf32>, vector<8x10xf32> -> vector<8x10xf32>
    %98 = arith.addf %92, %97 : vector<8x10xf32>
    %99 = vector.extract_strided_slice %49 {offsets = [0, 8, 0], sizes = [8, 1, 23], strides = [1, 1, 1]} : vector<8x24x23xf32> to vector<8x1x23xf32>
    %100 = vector.shape_cast %99 : vector<8x1x23xf32> to vector<8x23xf32>
    %c8 = arith.constant 8 : index
    %c0_82 = arith.constant 0 : index
    %c0_83 = arith.constant 0 : index
    %101 = vector.load %arg4[%c8, %c0_82, %c0_83] : memref<23x23x10xf32, #tpu.memory_space<vmem>>, vector<1x23x10xf32>
    %102 = vector.shape_cast %101 : vector<1x23x10xf32> to vector<23x10xf32>
    %cst_84 = arith.constant dense<0.000000e+00> : vector<8x10xf32>
    %103 = tpu.matmul %100, %102, %cst_84 {dimension_numbers = #tpu.dot_dimension_numbers<[1], [0], [0], [1], [0, 0, 1, 1], [], []>} : vector<8x23xf32>, vector<23x10xf32>, vector<8x10xf32> -> vector<8x10xf32>
    %104 = arith.addf %98, %103 : vector<8x10xf32>
    %105 = vector.extract_strided_slice %49 {offsets = [0, 9, 0], sizes = [8, 1, 23], strides = [1, 1, 1]} : vector<8x24x23xf32> to vector<8x1x23xf32>
    %106 = vector.shape_cast %105 : vector<8x1x23xf32> to vector<8x23xf32>
    %c9 = arith.constant 9 : index
    %c0_85 = arith.constant 0 : index
    %c0_86 = arith.constant 0 : index
    %107 = vector.load %arg4[%c9, %c0_85, %c0_86] : memref<23x23x10xf32, #tpu.memory_space<vmem>>, vector<1x23x10xf32>
    %108 = vector.shape_cast %107 : vector<1x23x10xf32> to vector<23x10xf32>
    %cst_87 = arith.constant dense<0.000000e+00> : vector<8x10xf32>
    %109 = tpu.matmul %106, %108, %cst_87 {dimension_numbers = #tpu.dot_dimension_numbers<[1], [0], [0], [1], [0, 0, 1, 1], [], []>} : vector<8x23xf32>, vector<23x10xf32>, vector<8x10xf32> -> vector<8x10xf32>
    %110 = arith.addf %104, %109 : vector<8x10xf32>
    %111 = vector.extract_strided_slice %49 {offsets = [0, 10, 0], sizes = [8, 1, 23], strides = [1, 1, 1]} : vector<8x24x23xf32> to vector<8x1x23xf32>
    %112 = vector.shape_cast %111 : vector<8x1x23xf32> to vector<8x23xf32>
    %c10 = arith.constant 10 : index
    %c0_88 = arith.constant 0 : index
    %c0_89 = arith.constant 0 : index
    %113 = vector.load %arg4[%c10, %c0_88, %c0_89] : memref<23x23x10xf32, #tpu.memory_space<vmem>>, vector<1x23x10xf32>
    %114 = vector.shape_cast %113 : vector<1x23x10xf32> to vector<23x10xf32>
    %cst_90 = arith.constant dense<0.000000e+00> : vector<8x10xf32>
    %115 = tpu.matmul %112, %114, %cst_90 {dimension_numbers = #tpu.dot_dimension_numbers<[1], [0], [0], [1], [0, 0, 1, 1], [], []>} : vector<8x23xf32>, vector<23x10xf32>, vector<8x10xf32> -> vector<8x10xf32>
    %116 = arith.addf %110, %115 : vector<8x10xf32>
    %117 = vector.extract_strided_slice %49 {offsets = [0, 11, 0], sizes = [8, 1, 23], strides = [1, 1, 1]} : vector<8x24x23xf32> to vector<8x1x23xf32>
    %118 = vector.shape_cast %117 : vector<8x1x23xf32> to vector<8x23xf32>
    %c11 = arith.constant 11 : index
    %c0_91 = arith.constant 0 : index
    %c0_92 = arith.constant 0 : index
    %119 = vector.load %arg4[%c11, %c0_91, %c0_92] : memref<23x23x10xf32, #tpu.memory_space<vmem>>, vector<1x23x10xf32>
    %120 = vector.shape_cast %119 : vector<1x23x10xf32> to vector<23x10xf32>
    %cst_93 = arith.constant dense<0.000000e+00> : vector<8x10xf32>
    %121 = tpu.matmul %118, %120, %cst_93 {dimension_numbers = #tpu.dot_dimension_numbers<[1], [0], [0], [1], [0, 0, 1, 1], [], []>} : vector<8x23xf32>, vector<23x10xf32>, vector<8x10xf32> -> vector<8x10xf32>
    %122 = arith.addf %116, %121 : vector<8x10xf32>
    %123 = vector.extract_strided_slice %49 {offsets = [0, 12, 0], sizes = [8, 1, 23], strides = [1, 1, 1]} : vector<8x24x23xf32> to vector<8x1x23xf32>
    %124 = vector.shape_cast %123 : vector<8x1x23xf32> to vector<8x23xf32>
    %c12 = arith.constant 12 : index
    %c0_94 = arith.constant 0 : index
    %c0_95 = arith.constant 0 : index
    %125 = vector.load %arg4[%c12, %c0_94, %c0_95] : memref<23x23x10xf32, #tpu.memory_space<vmem>>, vector<1x23x10xf32>
    %126 = vector.shape_cast %125 : vector<1x23x10xf32> to vector<23x10xf32>
    %cst_96 = arith.constant dense<0.000000e+00> : vector<8x10xf32>
    %127 = tpu.matmul %124, %126, %cst_96 {dimension_numbers = #tpu.dot_dimension_numbers<[1], [0], [0], [1], [0, 0, 1, 1], [], []>} : vector<8x23xf32>, vector<23x10xf32>, vector<8x10xf32> -> vector<8x10xf32>
    %128 = arith.addf %122, %127 : vector<8x10xf32>
    %129 = vector.extract_strided_slice %49 {offsets = [0, 13, 0], sizes = [8, 1, 23], strides = [1, 1, 1]} : vector<8x24x23xf32> to vector<8x1x23xf32>
    %130 = vector.shape_cast %129 : vector<8x1x23xf32> to vector<8x23xf32>
    %c13 = arith.constant 13 : index
    %c0_97 = arith.constant 0 : index
    %c0_98 = arith.constant 0 : index
    %131 = vector.load %arg4[%c13, %c0_97, %c0_98] : memref<23x23x10xf32, #tpu.memory_space<vmem>>, vector<1x23x10xf32>
    %132 = vector.shape_cast %131 : vector<1x23x10xf32> to vector<23x10xf32>
    %cst_99 = arith.constant dense<0.000000e+00> : vector<8x10xf32>
    %133 = tpu.matmul %130, %132, %cst_99 {dimension_numbers = #tpu.dot_dimension_numbers<[1], [0], [0], [1], [0, 0, 1, 1], [], []>} : vector<8x23xf32>, vector<23x10xf32>, vector<8x10xf32> -> vector<8x10xf32>
    %134 = arith.addf %128, %133 : vector<8x10xf32>
    %135 = vector.extract_strided_slice %49 {offsets = [0, 14, 0], sizes = [8, 1, 23], strides = [1, 1, 1]} : vector<8x24x23xf32> to vector<8x1x23xf32>
    %136 = vector.shape_cast %135 : vector<8x1x23xf32> to vector<8x23xf32>
    %c14 = arith.constant 14 : index
    %c0_100 = arith.constant 0 : index
    %c0_101 = arith.constant 0 : index
    %137 = vector.load %arg4[%c14, %c0_100, %c0_101] : memref<23x23x10xf32, #tpu.memory_space<vmem>>, vector<1x23x10xf32>
    %138 = vector.shape_cast %137 : vector<1x23x10xf32> to vector<23x10xf32>
    %cst_102 = arith.constant dense<0.000000e+00> : vector<8x10xf32>
    %139 = tpu.matmul %136, %138, %cst_102 {dimension_numbers = #tpu.dot_dimension_numbers<[1], [0], [0], [1], [0, 0, 1, 1], [], []>} : vector<8x23xf32>, vector<23x10xf32>, vector<8x10xf32> -> vector<8x10xf32>
    %140 = arith.addf %134, %139 : vector<8x10xf32>
    %141 = vector.extract_strided_slice %49 {offsets = [0, 15, 0], sizes = [8, 1, 23], strides = [1, 1, 1]} : vector<8x24x23xf32> to vector<8x1x23xf32>
    %142 = vector.shape_cast %141 : vector<8x1x23xf32> to vector<8x23xf32>
    %c15 = arith.constant 15 : index
    %c0_103 = arith.constant 0 : index
    %c0_104 = arith.constant 0 : index
    %143 = vector.load %arg4[%c15, %c0_103, %c0_104] : memref<23x23x10xf32, #tpu.memory_space<vmem>>, vector<1x23x10xf32>
    %144 = vector.shape_cast %143 : vector<1x23x10xf32> to vector<23x10xf32>
    %cst_105 = arith.constant dense<0.000000e+00> : vector<8x10xf32>
    %145 = tpu.matmul %142, %144, %cst_105 {dimension_numbers = #tpu.dot_dimension_numbers<[1], [0], [0], [1], [0, 0, 1, 1], [], []>} : vector<8x23xf32>, vector<23x10xf32>, vector<8x10xf32> -> vector<8x10xf32>
    %146 = arith.addf %140, %145 : vector<8x10xf32>
    %147 = vector.extract_strided_slice %49 {offsets = [0, 16, 0], sizes = [8, 1, 23], strides = [1, 1, 1]} : vector<8x24x23xf32> to vector<8x1x23xf32>
    %148 = vector.shape_cast %147 : vector<8x1x23xf32> to vector<8x23xf32>
    %c16 = arith.constant 16 : index
    %c0_106 = arith.constant 0 : index
    %c0_107 = arith.constant 0 : index
    %149 = vector.load %arg4[%c16, %c0_106, %c0_107] : memref<23x23x10xf32, #tpu.memory_space<vmem>>, vector<1x23x10xf32>
    %150 = vector.shape_cast %149 : vector<1x23x10xf32> to vector<23x10xf32>
    %cst_108 = arith.constant dense<0.000000e+00> : vector<8x10xf32>
    %151 = tpu.matmul %148, %150, %cst_108 {dimension_numbers = #tpu.dot_dimension_numbers<[1], [0], [0], [1], [0, 0, 1, 1], [], []>} : vector<8x23xf32>, vector<23x10xf32>, vector<8x10xf32> -> vector<8x10xf32>
    %152 = arith.addf %146, %151 : vector<8x10xf32>
    %153 = vector.extract_strided_slice %49 {offsets = [0, 17, 0], sizes = [8, 1, 23], strides = [1, 1, 1]} : vector<8x24x23xf32> to vector<8x1x23xf32>
    %154 = vector.shape_cast %153 : vector<8x1x23xf32> to vector<8x23xf32>
    %c17 = arith.constant 17 : index
    %c0_109 = arith.constant 0 : index
    %c0_110 = arith.constant 0 : index
    %155 = vector.load %arg4[%c17, %c0_109, %c0_110] : memref<23x23x10xf32, #tpu.memory_space<vmem>>, vector<1x23x10xf32>
    %156 = vector.shape_cast %155 : vector<1x23x10xf32> to vector<23x10xf32>
    %cst_111 = arith.constant dense<0.000000e+00> : vector<8x10xf32>
    %157 = tpu.matmul %154, %156, %cst_111 {dimension_numbers = #tpu.dot_dimension_numbers<[1], [0], [0], [1], [0, 0, 1, 1], [], []>} : vector<8x23xf32>, vector<23x10xf32>, vector<8x10xf32> -> vector<8x10xf32>
    %158 = arith.addf %152, %157 : vector<8x10xf32>
    %159 = vector.extract_strided_slice %49 {offsets = [0, 18, 0], sizes = [8, 1, 23], strides = [1, 1, 1]} : vector<8x24x23xf32> to vector<8x1x23xf32>
    %160 = vector.shape_cast %159 : vector<8x1x23xf32> to vector<8x23xf32>
    %c18 = arith.constant 18 : index
    %c0_112 = arith.constant 0 : index
    %c0_113 = arith.constant 0 : index
    %161 = vector.load %arg4[%c18, %c0_112, %c0_113] : memref<23x23x10xf32, #tpu.memory_space<vmem>>, vector<1x23x10xf32>
    %162 = vector.shape_cast %161 : vector<1x23x10xf32> to vector<23x10xf32>
    %cst_114 = arith.constant dense<0.000000e+00> : vector<8x10xf32>
    %163 = tpu.matmul %160, %162, %cst_114 {dimension_numbers = #tpu.dot_dimension_numbers<[1], [0], [0], [1], [0, 0, 1, 1], [], []>} : vector<8x23xf32>, vector<23x10xf32>, vector<8x10xf32> -> vector<8x10xf32>
    %164 = arith.addf %158, %163 : vector<8x10xf32>
    %165 = vector.extract_strided_slice %49 {offsets = [0, 19, 0], sizes = [8, 1, 23], strides = [1, 1, 1]} : vector<8x24x23xf32> to vector<8x1x23xf32>
    %166 = vector.shape_cast %165 : vector<8x1x23xf32> to vector<8x23xf32>
    %c19 = arith.constant 19 : index
    %c0_115 = arith.constant 0 : index
    %c0_116 = arith.constant 0 : index
    %167 = vector.load %arg4[%c19, %c0_115, %c0_116] : memref<23x23x10xf32, #tpu.memory_space<vmem>>, vector<1x23x10xf32>
    %168 = vector.shape_cast %167 : vector<1x23x10xf32> to vector<23x10xf32>
    %cst_117 = arith.constant dense<0.000000e+00> : vector<8x10xf32>
    %169 = tpu.matmul %166, %168, %cst_117 {dimension_numbers = #tpu.dot_dimension_numbers<[1], [0], [0], [1], [0, 0, 1, 1], [], []>} : vector<8x23xf32>, vector<23x10xf32>, vector<8x10xf32> -> vector<8x10xf32>
    %170 = arith.addf %164, %169 : vector<8x10xf32>
    %171 = vector.extract_strided_slice %49 {offsets = [0, 20, 0], sizes = [8, 1, 23], strides = [1, 1, 1]} : vector<8x24x23xf32> to vector<8x1x23xf32>
    %172 = vector.shape_cast %171 : vector<8x1x23xf32> to vector<8x23xf32>
    %c20 = arith.constant 20 : index
    %c0_118 = arith.constant 0 : index
    %c0_119 = arith.constant 0 : index
    %173 = vector.load %arg4[%c20, %c0_118, %c0_119] : memref<23x23x10xf32, #tpu.memory_space<vmem>>, vector<1x23x10xf32>
    %174 = vector.shape_cast %173 : vector<1x23x10xf32> to vector<23x10xf32>
    %cst_120 = arith.constant dense<0.000000e+00> : vector<8x10xf32>
    %175 = tpu.matmul %172, %174, %cst_120 {dimension_numbers = #tpu.dot_dimension_numbers<[1], [0], [0], [1], [0, 0, 1, 1], [], []>} : vector<8x23xf32>, vector<23x10xf32>, vector<8x10xf32> -> vector<8x10xf32>
    %176 = arith.addf %170, %175 : vector<8x10xf32>
    %177 = vector.extract_strided_slice %49 {offsets = [0, 21, 0], sizes = [8, 1, 23], strides = [1, 1, 1]} : vector<8x24x23xf32> to vector<8x1x23xf32>
    %178 = vector.shape_cast %177 : vector<8x1x23xf32> to vector<8x23xf32>
    %c21 = arith.constant 21 : index
    %c0_121 = arith.constant 0 : index
    %c0_122 = arith.constant 0 : index
    %179 = vector.load %arg4[%c21, %c0_121, %c0_122] : memref<23x23x10xf32, #tpu.memory_space<vmem>>, vector<1x23x10xf32>
    %180 = vector.shape_cast %179 : vector<1x23x10xf32> to vector<23x10xf32>
    %cst_123 = arith.constant dense<0.000000e+00> : vector<8x10xf32>
    %181 = tpu.matmul %178, %180, %cst_123 {dimension_numbers = #tpu.dot_dimension_numbers<[1], [0], [0], [1], [0, 0, 1, 1], [], []>} : vector<8x23xf32>, vector<23x10xf32>, vector<8x10xf32> -> vector<8x10xf32>
    %182 = arith.addf %176, %181 : vector<8x10xf32>
    %183 = vector.extract_strided_slice %49 {offsets = [0, 22, 0], sizes = [8, 1, 23], strides = [1, 1, 1]} : vector<8x24x23xf32> to vector<8x1x23xf32>
    %184 = vector.shape_cast %183 : vector<8x1x23xf32> to vector<8x23xf32>
    %c22 = arith.constant 22 : index
    %c0_124 = arith.constant 0 : index
    %c0_125 = arith.constant 0 : index
    %185 = vector.load %arg4[%c22, %c0_124, %c0_125] : memref<23x23x10xf32, #tpu.memory_space<vmem>>, vector<1x23x10xf32>
    %186 = vector.shape_cast %185 : vector<1x23x10xf32> to vector<23x10xf32>
    %cst_126 = arith.constant dense<0.000000e+00> : vector<8x10xf32>
    %187 = tpu.matmul %184, %186, %cst_126 {dimension_numbers = #tpu.dot_dimension_numbers<[1], [0], [0], [1], [0, 0, 1, 1], [], []>} : vector<8x23xf32>, vector<23x10xf32>, vector<8x10xf32> -> vector<8x10xf32>
    %188 = arith.addf %182, %187 : vector<8x10xf32>
    %c0_127 = arith.constant 0 : index
    %c0_128 = arith.constant 0 : index
    %189 = vector.load %arg5[%c0_127, %c0_128] : memref<1x10xf32, #tpu.memory_space<vmem>>, vector<1x10xf32>
    %190 = vector.broadcast %189 : vector<1x10xf32> to vector<8x10xf32>
    %191 = arith.addf %188, %190 : vector<8x10xf32>
    %c0_129 = arith.constant 0 : index
    %c0_130 = arith.constant 0 : index
    %192 = vector.load %arg6[%c0_129, %c0_130] : memref<8x10xf32, #tpu.memory_space<vmem>>, vector<8x10xf32>
    tpu.vector_store %arg6[%c0_129, %c0_130], %191 {strides = array<i32>} : memref<8x10xf32, #tpu.memory_space<vmem>>, vector<8x10xf32>,
    return
  }
  func.func @transform_0(%arg0: i32) -> (i32, i32, i32) {
    %c0_i32 = arith.constant 0 : i32
    %c0_i32_0 = arith.constant 0 : i32
    %c0_i32_1 = arith.constant 0 : i32
    return %arg0, %c0_i32, %c0_i32_0 : i32, i32, i32
  }
  func.func @transform_1(%arg0: i32) -> (i32, i32, i32) {
    %c0_i32 = arith.constant 0 : i32
    %c0_i32_0 = arith.constant 0 : i32
    %c0_i32_1 = arith.constant 0 : i32
    %c0_i32_2 = arith.constant 0 : i32
    return %c0_i32, %c0_i32_0, %c0_i32_1 : i32, i32, i32
  }
  func.func @transform_2(%arg0: i32) -> (i32, i32, i32) {
    %c0_i32 = arith.constant 0 : i32
    %c0_i32_0 = arith.constant 0 : i32
    %c0_i32_1 = arith.constant 0 : i32
    %c0_i32_2 = arith.constant 0 : i32
    return %c0_i32, %c0_i32_0, %c0_i32_1 : i32, i32, i32
  }
  func.func @transform_3(%arg0: i32) -> (i32, i32, i32) {
    %c0_i32 = arith.constant 0 : i32
    %c0_i32_0 = arith.constant 0 : i32
    %c0_i32_1 = arith.constant 0 : i32
    %c0_i32_2 = arith.constant 0 : i32
    return %c0_i32, %c0_i32_0, %c0_i32_1 : i32, i32, i32
  }
  func.func @transform_4(%arg0: i32) -> (i32, i32) {
    %c0_i32 = arith.constant 0 : i32
    %c0_i32_0 = arith.constant 0 : i32
    %c0_i32_1 = arith.constant 0 : i32
    return %c0_i32, %c0_i32_0 : i32, i32
  }
  func.func @transform_5(%arg0: i32) -> (i32, i32) {
    %c0_i32 = arith.constant 0 : i32
    %c0_i32_0 = arith.constant 0 : i32
    return %arg0, %c0_i32 : i32, i32
  }
}

</mosaic_0001>

<llo_original>
// kernel: baseline_forward.1
$region0: #{baseline_forward.1}
  #allocation0 [shape = 'u32[]', space=smem, size = 0x4, offset = 0x4, fixed_abs, tag = 'smem constant byte address 0x4 - core index']
  #allocation1 [shape = 'u32[144,128]{1,0:T(1,128)}', space=vmem, size = 0x12000, scoped, tag = 'internal scratch']
  #allocation2 [shape = 'f32[392,48]{1,0:T(8,128)}', space=vmem, size = 0x31000, scoped, tag = 'scratch operand']
  %s0 = inlined_call_operand.vmem [shape: f32[16,98,98], index: 0, kind: input, shape index: {}]
  %s1 = inlined_call_operand.vmem [shape: f32[4,98,48], index: 1, kind: input, shape index: {}]
  %s2 = inlined_call_operand.vmem [shape: f32[4,48,23], index: 2, kind: input, shape index: {}]
  %s3 = inlined_call_operand.vmem [shape: f32[23,23,10], index: 3, kind: input, shape index: {}]
  %s4 = inlined_call_operand.vmem [shape: f32[1,10], index: 4, kind: input, shape index: {}]
  %s5 = inlined_call_operand.hbm [shape: f32[16,10], index: 5, kind: output, shape index: {}]
  %s6 = sld [smem:[#allocation0]]
  $region53: #{baseline_forward.1} parent=0
    _
  %s8 = ssub.s32 1, %s6
  %s9 = scalar_select 0, %s8, %s6
  $region1: #{baseline_forward.1} parent=0
    #allocation3 [shape = 'u8[8192]{0}', space=vmem, size = 0x2000, scoped, tag = 'output window, operand 0']
    #allocation4 [shape = 's32[2]{0}', space=sflag, size = 0x8, scoped, tag = 'scoped memory for baseline_forward.1']
    %10 = vsyncpa [#allocation4], 0
    %s11 = scalar_lea.sflag [#allocation4], 1
    %12 = vsyncpa %s11, 0
    loop: start=0, step=1, limit=4
    $region2: #{baseline_forward.1} parent=1 // loop_pre_header
      _
    $region3: #{baseline_forward.1} parent=1 // loop_header
      %s14 = sphi 0, %s18
      %p15 = scmp.ge.s32.totalorder %s14, 4
      %s24 = sphi 0, %s26
      %s27 = sphi 0, %s24
      %s28 = sphi 0, %s27
      %s44 = sphi 0, %s28
      %s48 = sphi 0, %s48
      %s50 = sphi 0, %s48
      %s51 = sphi 0, %s50
      %s65 = sphi 0, %s51
      %s69 = sphi 0, %s69
      %s71 = sphi 0, %s69
      %s72 = sphi 0, %s71
      %s86 = sphi 0, %s72
      %s90 = sphi 0, %s90
      %s92 = sphi 0, %s90
      %s93 = sphi 0, %s92
      %s107 = sphi 0, %s93
      %s111 = sphi 0, %s111
      %s113 = sphi 0, %s111
      %s114 = sphi 0, %s113
      %s128 = sphi 0, %s114
      %s134 = sphi 0, %s136
      %s137 = sphi 0, %s134
      %s138 = sphi 0, %s137
      %s154 = sphi 0, %s138
    $region4: #{baseline_forward.1} parent=1 // loop_header_branch
      %17 = sbr.rel (%p15) target = $region8
    $region5: #{baseline_forward.1} parent=1 // loop_body
      %s19 = ssub.s32 %s14, 1
      %s20 = ssub.s32 %s14, 2
      %s21 = sadd.s32 %s14, 1
      %s22 = ssub.s32 %s14, %s21
      %p23 = scmp.eq.s32.totalorder %s22, 0
      %s25 = sadd.s32 %s24, 1
      %s26 = scalar_select %p23, %s24, %s25
      %p29 = pneg %p23
      %p30 = scmp.eq.s32.totalorder %s14, 1
      %p31 = por %p29, %p30
      %p32 = scmp.ne.s32.totalorder %s24, %s27
      %p33 = scmp.eq.s32.totalorder %s14, 0
      %p34 = por %p32, %p33
      %p35 = scmp.ne.s32.totalorder %s24, %s27
      %p36 = scmp.eq.s32.totalorder %s19, 1
      %p37 = por %p35, %p36
      %p38 = scmp.ne.s32.totalorder %s27, %s28
      %p39 = scmp.eq.s32.totalorder %s19, 0
      %p40 = por %p38, %p39
      %p41 = scmp.ne.s32.totalorder %s27, %s28
      %p42 = scmp.eq.s32.totalorder %s20, 1
      %p43 = por %p41, %p42
      %p45 = scmp.ne.s32.totalorder %s28, %s44
      %p46 = scmp.eq.s32.totalorder %s20, 0
      %p47 = por %p45, %p46
      %s49 = sadd.s32 %s48, 1
      %p52 = scmp.eq.s32.totalorder %s14, 1
      %p53 = scmp.ne.s32.totalorder %s48, %s50
      %p54 = scmp.eq.s32.totalorder %s14, 0
      %p55 = por %p53, %p54
      %p56 = scmp.ne.s32.totalorder %s48, %s50
      %p57 = scmp.eq.s32.totalorder %s19, 1
      %p58 = por %p56, %p57
      %p59 = scmp.ne.s32.totalorder %s50, %s51
      %p60 = scmp.eq.s32.totalorder %s19, 0
      %p61 = por %p59, %p60
      %p62 = scmp.ne.s32.totalorder %s50, %s51
      %p63 = scmp.eq.s32.totalorder %s20, 1
      %p64 = por %p62, %p63
      %p66 = scmp.ne.s32.totalorder %s51, %s65
      %p67 = scmp.eq.s32.totalorder %s20, 0
      %p68 = por %p66, %p67
      %s70 = sadd.s32 %s69, 1
      %p73 = scmp.eq.s32.totalorder %s14, 1
      %p74 = scmp.ne.s32.totalorder %s69, %s71
      %p75 = scmp.eq.s32.totalorder %s14, 0
      %p76 = por %p74, %p75
      %p77 = scmp.ne.s32.totalorder %s69, %s71
      %p78 = scmp.eq.s32.totalorder %s19, 1
      %p79 = por %p77, %p78
      %p80 = scmp.ne.s32.totalorder %s71, %s72
      %p81 = scmp.eq.s32.totalorder %s19, 0
      %p82 = por %p80, %p81
      %p83 = scmp.ne.s32.totalorder %s71, %s72
      %p84 = scmp.eq.s32.totalorder %s20, 1
      %p85 = por %p83, %p84
      %p87 = scmp.ne.s32.totalorder %s72, %s86
      %p88 = scmp.eq.s32.totalorder %s20, 0
      %p89 = por %p87, %p88
      %s91 = sadd.s32 %s90, 1
      %p94 = scmp.eq.s32.totalorder %s14, 1
      %p95 = scmp.ne.s32.totalorder %s90, %s92
      %p96 = scmp.eq.s32.totalorder %s14, 0
      %p97 = por %p95, %p96
      %p98 = scmp.ne.s32.totalorder %s90, %s92
      %p99 = scmp.eq.s32.totalorder %s19, 1
      %p100 = por %p98, %p99
      %p101 = scmp.ne.s32.totalorder %s92, %s93
      %p102 = scmp.eq.s32.totalorder %s19, 0
      %p103 = por %p101, %p102
      %p104 = scmp.ne.s32.totalorder %s92, %s93
      %p105 = scmp.eq.s32.totalorder %s20, 1
      %p106 = por %p104, %p105
      %p108 = scmp.ne.s32.totalorder %s93, %s107
      %p109 = scmp.eq.s32.totalorder %s20, 0
      %p110 = por %p108, %p109
      %s112 = sadd.s32 %s111, 1
      %p115 = scmp.eq.s32.totalorder %s14, 1
      %p116 = scmp.ne.s32.totalorder %s111, %s113
      %p117 = scmp.eq.s32.totalorder %s14, 0
      %p118 = por %p116, %p117
      %p119 = scmp.ne.s32.totalorder %s111, %s113
      %p120 = scmp.eq.s32.totalorder %s19, 1
      %p121 = por %p119, %p120
      %p122 = scmp.ne.s32.totalorder %s113, %s114
      %p123 = scmp.eq.s32.totalorder %s19, 0
      %p124 = por %p122, %p123
      %p125 = scmp.ne.s32.totalorder %s113, %s114
      %p126 = scmp.eq.s32.totalorder %s20, 1
      %p127 = por %p125, %p126
      %p129 = scmp.ne.s32.totalorder %s114, %s128
      %p130 = scmp.eq.s32.totalorder %s20, 0
      %p131 = por %p129, %p130
      %s132 = ssub.s32 %s14, %s21
      %p133 = scmp.eq.s32.totalorder %s132, 0
      %s135 = sadd.s32 %s134, 1
      %s136 = scalar_select %p133, %s134, %s135
      %p139 = pneg %p133
      %p140 = scmp.eq.s32.totalorder %s14, 1
      %p141 = por %p139, %p140
      %p142 = scmp.ne.s32.totalorder %s134, %s137
      %p143 = scmp.eq.s32.totalorder %s14, 0
      %p144 = por %p142, %p143
      %p145 = scmp.ne.s32.totalorder %s134, %s137
      %p146 = scmp.eq.s32.totalorder %s19, 1
      %p147 = por %p145, %p146
      %p148 = scmp.ne.s32.totalorder %s137, %s138
      %p149 = scmp.eq.s32.totalorder %s19, 0
      %p150 = por %p148, %p149
      %p151 = scmp.ne.s32.totalorder %s137, %s138
      %p152 = scmp.eq.s32.totalorder %s20, 1
      %p153 = por %p151, %p152
      %p155 = scmp.ne.s32.totalorder %s138, %s154
      %p156 = scmp.eq.s32.totalorder %s20, 0
      %p157 = por %p155, %p156
      %p158 = scmp.le.s32.totalorder 1, %s14
      %p159 = scmp.lt.s32.totalorder %s14, 3
      %p160 = pnand %p158, %p159
      %p161 = pneg %p160
      // Predicated region
      $region9: #{baseline_forward.1} parent=5 // pred_check
        _
      $region10: #{baseline_forward.1} parent=5 // pred_check_branch
        %163 = sbr.rel (%p160) target = $region12
      $region11: #{baseline_forward.1} parent=5 // pred_region
        %s164 = ssub.s32 %s14, 1
        // Predicated region
        $region13: #{baseline_forward.1} parent=11 // pred_check
          %p165 = pneg %p61
        $region14: #{baseline_forward.1} parent=11 // pred_check_branch
          %167 = sbr.rel (%p165) target = $region16
        $region15: #{baseline_forward.1} parent=11 // pred_region
          _
        $region16: #{baseline_forward.1} parent=11 // pred_fallthru
          _
        // Predicated region
        $region17: #{baseline_forward.1} parent=11 // pred_check
          %p168 = pneg %p82
        $region18: #{baseline_forward.1} parent=11 // pred_check_branch
          %170 = sbr.rel (%p168) target = $region20
        $region19: #{baseline_forward.1} parent=11 // pred_region
          _
        $region20: #{baseline_forward.1} parent=11 // pred_fallthru
          _
        // Predicated region
        $region21: #{baseline_forward.1} parent=11 // pred_check
          %p171 = pneg %p103
        $region22: #{baseline_forward.1} parent=11 // pred_check_branch
          %173 = sbr.rel (%p171) target = $region24
        $region23: #{baseline_forward.1} parent=11 // pred_region
          _
        $region24: #{baseline_forward.1} parent=11 // pred_fallthru
          _
        // Predicated region
        $region25: #{baseline_forward.1} parent=11 // pred_check
          %p174 = pneg %p124
        $region26: #{baseline_forward.1} parent=11 // pred_check_branch
          %176 = sbr.rel (%p174) target = $region28
        $region27: #{baseline_forward.1} parent=11 // pred_region
          _
        $region28: #{baseline_forward.1} parent=11 // pred_fallthru
          _
      $region12: #{baseline_forward.1} parent=5 // pred_fallthru
        _
      %p177 = scmp.lt.s32.totalorder %s14, 2
      // Predicated region
      $region29: #{baseline_forward.1} parent=5 // pred_check
        %p178 = pneg %p177
      $region30: #{baseline_forward.1} parent=5 // pred_check_branch
        %180 = sbr.rel (%p178) target = $region32
      $region31: #{baseline_forward.1} parent=5 // pred_region
        // Predicated region
        $region33: #{baseline_forward.1} parent=31 // pred_check
          %p181 = pneg %p34
        $region34: #{baseline_forward.1} parent=31 // pred_check_branch
          %183 = sbr.rel (%p181) target = $region36
        $region35: #{baseline_forward.1} parent=31 // pred_region
          %s184 = smul.u32 8, %s14
          %p185 = scmp.lt.s32.totalorder %s184, 15
          %s186 = scalar_select %p185, %s184, 15
          %s187 = smul.addr %s186, 13
          %s188 = smul.addr %s187, 8
          %s189 = scalar_lea.vmem %s0, %s188
          %s190 = smul.u32 8, %s14
        $region36: #{baseline_forward.1} parent=31 // pred_fallthru
          _
      $region32: #{baseline_forward.1} parent=5 // pred_fallthru
        _
      %p191 = scmp.le.s32.totalorder 1, %s14
      %p192 = scmp.lt.s32.totalorder %s14, 3
      %p193 = pnand %p191, %p192
      %p194 = pneg %p193
      // Predicated region
      $region37: #{baseline_forward.1} parent=5 // pred_check
        _
      $region38: #{baseline_forward.1} parent=5 // pred_check_branch
        %196 = sbr.rel (%p193) target = $region40
      $region39: #{baseline_forward.1} parent=5 // pred_region
        %s197 = ssub.s32 %s14, 1
        %s198 = smul.u32 8, %s19
        %p199 = scmp.lt.s32.totalorder %s198, 15
        %s200 = scalar_select %p199, %s198, 15
        %s201 = smul.addr %s200, 13
        %s202 = smul.addr %s201, 8
        %s203 = scalar_lea.vmem %s0, %s202
        %p204 = pneg %p40
        %p205 = pneg %p37
        %p206 = pneg %p61
        %p207 = pneg %p58
        %p208 = pneg %p82
        %p209 = pneg %p79
        %p210 = pneg %p103
        %p211 = pneg %p100
        %p212 = pneg %p124
        %p213 = pneg %p121
        %p214 = pneg %p150
        %p215 = pneg %p147
        %s216 = sand.u32 %s137, 1
        %s217 = scalar_lea.sflag [#allocation4], %s216
        %s218 = sand.u32 %s137, 1
        %s219 = smul.addr %s218, 8
        %s220 = scalar_lea.vmem [#allocation3], %s219
        %s221 = smul.u32 8, %s19
        %p222 = scmp.lt.s32.totalorder %s221, 15
        %s223 = scalar_select %p222, %s221, 15
        %s224 = smul.addr %s223, 13
        %s225 = smul.addr %s224, 8
        %s226 = scalar_lea.vmem %s0, %s225
        %s227 = smul.u32 8, %s19
        %v228 = vld [vmem:[%s226] ss:$2 sm:$0xff]
        %s229 = scalar_lea.vmem %s226, 16
        %v230 = vld [vmem:[%s229] ss:$2 sm:$0xff]
        %s231 = scalar_lea.vmem %s226, 32
        %v232 = vld [vmem:[%s231] ss:$2 sm:$0xff]
        %s233 = scalar_lea.vmem %s226, 48
        %v234 = vld [vmem:[%s233] ss:$2 sm:$0xff]
        %s235 = scalar_lea.vmem %s226, 64
        %v236 = vld [vmem:[%s235] ss:$2 sm:$0xff]
        %s237 = scalar_lea.vmem %s226, 80
        %v238 = vld [vmem:[%s237] ss:$2 sm:$0xff]
        %s239 = scalar_lea.vmem %s226, 104
        %v240 = vld [vmem:[%s239] ss:$2 sm:$0xff]
        %s241 = scalar_lea.vmem %s226, 120
        %v242 = vld [vmem:[%s241] ss:$2 sm:$0xff]
        %s243 = scalar_lea.vmem %s226, 136
        %v244 = vld [vmem:[%s243] ss:$2 sm:$0xff]
        %s245 = scalar_lea.vmem %s226, 152
        %v246 = vld [vmem:[%s245] ss:$2 sm:$0xff]
        %s247 = scalar_lea.vmem %s226, 168
        %v248 = vld [vmem:[%s247] ss:$2 sm:$0xff]
        %s249 = scalar_lea.vmem %s226, 184
        %v250 = vld [vmem:[%s249] ss:$2 sm:$0xff]
        %s251 = scalar_lea.vmem %s226, 208
        %v252 = vld [vmem:[%s251] ss:$2 sm:$0xff]
        %s253 = scalar_lea.vmem %s226, 224
        %v254 = vld [vmem:[%s253] ss:$2 sm:$0xff]
        %s255 = scalar_lea.vmem %s226, 240
        %v256 = vld [vmem:[%s255] ss:$2 sm:$0xff]
        %s257 = scalar_lea.vmem %s226, 256
        %v258 = vld [vmem:[%s257] ss:$2 sm:$0xff]
        %s259 = scalar_lea.vmem %s226, 272
        %v260 = vld [vmem:[%s259] ss:$2 sm:$0xff]
        %s261 = scalar_lea.vmem %s226, 288
        %v262 = vld [vmem:[%s261] ss:$2 sm:$0xff]
        %s263 = scalar_lea.vmem %s226, 312
        %v264 = vld [vmem:[%s263] ss:$2 sm:$0xff]
        %s265 = scalar_lea.vmem %s226, 328
        %v266 = vld [vmem:[%s265] ss:$2 sm:$0xff]
        %s267 = scalar_lea.vmem %s226, 344
        %v268 = vld [vmem:[%s267] ss:$2 sm:$0xff]
        %s269 = scalar_lea.vmem %s226, 360
        %v270 = vld [vmem:[%s269] ss:$2 sm:$0xff]
        %s271 = scalar_lea.vmem %s226, 376
        %v272 = vld [vmem:[%s271] ss:$2 sm:$0xff]
        %s273 = scalar_lea.vmem %s226, 392
        %v274 = vld [vmem:[%s273] ss:$2 sm:$0xff]
        %s275 = scalar_lea.vmem %s226, 416
        %v276 = vld [vmem:[%s275] ss:$2 sm:$0xff]
        %s277 = scalar_lea.vmem %s226, 432
        %v278 = vld [vmem:[%s277] ss:$2 sm:$0xff]
        %s279 = scalar_lea.vmem %s226, 448
        %v280 = vld [vmem:[%s279] ss:$2 sm:$0xff]
        %s281 = scalar_lea.vmem %s226, 464
        %v282 = vld [vmem:[%s281] ss:$2 sm:$0xff]
        %s283 = scalar_lea.vmem %s226, 480
        %v284 = vld [vmem:[%s283] ss:$2 sm:$0xff]
        %s285 = scalar_lea.vmem %s226, 496
        %v286 = vld [vmem:[%s285] ss:$2 sm:$0xff]
        %s287 = scalar_lea.vmem %s226, 520
        %v288 = vld [vmem:[%s287] ss:$2 sm:$0xff]
        %s289 = scalar_lea.vmem %s226, 536
        %v290 = vld [vmem:[%s289] ss:$2 sm:$0xff]
        %s291 = scalar_lea.vmem %s226, 552
        %v292 = vld [vmem:[%s291] ss:$2 sm:$0xff]
        %s293 = scalar_lea.vmem %s226, 568
        %v294 = vld [vmem:[%s293] ss:$2 sm:$0xff]
        %s295 = scalar_lea.vmem %s226, 584
        %v296 = vld [vmem:[%s295] ss:$2 sm:$0xff]
        %s297 = scalar_lea.vmem %s226, 600
        %v298 = vld [vmem:[%s297] ss:$2 sm:$0xff]
        %s299 = scalar_lea.vmem %s226, 624
        %v300 = vld [vmem:[%s299] ss:$2 sm:$0xff]
        %s301 = scalar_lea.vmem %s226, 640
        %v302 = vld [vmem:[%s301] ss:$2 sm:$0xff]
        %s303 = scalar_lea.vmem %s226, 656
        %v304 = vld [vmem:[%s303] ss:$2 sm:$0xff]
        %s305 = scalar_lea.vmem %s226, 672
        %v306 = vld [vmem:[%s305] ss:$2 sm:$0xff]
        %s307 = scalar_lea.vmem %s226, 688
        %v308 = vld [vmem:[%s307] ss:$2 sm:$0xff]
        %s309 = scalar_lea.vmem %s226, 704
        %v310 = vld [vmem:[%s309] ss:$2 sm:$0xff]
        %s311 = scalar_lea.vmem %s226, 728
        %v312 = vld [vmem:[%s311] ss:$2 sm:$0xff]
        %s313 = scalar_lea.vmem %s226, 744
        %v314 = vld [vmem:[%s313] ss:$2 sm:$0xff]
        %s315 = scalar_lea.vmem %s226, 760
        %v316 = vld [vmem:[%s315] ss:$2 sm:$0xff]
        %s317 = scalar_lea.vmem %s226, 776
        %v318 = vld [vmem:[%s317] ss:$2 sm:$0xff]
        %s319 = scalar_lea.vmem %s226, 792
        %v320 = vld [vmem:[%s319] ss:$2 sm:$0xff]
        %s321 = scalar_lea.vmem %s226, 808
        %v322 = vld [vmem:[%s321] ss:$2 sm:$0xff]
        %v323 = vld [vmem:[%s1] sm:$0xff]
        %v324 = vld [vmem:[%s1 + $0x8] sm:$0xff]
        %v325 = vld [vmem:[%s1 + $0x10] sm:$0xff]
        %v326 = vld [vmem:[%s1 + $0x18] sm:$0xff]
        %v327 = vld [vmem:[%s1 + $0x20] sm:$0xff]
        %v328 = vld [vmem:[%s1 + $0x28] sm:$0xff]
        %v329 = vld [vmem:[%s1 + $0x30] sm:$0xff]
        %v330 = vld [vmem:[%s1 + $0x38] sm:$0xff]
        %v331 = vld [vmem:[%s1 + $0x40] sm:$0xff]
        %v332 = vld [vmem:[%s1 + $0x48] sm:$0xff]
        %v333 = vld [vmem:[%s1 + $0x50] sm:$0xff]
        %v334 = vld [vmem:[%s1 + $0x58] sm:$0xff]
        %v335 = vld [vmem:[%s1 + $0x60] sm:$0x3]
        %s336 = scalar_lea.vmem %s226, 1
        %v337 = vld [vmem:[%s336] ss:$2 sm:$0xff]
        %s338 = scalar_lea.vmem %s226, 17
        %v339 = vld [vmem:[%s338] ss:$2 sm:$0xff]
        %s340 = scalar_lea.vmem %s226, 33
        %v341 = vld [vmem:[%s340] ss:$2 sm:$0xff]
        %s342 = scalar_lea.vmem %s226, 49
        %v343 = vld [vmem:[%s342] ss:$2 sm:$0xff]
        %s344 = scalar_lea.vmem %s226, 65
        %v345 = vld [vmem:[%s344] ss:$2 sm:$0xff]
        %s346 = scalar_lea.vmem %s226, 81
        %v347 = vld [vmem:[%s346] ss:$2 sm:$0xff]
        %s348 = scalar_lea.vmem %s226, 105
        %v349 = vld [vmem:[%s348] ss:$2 sm:$0xff]
        %s350 = scalar_lea.vmem %s226, 121
        %v351 = vld [vmem:[%s350] ss:$2 sm:$0xff]
        %s352 = scalar_lea.vmem %s226, 137
        %v353 = vld [vmem:[%s352] ss:$2 sm:$0xff]
        %s354 = scalar_lea.vmem %s226, 153
        %v355 = vld [vmem:[%s354] ss:$2 sm:$0xff]
        %s356 = scalar_lea.vmem %s226, 169
        %v357 = vld [vmem:[%s356] ss:$2 sm:$0xff]
        %s358 = scalar_lea.vmem %s226, 185
        %v359 = vld [vmem:[%s358] ss:$2 sm:$0xff]
        %s360 = scalar_lea.vmem %s226, 209
        %v361 = vld [vmem:[%s360] ss:$2 sm:$0xff]
        %s362 = scalar_lea.vmem %s226, 225
        %v363 = vld [vmem:[%s362] ss:$2 sm:$0xff]
        %s364 = scalar_lea.vmem %s226, 241
        %v365 = vld [vmem:[%s364] ss:$2 sm:$0xff]
        %s366 = scalar_lea.vmem %s226, 257
        %v367 = vld [vmem:[%s366] ss:$2 sm:$0xff]
        %s368 = scalar_lea.vmem %s226, 273
        %v369 = vld [vmem:[%s368] ss:$2 sm:$0xff]
        %s370 = scalar_lea.vmem %s226, 289
        %v371 = vld [vmem:[%s370] ss:$2 sm:$0xff]
        %s372 = scalar_lea.vmem %s226, 313
        %v373 = vld [vmem:[%s372] ss:$2 sm:$0xff]
        %s374 = scalar_lea.vmem %s226, 329
        %v375 = vld [vmem:[%s374] ss:$2 sm:$0xff]
        %s376 = scalar_lea.vmem %s226, 345
        %v377 = vld [vmem:[%s376] ss:$2 sm:$0xff]
        %s378 = scalar_lea.vmem %s226, 361
        %v379 = vld [vmem:[%s378] ss:$2 sm:$0xff]
        %s380 = scalar_lea.vmem %s226, 377
        %v381 = vld [vmem:[%s380] ss:$2 sm:$0xff]
        %s382 = scalar_lea.vmem %s226, 393
        %v383 = vld [vmem:[%s382] ss:$2 sm:$0xff]
        %s384 = scalar_lea.vmem %s226, 417
        %v385 = vld [vmem:[%s384] ss:$2 sm:$0xff]
        %s386 = scalar_lea.vmem %s226, 433
        %v387 = vld [vmem:[%s386] ss:$2 sm:$0xff]
        %s388 = scalar_lea.vmem %s226, 449
        %v389 = vld [vmem:[%s388] ss:$2 sm:$0xff]
        %s390 = scalar_lea.vmem %s226, 465
        %v391 = vld [vmem:[%s390] ss:$2 sm:$0xff]
        %s392 = scalar_lea.vmem %s226, 481
        %v393 = vld [vmem:[%s392] ss:$2 sm:$0xff]
        %s394 = scalar_lea.vmem %s226, 497
        %v395 = vld [vmem:[%s394] ss:$2 sm:$0xff]
        %s396 = scalar_lea.vmem %s226, 521
        %v397 = vld [vmem:[%s396] ss:$2 sm:$0xff]
        %s398 = scalar_lea.vmem %s226, 537
        %v399 = vld [vmem:[%s398] ss:$2 sm:$0xff]
        %s400 = scalar_lea.vmem %s226, 553
        %v401 = vld [vmem:[%s400] ss:$2 sm:$0xff]
        %s402 = scalar_lea.vmem %s226, 569
        %v403 = vld [vmem:[%s402] ss:$2 sm:$0xff]
        %s404 = scalar_lea.vmem %s226, 585
        %v405 = vld [vmem:[%s404] ss:$2 sm:$0xff]
        %s406 = scalar_lea.vmem %s226, 601
        %v407 = vld [vmem:[%s406] ss:$2 sm:$0xff]
        %s408 = scalar_lea.vmem %s226, 625
        %v409 = vld [vmem:[%s408] ss:$2 sm:$0xff]
        %s410 = scalar_lea.vmem %s226, 641
        %v411 = vld [vmem:[%s410] ss:$2 sm:$0xff]
        %s412 = scalar_lea.vmem %s226, 657
        %v413 = vld [vmem:[%s412] ss:$2 sm:$0xff]
        %s414 = scalar_lea.vmem %s226, 673
        %v415 = vld [vmem:[%s414] ss:$2 sm:$0xff]
        %s416 = scalar_lea.vmem %s226, 689
        %v417 = vld [vmem:[%s416] ss:$2 sm:$0xff]
        %s418 = scalar_lea.vmem %s226, 705
        %v419 = vld [vmem:[%s418] ss:$2 sm:$0xff]
        %s420 = scalar_lea.vmem %s226, 729
        %v421 = vld [vmem:[%s420] ss:$2 sm:$0xff]
        %s422 = scalar_lea.vmem %s226, 745
        %v423 = vld [vmem:[%s422] ss:$2 sm:$0xff]
        %s424 = scalar_lea.vmem %s226, 761
        %v425 = vld [vmem:[%s424] ss:$2 sm:$0xff]
        %s426 = scalar_lea.vmem %s226, 777
        %v427 = vld [vmem:[%s426] ss:$2 sm:$0xff]
        %s428 = scalar_lea.vmem %s226, 793
        %v429 = vld [vmem:[%s428] ss:$2 sm:$0xff]
        %s430 = scalar_lea.vmem %s226, 809
        %v431 = vld [vmem:[%s430] ss:$2 sm:$0xff]
        %s432 = scalar_lea.vmem %s1, 104
        %v433 = vld [vmem:[%s432] sm:$0xff]
        %v434 = vld [vmem:[%s432 + $0x8] sm:$0xff]
        %v435 = vld [vmem:[%s432 + $0x10] sm:$0xff]
        %v436 = vld [vmem:[%s432 + $0x18] sm:$0xff]
        %v437 = vld [vmem:[%s432 + $0x20] sm:$0xff]
        %v438 = vld [vmem:[%s432 + $0x28] sm:$0xff]
        %v439 = vld [vmem:[%s432 + $0x30] sm:$0xff]
        %v440 = vld [vmem:[%s432 + $0x38] sm:$0xff]
        %v441 = vld [vmem:[%s432 + $0x40] sm:$0xff]
        %v442 = vld [vmem:[%s432 + $0x48] sm:$0xff]
        %v443 = vld [vmem:[%s432 + $0x50] sm:$0xff]
        %v444 = vld [vmem:[%s432 + $0x58] sm:$0xff]
        %v445 = vld [vmem:[%s432 + $0x60] sm:$0x3]
        %vm446 = vcmask 801792
        %v448 = vsel %vm446, %v337, 0
        %v451 = vsel %vm446, %v339, 0
        %v454 = vsel %vm446, %v341, 0
        %v457 = vsel %vm446, %v343, 0
        %v460 = vsel %vm446, %v345, 0
        %v463 = vsel %vm446, %v347, 0
        %v466 = vsel %vm446, %v349, 0
        %v469 = vsel %vm446, %v351, 0
        %v472 = vsel %vm446, %v353, 0
        %v475 = vsel %vm446, %v355, 0
        %v478 = vsel %vm446, %v357, 0
        %v481 = vsel %vm446, %v359, 0
        %v484 = vsel %vm446, %v361, 0
        %v487 = vsel %vm446, %v363, 0
        %v490 = vsel %vm446, %v365, 0
        %v493 = vsel %vm446, %v367, 0
        %v496 = vsel %vm446, %v369, 0
        %v499 = vsel %vm446, %v371, 0
        %v502 = vsel %vm446, %v373, 0
        %v505 = vsel %vm446, %v375, 0
        %v508 = vsel %vm446, %v377, 0
        %v511 = vsel %vm446, %v379, 0
        %v514 = vsel %vm446, %v381, 0
        %v517 = vsel %vm446, %v383, 0
        %v520 = vsel %vm446, %v385, 0
        %v523 = vsel %vm446, %v387, 0
        %v526 = vsel %vm446, %v389, 0
        %v529 = vsel %vm446, %v391, 0
        %v532 = vsel %vm446, %v393, 0
        %v535 = vsel %vm446, %v395, 0
        %v538 = vsel %vm446, %v397, 0
        %v541 = vsel %vm446, %v399, 0
        %v544 = vsel %vm446, %v401, 0
        %v547 = vsel %vm446, %v403, 0
        %v550 = vsel %vm446, %v405, 0
        %v553 = vsel %vm446, %v407, 0
        %v556 = vsel %vm446, %v409, 0
        %v559 = vsel %vm446, %v411, 0
        %v562 = vsel %vm446, %v413, 0
        %v565 = vsel %vm446, %v415, 0
        %v568 = vsel %vm446, %v417, 0
        %v571 = vsel %vm446, %v419, 0
        %v574 = vsel %vm446, %v421, 0
        %v577 = vsel %vm446, %v423, 0
        %v580 = vsel %vm446, %v425, 0
        %v583 = vsel %vm446, %v427, 0
        %v586 = vsel %vm446, %v429, 0
        %v589 = vsel %vm446, %v431, 0
        %vm591 = vcmask 1041408
        %v593 = vsel %vm591, %v445, 0
        %595 = vmatprep.subr.mxu0 0.0
        %596 = vmatpush1.msra.mxu0 %v433
        %597 = vmatprep.subr.mxu0 0.0
        %598 = vmatpush1.msra.mxu0 %v434
        %599 = vmatprep.subr.mxu0 0.0
        %600 = vmatpush1.msra.mxu0 %v435
        %601 = vmatprep.subr.mxu0 0.0
        %602 = vmatpush1.msra.mxu0 %v436
        %603 = vmatprep.subr.mxu0 0.0
        %604 = vmatpush1.msra.mxu0 %v437
        %605 = vmatprep.subr.mxu0 0.0
        %606 = vmatpush1.msra.mxu0 %v438
        %607 = vmatprep.subr.mxu0 0.0
        %608 = vmatpush1.msra.mxu0 %v439
        %609 = vmatprep.subr.mxu0 0.0
        %610 = vmatpush1.msra.mxu0 %v440
        %611 = vmatprep.subr.mxu0 0.0
        %612 = vmatpush1.msra.mxu0 %v441
        %613 = vmatprep.subr.mxu0 0.0
        %614 = vmatpush1.msra.mxu0 %v442
        %615 = vmatprep.subr.mxu0 0.0
        %616 = vmatpush1.msra.mxu0 %v443
        %617 = vmatprep.subr.mxu0 0.0
        %618 = vmatpush1.msra.mxu0 %v444
        %619 = vmatprep.subr.mxu0 0.0
        %620 = vmatpush1.msra.mxu0 %v593
        %621 = vmatprep.subr.mxu0 0.0
        %622 = vmatpush1.msra.mxu0 0.0
        %623 = vmatprep.subr.mxu0 0.0
        %624 = vmatpush1.msra.mxu0 0.0
        %625 = vmatprep.subr.mxu0 0.0
        %626 = vmatpush1.msra.mxu0 0.0
        %627 = vmatprep.subr.mxu0 0.0
        %628 = vmatpush1.msra.mxu0 0.0
        %629 = vmatprep.subr.mxu0 0.0
        %630 = vmatpush1.msra.mxu0 0.0
        %631 = vmatprep.subr.mxu0 0.0
        %632 = vmatpush1.msra.mxu0 0.0
        %633 = vmatprep.subr.mxu0 0.0
        %634 = vmatpush1.msra.mxu0 0.0
        %635 = vmatprep.subr.mxu0 0.0
        %636 = vmatpush1.msra.mxu0 0.0
        %637 = vmatprep.subr.mxu0 0.0
        %638 = vmatpush1.msra.mxu0 0.0
        %639 = vmatprep.subr.mxu0 0.0
        %640 = vmatpush1.msra.mxu0 0.0
        %641 = vmatprep.subr.mxu0 0.0
        %642 = vmatpush1.msra.mxu0 0.0
        %643 = vmatprep.subr.mxu0 0.0
        %644 = vmatpush1.msra.mxu0 0.0
        %645 = vmatprep.subr.mxu0 0.0
        %646 = vmatpush1.msra.mxu0 0.0
        %647 = vmatprep.subr.mxu0 0.0
        %648 = vmatpush1.msra.mxu0 0.0
        %649 = vmatprep.subr.mxu0 0.0
        %650 = vmatpush1.msra.mxu0 0.0
        %651 = vmatprep.subr.mxu0 0.0
        %652 = vmatpush1.msra.mxu0 0.0
        %653 = vmatprep.subr.mxu0 0.0
        %654 = vmatpush1.msra.mxu0 0.0
        %655 = vmatprep.subr.mxu0 0.0
        %656 = vmatpush1.msra.mxu0 0.0
        %657 = vmatprep.subr.mxu0 0.0
        %658 = vmatpush1.msra.mxu0 0.0
        %659 = vmatprep.mubr.f32.mxu0 0.0
        %660 = vmatmul.mubr.f32.gmra.mrb[0].mxu0 %v448
        %v661 = vpop.f32.mrb[0].mxu0
        %v662 = vadd.f32 0.0, %v661
        %v663 = vpop.f32.mrb[0].mxu0
        %664 = vmatprep.mubr.f32.mxu0 0.0
        %665 = vmatmul.mubr.f32.gmra.mrb[0].mxu0 %v451
        %v666 = vpop.f32.mrb[0].mxu0
        %v667 = vadd.f32 0.0, %v666
        %v668 = vpop.f32.mrb[0].mxu0
        %669 = vmatprep.mubr.f32.mxu0 0.0
        %670 = vmatmul.mubr.f32.gmra.mrb[0].mxu0 %v454
        %v671 = vpop.f32.mrb[0].mxu0
        %v672 = vadd.f32 0.0, %v671
        %v673 = vpop.f32.mrb[0].mxu0
        %674 = vmatprep.mubr.f32.mxu0 0.0
        %675 = vmatmul.mubr.f32.gmra.mrb[0].mxu0 %v457
        %v676 = vpop.f32.mrb[0].mxu0
        %v677 = vadd.f32 0.0, %v676
        %v678 = vpop.f32.mrb[0].mxu0
        %679 = vmatprep.mubr.f32.mxu0 0.0
        %680 = vmatmul.mubr.f32.gmra.mrb[0].mxu0 %v460
        %v681 = vpop.f32.mrb[0].mxu0
        %v682 = vadd.f32 0.0, %v681
        %v683 = vpop.f32.mrb[0].mxu0
        %684 = vmatprep.mubr.f32.mxu0 0.0
        %685 = vmatmul.mubr.f32.gmra.mrb[0].mxu0 %v463
        %v686 = vpop.f32.mrb[0].mxu0
        %v687 = vadd.f32 0.0, %v686
        %v688 = vpop.f32.mrb[0].mxu0
        %689 = vmatprep.mubr.f32.mxu0 0.0
        %690 = vmatmul.mubr.f32.gmra.mrb[0].mxu0 %v466
        %v691 = vpop.f32.mrb[0].mxu0
        %v692 = vadd.f32 0.0, %v691
        %v693 = vpop.f32.mrb[0].mxu0
        %694 = vmatprep.mubr.f32.mxu0 0.0
        %695 = vmatmul.mubr.f32.gmra.mrb[0].mxu0 %v469
        %v696 = vpop.f32.mrb[0].mxu0
        %v697 = vadd.f32 0.0, %v696
        %v698 = vpop.f32.mrb[0].mxu0
        %699 = vmatprep.mubr.f32.mxu0 0.0
        %700 = vmatmul.mubr.f32.gmra.mrb[0].mxu0 %v472
        %v701 = vpop.f32.mrb[0].mxu0
        %v702 = vadd.f32 0.0, %v701
        %v703 = vpop.f32.mrb[0].mxu0
        %704 = vmatprep.mubr.f32.mxu0 0.0
        %705 = vmatmul.mubr.f32.gmra.mrb[0].mxu0 %v475
        %v706 = vpop.f32.mrb[0].mxu0
        %v707 = vadd.f32 0.0, %v706
        %v708 = vpop.f32.mrb[0].mxu0
        %709 = vmatprep.mubr.f32.mxu0 0.0
        %710 = vmatmul.mubr.f32.gmra.mrb[0].mxu0 %v478
        %v711 = vpop.f32.mrb[0].mxu0
        %v712 = vadd.f32 0.0, %v711
        %v713 = vpop.f32.mrb[0].mxu0
        %714 = vmatprep.mubr.f32.mxu0 0.0
        %715 = vmatmul.mubr.f32.gmra.mrb[0].mxu0 %v481
        %v716 = vpop.f32.mrb[0].mxu0
        %v717 = vadd.f32 0.0, %v716
        %v718 = vpop.f32.mrb[0].mxu0
        %719 = vmatprep.mubr.f32.mxu0 0.0
        %720 = vmatmul.mubr.f32.gmra.mrb[0].mxu0 %v484
        %v721 = vpop.f32.mrb[0].mxu0
        %v722 = vadd.f32 0.0, %v721
        %v723 = vpop.f32.mrb[0].mxu0
        %724 = vmatprep.mubr.f32.mxu0 0.0
        %725 = vmatmul.mubr.f32.gmra.mrb[0].mxu0 %v487
        %v726 = vpop.f32.mrb[0].mxu0
        %v727 = vadd.f32 0.0, %v726
        %v728 = vpop.f32.mrb[0].mxu0
        %729 = vmatprep.mubr.f32.mxu0 0.0
        %730 = vmatmul.mubr.f32.gmra.mrb[0].mxu0 %v490
        %v731 = vpop.f32.mrb[0].mxu0
        %v732 = vadd.f32 0.0, %v731
        %v733 = vpop.f32.mrb[0].mxu0
        %734 = vmatprep.mubr.f32.mxu0 0.0
        %735 = vmatmul.mubr.f32.gmra.mrb[0].mxu0 %v493
        %v736 = vpop.f32.mrb[0].mxu0
        %v737 = vadd.f32 0.0, %v736
        %v738 = vpop.f32.mrb[0].mxu0
        %739 = vmatprep.mubr.f32.mxu0 0.0
        %740 = vmatmul.mubr.f32.gmra.mrb[0].mxu0 %v496
        %v741 = vpop.f32.mrb[0].mxu0
        %v742 = vadd.f32 0.0, %v741
        %v743 = vpop.f32.mrb[0].mxu0
        %744 = vmatprep.mubr.f32.mxu0 0.0
        %745 = vmatmul.mubr.f32.gmra.mrb[0].mxu0 %v499
        %v746 = vpop.f32.mrb[0].mxu0
        %v747 = vadd.f32 0.0, %v746
        %v748 = vpop.f32.mrb[0].mxu0
        %749 = vmatprep.mubr.f32.mxu0 0.0
        %750 = vmatmul.mubr.f32.gmra.mrb[0].mxu0 %v502
        %v751 = vpop.f32.mrb[0].mxu0
        %v752 = vadd.f32 0.0, %v751
        %v753 = vpop.f32.mrb[0].mxu0
        %754 = vmatprep.mubr.f32.mxu0 0.0
        %755 = vmatmul.mubr.f32.gmra.mrb[0].mxu0 %v505
        %v756 = vpop.f32.mrb[0].mxu0
        %v757 = vadd.f32 0.0, %v756
        %v758 = vpop.f32.mrb[0].mxu0
        %759 = vmatprep.mubr.f32.mxu0 0.0
        %760 = vmatmul.mubr.f32.gmra.mrb[0].mxu0 %v508
        %v761 = vpop.f32.mrb[0].mxu0
        %v762 = vadd.f32 0.0, %v761
        %v763 = vpop.f32.mrb[0].mxu0
        %764 = vmatprep.mubr.f32.mxu0 0.0
        %765 = vmatmul.mubr.f32.gmra.mrb[0].mxu0 %v511
        %v766 = vpop.f32.mrb[0].mxu0
        %v767 = vadd.f32 0.0, %v766
        %v768 = vpop.f32.mrb[0].mxu0
        %769 = vmatprep.mubr.f32.mxu0 0.0
        %770 = vmatmul.mubr.f32.gmra.mrb[0].mxu0 %v514
        %v771 = vpop.f32.mrb[0].mxu0
        %v772 = vadd.f32 0.0, %v771
        %v773 = vpop.f32.mrb[0].mxu0
        %774 = vmatprep.mubr.f32.mxu0 0.0
        %775 = vmatmul.mubr.f32.gmra.mrb[0].mxu0 %v517
        %v776 = vpop.f32.mrb[0].mxu0
        %v777 = vadd.f32 0.0, %v776
        %v778 = vpop.f32.mrb[0].mxu0
        %779 = vmatprep.mubr.f32.mxu0 0.0
        %780 = vmatmul.mubr.f32.gmra.mrb[0].mxu0 %v520
        %v781 = vpop.f32.mrb[0].mxu0
        %v782 = vadd.f32 0.0, %v781
        %v783 = vpop.f32.mrb[0].mxu0
        %784 = vmatprep.mubr.f32.mxu0 0.0
        %785 = vmatmul.mubr.f32.gmra.mrb[0].mxu0 %v523
        %v786 = vpop.f32.mrb[0].mxu0
        %v787 = vadd.f32 0.0, %v786
        %v788 = vpop.f32.mrb[0].mxu0
        %789 = vmatprep.mubr.f32.mxu0 0.0
        %790 = vmatmul.mubr.f32.gmra.mrb[0].mxu0 %v526
        %v791 = vpop.f32.mrb[0].mxu0
        %v792 = vadd.f32 0.0, %v791
        %v793 = vpop.f32.mrb[0].mxu0
        %794 = vmatprep.mubr.f32.mxu0 0.0
        %795 = vmatmul.mubr.f32.gmra.mrb[0].mxu0 %v529
        %v796 = vpop.f32.mrb[0].mxu0
        %v797 = vadd.f32 0.0, %v796
        %v798 = vpop.f32.mrb[0].mxu0
        %799 = vmatprep.mubr.f32.mxu0 0.0
        %800 = vmatmul.mubr.f32.gmra.mrb[0].mxu0 %v532
        %v801 = vpop.f32.mrb[0].mxu0
        %v802 = vadd.f32 0.0, %v801
        %v803 = vpop.f32.mrb[0].mxu0
        %804 = vmatprep.mubr.f32.mxu0 0.0
        %805 = vmatmul.mubr.f32.gmra.mrb[0].mxu0 %v535
        %v806 = vpop.f32.mrb[0].mxu0
        %v807 = vadd.f32 0.0, %v806
        %v808 = vpop.f32.mrb[0].mxu0
        %809 = vmatprep.mubr.f32.mxu0 0.0
        %810 = vmatmul.mubr.f32.gmra.mrb[0].mxu0 %v538
        %v811 = vpop.f32.mrb[0].mxu0
        %v812 = vadd.f32 0.0, %v811
        %v813 = vpop.f32.mrb[0].mxu0
        %814 = vmatprep.mubr.f32.mxu0 0.0
        %815 = vmatmul.mubr.f32.gmra.mrb[0].mxu0 %v541
        %v816 = vpop.f32.mrb[0].mxu0
        %v817 = vadd.f32 0.0, %v816
        %v818 = vpop.f32.mrb[0].mxu0
        %819 = vmatprep.mubr.f32.mxu0 0.0
        %820 = vmatmul.mubr.f32.gmra.mrb[0].mxu0 %v544
        %v821 = vpop.f32.mrb[0].mxu0
        %v822 = vadd.f32 0.0, %v821
        %v823 = vpop.f32.mrb[0].mxu0
        %824 = vmatprep.mubr.f32.mxu0 0.0
        %825 = vmatmul.mubr.f32.gmra.mrb[0].mxu0 %v547
        %v826 = vpop.f32.mrb[0].mxu0
        %v827 = vadd.f32 0.0, %v826
        %v828 = vpop.f32.mrb[0].mxu0
        %829 = vmatprep.mubr.f32.mxu0 0.0
        %830 = vmatmul.mubr.f32.gmra.mrb[0].mxu0 %v550
        %v831 = vpop.f32.mrb[0].mxu0
        %v832 = vadd.f32 0.0, %v831
        %v833 = vpop.f32.mrb[0].mxu0
        %834 = vmatprep.mubr.f32.mxu0 0.0
        %835 = vmatmul.mubr.f32.gmra.mrb[0].mxu0 %v553
        %v836 = vpop.f32.mrb[0].mxu0
        %v837 = vadd.f32 0.0, %v836
        %v838 = vpop.f32.mrb[0].mxu0
        %839 = vmatprep.mubr.f32.mxu0 0.0
        %840 = vmatmul.mubr.f32.gmra.mrb[0].mxu0 %v556
        %v841 = vpop.f32.mrb[0].mxu0
        %v842 = vadd.f32 0.0, %v841
        %v843 = vpop.f32.mrb[0].mxu0
        %844 = vmatprep.mubr.f32.mxu0 0.0
        %845 = vmatmul.mubr.f32.gmra.mrb[0].mxu0 %v559
        %v846 = vpop.f32.mrb[0].mxu0
        %v847 = vadd.f32 0.0, %v846
        %v848 = vpop.f32.mrb[0].mxu0
        %849 = vmatprep.mubr.f32.mxu0 0.0
        %850 = vmatmul.mubr.f32.gmra.mrb[0].mxu0 %v562
        %v851 = vpop.f32.mrb[0].mxu0
        %v852 = vadd.f32 0.0, %v851
        %v853 = vpop.f32.mrb[0].mxu0
        %854 = vmatprep.mubr.f32.mxu0 0.0
        %855 = vmatmul.mubr.f32.gmra.mrb[0].mxu0 %v565
        %v856 = vpop.f32.mrb[0].mxu0
        %v857 = vadd.f32 0.0, %v856
        %v858 = vpop.f32.mrb[0].mxu0
        %859 = vmatprep.mubr.f32.mxu0 0.0
        %860 = vmatmul.mubr.f32.gmra.mrb[0].mxu0 %v568
        %v861 = vpop.f32.mrb[0].mxu0
        %v862 = vadd.f32 0.0, %v861
        %v863 = vpop.f32.mrb[0].mxu0
        %864 = vmatprep.mubr.f32.mxu0 0.0
        %865 = vmatmul.mubr.f32.gmra.mrb[0].mxu0 %v571
        %v866 = vpop.f32.mrb[0].mxu0
        %v867 = vadd.f32 0.0, %v866
        %v868 = vpop.f32.mrb[0].mxu0
        %869 = vmatprep.mubr.f32.mxu0 0.0
        %870 = vmatmul.mubr.f32.gmra.mrb[0].mxu0 %v574
        %v871 = vpop.f32.mrb[0].mxu0
        %v872 = vadd.f32 0.0, %v871
        %v873 = vpop.f32.mrb[0].mxu0
        %874 = vmatprep.mubr.f32.mxu0 0.0
        %875 = vmatmul.mubr.f32.gmra.mrb[0].mxu0 %v577
        %v876 = vpop.f32.mrb[0].mxu0
        %v877 = vadd.f32 0.0, %v876
        %v878 = vpop.f32.mrb[0].mxu0
        %879 = vmatprep.mubr.f32.mxu0 0.0
        %880 = vmatmul.mubr.f32.gmra.mrb[0].mxu0 %v580
        %v881 = vpop.f32.mrb[0].mxu0
        %v882 = vadd.f32 0.0, %v881
        %v883 = vpop.f32.mrb[0].mxu0
        %884 = vmatprep.mubr.f32.mxu0 0.0
        %885 = vmatmul.mubr.f32.gmra.mrb[0].mxu0 %v583
        %v886 = vpop.f32.mrb[0].mxu0
        %v887 = vadd.f32 0.0, %v886
        %v888 = vpop.f32.mrb[0].mxu0
        %889 = vmatprep.mubr.f32.mxu0 0.0
        %890 = vmatmul.mubr.f32.gmra.mrb[0].mxu0 %v586
        %v891 = vpop.f32.mrb[0].mxu0
        %v892 = vadd.f32 0.0, %v891
        %v893 = vpop.f32.mrb[0].mxu0
        %894 = vmatprep.mubr.f32.mxu0 0.0
        %895 = vmatmul.mubr.f32.gmra.mrb[0].mxu0 %v589
        %v896 = vpop.f32.mrb[0].mxu0
        %v897 = vadd.f32 0.0, %v896
        %v898 = vpop.f32.mrb[0].mxu0
        %899 = vdwg.mxu0
        %v901 = vsel %vm446, %v228, 0
        %v904 = vsel %vm446, %v230, 0
        %v907 = vsel %vm446, %v232, 0
        %v910 = vsel %vm446, %v234, 0
        %v913 = vsel %vm446, %v236, 0
        %v916 = vsel %vm446, %v238, 0
        %v919 = vsel %vm446, %v240, 0
        %v922 = vsel %vm446, %v242, 0
        %v925 = vsel %vm446, %v244, 0
        %v928 = vsel %vm446, %v246, 0
        %v931 = vsel %vm446, %v248, 0
        %v934 = vsel %vm446, %v250, 0
        %v937 = vsel %vm446, %v252, 0
        %v940 = vsel %vm446, %v254, 0
        %v943 = vsel %vm446, %v256, 0
        %v946 = vsel %vm446, %v258, 0
        %v949 = vsel %vm446, %v260, 0
        %v952 = vsel %vm446, %v262, 0
        %v955 = vsel %vm446, %v264, 0
        %v958 = vsel %vm446, %v266, 0
        %v961 = vsel %vm446, %v268, 0
        %v964 = vsel %vm446, %v270, 0
        %v967 = vsel %vm446, %v272, 0
        %v970 = vsel %vm446, %v274, 0
        %v973 = vsel %vm446, %v276, 0
        %v976 = vsel %vm446, %v278, 0
        %v979 = vsel %vm446, %v280, 0
        %v982 = vsel %vm446, %v282, 0
        %v985 = vsel %vm446, %v284, 0
        %v988 = vsel %vm446, %v286, 0
        %v991 = vsel %vm446, %v288, 0
        %v994 = vsel %vm446, %v290, 0
        %v997 = vsel %vm446, %v292, 0
        %v1000 = vsel %vm446, %v294, 0
        %v1003 = vsel %vm446, %v296, 0
        %v1006 = vsel %vm446, %v298, 0
        %v1009 = vsel %vm446, %v300, 0
        %v1012 = vsel %vm446, %v302, 0
        %v1015 = vsel %vm446, %v304, 0
        %v1018 = vsel %vm446, %v306, 0
        %v1021 = vsel %vm446, %v308, 0
        %v1024 = vsel %vm446, %v310, 0
        %v1027 = vsel %vm446, %v312, 0
        %v1030 = vsel %vm446, %v314, 0
        %v1033 = vsel %vm446, %v316, 0
        %v1036 = vsel %vm446, %v318, 0
        %v1039 = vsel %vm446, %v320, 0
        %v1042 = vsel %vm446, %v322, 0
        %v1045 = vsel %vm591, %v335, 0
        %1047 = vmatprep.subr.mxu0 0.0
        %1048 = vmatpush1.msra.mxu0 %v323
        %1049 = vmatprep.subr.mxu0 0.0
        %1050 = vmatpush1.msra.mxu0 %v324
        %1051 = vmatprep.subr.mxu0 0.0
        %1052 = vmatpush1.msra.mxu0 %v325
        %1053 = vmatprep.subr.mxu0 0.0
        %1054 = vmatpush1.msra.mxu0 %v326
        %1055 = vmatprep.subr.mxu0 0.0
        %1056 = vmatpush1.msra.mxu0 %v327
        %1057 = vmatprep.subr.mxu0 0.0
        %1058 = vmatpush1.msra.mxu0 %v328
        %1059 = vmatprep.subr.mxu0 0.0
        %1060 = vmatpush1.msra.mxu0 %v329
        %1061 = vmatprep.subr.mxu0 0.0
        %1062 = vmatpush1.msra.mxu0 %v330
        %1063 = vmatprep.subr.mxu0 0.0
        %1064 = vmatpush1.msra.mxu0 %v331
        %1065 = vmatprep.subr.mxu0 0.0
        %1066 = vmatpush1.msra.mxu0 %v332
        %1067 = vmatprep.subr.mxu0 0.0
        %1068 = vmatpush1.msra.mxu0 %v333
        %1069 = vmatprep.subr.mxu0 0.0
        %1070 = vmatpush1.msra.mxu0 %v334
        %1071 = vmatprep.subr.mxu0 0.0
        %1072 = vmatpush1.msra.mxu0 %v1045
        %1073 = vmatprep.subr.mxu0 0.0
        %1074 = vmatpush1.msra.mxu0 0.0
        %1075 = vmatprep.subr.mxu0 0.0
        %1076 = vmatpush1.msra.mxu0 0.0
        %1077 = vmatprep.subr.mxu0 0.0
        %1078 = vmatpush1.msra.mxu0 0.0
        %1079 = vmatprep.subr.mxu0 0.0
        %1080 = vmatpush1.msra.mxu0 0.0
        %1081 = vmatprep.subr.mxu0 0.0
        %1082 = vmatpush1.msra.mxu0 0.0
        %1083 = vmatprep.subr.mxu0 0.0
        %1084 = vmatpush1.msra.mxu0 0.0
        %1085 = vmatprep.subr.mxu0 0.0
        %1086 = vmatpush1.msra.mxu0 0.0
        %1087 = vmatprep.subr.mxu0 0.0
        %1088 = vmatpush1.msra.mxu0 0.0
        %1089 = vmatprep.subr.mxu0 0.0
        %1090 = vmatpush1.msra.mxu0 0.0
        %1091 = vmatprep.subr.mxu0 0.0
        %1092 = vmatpush1.msra.mxu0 0.0
        %1093 = vmatprep.subr.mxu0 0.0
        %1094 = vmatpush1.msra.mxu0 0.0
        %1095 = vmatprep.subr.mxu0 0.0
        %1096 = vmatpush1.msra.mxu0 0.0
        %1097 = vmatprep.subr.mxu0 0.0
        %1098 = vmatpush1.msra.mxu0 0.0
        %1099 = vmatprep.subr.mxu0 0.0
        %1100 = vmatpush1.msra.mxu0 0.0
        %1101 = vmatprep.subr.mxu0 0.0
        %1102 = vmatpush1.msra.mxu0 0.0
        %1103 = vmatprep.subr.mxu0 0.0
        %1104 = vmatpush1.msra.mxu0 0.0
        %1105 = vmatprep.subr.mxu0 0.0
        %1106 = vmatpush1.msra.mxu0 0.0
        %1107 = vmatprep.subr.mxu0 0.0
        %1108 = vmatpush1.msra.mxu0 0.0
        %1109 = vmatprep.subr.mxu0 0.0
        %1110 = vmatpush1.msra.mxu0 0.0
        %1111 = vmatprep.mubr.f32.mxu0 0.0
        %1112 = vmatmul.mubr.f32.gmra.mrb[0].mxu0 %v901
        %v1113 = vpop.f32.mrb[0].mxu0
        %v1114 = vadd.f32 %v662, %v1113
        %v1115 = vpop.f32.mrb[0].mxu0
        %1116 = vmatprep.mubr.f32.mxu0 0.0
        %1117 = vmatmul.mubr.f32.gmra.mrb[0].mxu0 %v904
        %v1118 = vpop.f32.mrb[0].mxu0
        %v1119 = vadd.f32 %v667, %v1118
        %v1120 = vpop.f32.mrb[0].mxu0
        %1121 = vmatprep.mubr.f32.mxu0 0.0
        %1122 = vmatmul.mubr.f32.gmra.mrb[0].mxu0 %v907
        %v1123 = vpop.f32.mrb[0].mxu0
        %v1124 = vadd.f32 %v672, %v1123
        %v1125 = vpop.f32.mrb[0].mxu0
        %1126 = vmatprep.mubr.f32.mxu0 0.0
        %1127 = vmatmul.mubr.f32.gmra.mrb[0].mxu0 %v910
        %v1128 = vpop.f32.mrb[0].mxu0
        %v1129 = vadd.f32 %v677, %v1128
        %v1130 = vpop.f32.mrb[0].mxu0
        %1131 = vmatprep.mubr.f32.mxu0 0.0
        %1132 = vmatmul.mubr.f32.gmra.mrb[0].mxu0 %v913
        %v1133 = vpop.f32.mrb[0].mxu0
        %v1134 = vadd.f32 %v682, %v1133
        %v1135 = vpop.f32.mrb[0].mxu0
        %1136 = vmatprep.mubr.f32.mxu0 0.0
        %1137 = vmatmul.mubr.f32.gmra.mrb[0].mxu0 %v916
        %v1138 = vpop.f32.mrb[0].mxu0
        %v1139 = vadd.f32 %v687, %v1138
        %v1140 = vpop.f32.mrb[0].mxu0
        %1141 = vmatprep.mubr.f32.mxu0 0.0
        %1142 = vmatmul.mubr.f32.gmra.mrb[0].mxu0 %v919
        %v1143 = vpop.f32.mrb[0].mxu0
        %v1144 = vadd.f32 %v692, %v1143
        %v1145 = vpop.f32.mrb[0].mxu0
        %1146 = vmatprep.mubr.f32.mxu0 0.0
        %1147 = vmatmul.mubr.f32.gmra.mrb[0].mxu0 %v922
        %v1148 = vpop.f32.mrb[0].mxu0
        %v1149 = vadd.f32 %v697, %v1148
        %v1150 = vpop.f32.mrb[0].mxu0
        %1151 = vmatprep.mubr.f32.mxu0 0.0
        %1152 = vmatmul.mubr.f32.gmra.mrb[0].mxu0 %v925
        %v1153 = vpop.f32.mrb[0].mxu0
        %v1154 = vadd.f32 %v702, %v1153
        %v1155 = vpop.f32.mrb[0].mxu0
        %1156 = vmatprep.mubr.f32.mxu0 0.0
        %1157 = vmatmul.mubr.f32.gmra.mrb[0].mxu0 %v928
        %v1158 = vpop.f32.mrb[0].mxu0
        %v1159 = vadd.f32 %v707, %v1158
        %v1160 = vpop.f32.mrb[0].mxu0
        %1161 = vmatprep.mubr.f32.mxu0 0.0
        %1162 = vmatmul.mubr.f32.gmra.mrb[0].mxu0 %v931
        %v1163 = vpop.f32.mrb[0].mxu0
        %v1164 = vadd.f32 %v712, %v1163
        %v1165 = vpop.f32.mrb[0].mxu0
        %1166 = vmatprep.mubr.f32.mxu0 0.0
        %1167 = vmatmul.mubr.f32.gmra.mrb[0].mxu0 %v934
        %v1168 = vpop.f32.mrb[0].mxu0
        %v1169 = vadd.f32 %v717, %v1168
        %v1170 = vpop.f32.mrb[0].mxu0
        %1171 = vmatprep.mubr.f32.mxu0 0.0
        %1172 = vmatmul.mubr.f32.gmra.mrb[0].mxu0 %v937
        %v1173 = vpop.f32.mrb[0].mxu0
        %v1174 = vadd.f32 %v722, %v1173
        %v1175 = vpop.f32.mrb[0].mxu0
        %1176 = vmatprep.mubr.f32.mxu0 0.0
        %1177 = vmatmul.mubr.f32.gmra.mrb[0].mxu0 %v940
        %v1178 = vpop.f32.mrb[0].mxu0
        %v1179 = vadd.f32 %v727, %v1178
        %v1180 = vpop.f32.mrb[0].mxu0
        %1181 = vmatprep.mubr.f32.mxu0 0.0
        %1182 = vmatmul.mubr.f32.gmra.mrb[0].mxu0 %v943
        %v1183 = vpop.f32.mrb[0].mxu0
        %v1184 = vadd.f32 %v732, %v1183
        %v1185 = vpop.f32.mrb[0].mxu0
        %1186 = vmatprep.mubr.f32.mxu0 0.0
        %1187 = vmatmul.mubr.f32.gmra.mrb[0].mxu0 %v946
        %v1188 = vpop.f32.mrb[0].mxu0
        %v1189 = vadd.f32 %v737, %v1188
        %v1190 = vpop.f32.mrb[0].mxu0
        %1191 = vmatprep.mubr.f32.mxu0 0.0
        %1192 = vmatmul.mubr.f32.gmra.mrb[0].mxu0 %v949
        %v1193 = vpop.f32.mrb[0].mxu0
        %v1194 = vadd.f32 %v742, %v1193
        %v1195 = vpop.f32.mrb[0].mxu0
        %1196 = vmatprep.mubr.f32.mxu0 0.0
        %1197 = vmatmul.mubr.f32.gmra.mrb[0].mxu0 %v952
        %v1198 = vpop.f32.mrb[0].mxu0
        %v1199 = vadd.f32 %v747, %v1198
        %v1200 = vpop.f32.mrb[0].mxu0
        %1201 = vmatprep.mubr.f32.mxu0 0.0
        %1202 = vmatmul.mubr.f32.gmra.mrb[0].mxu0 %v955
        %v1203 = vpop.f32.mrb[0].mxu0
        %v1204 = vadd.f32 %v752, %v1203
        %v1205 = vpop.f32.mrb[0].mxu0
        %1206 = vmatprep.mubr.f32.mxu0 0.0
        %1207 = vmatmul.mubr.f32.gmra.mrb[0].mxu0 %v958
        %v1208 = vpop.f32.mrb[0].mxu0
        %v1209 = vadd.f32 %v757, %v1208
        %v1210 = vpop.f32.mrb[0].mxu0
        %1211 = vmatprep.mubr.f32.mxu0 0.0
        %1212 = vmatmul.mubr.f32.gmra.mrb[0].mxu0 %v961
        %v1213 = vpop.f32.mrb[0].mxu0
        %v1214 = vadd.f32 %v762, %v1213
        %v1215 = vpop.f32.mrb[0].mxu0
        %1216 = vmatprep.mubr.f32.mxu0 0.0
        %1217 = vmatmul.mubr.f32.gmra.mrb[0].mxu0 %v964
        %v1218 = vpop.f32.mrb[0].mxu0
        %v1219 = vadd.f32 %v767, %v1218
        %v1220 = vpop.f32.mrb[0].mxu0
        %1221 = vmatprep.mubr.f32.mxu0 0.0
        %1222 = vmatmul.mubr.f32.gmra.mrb[0].mxu0 %v967
        %v1223 = vpop.f32.mrb[0].mxu0
        %v1224 = vadd.f32 %v772, %v1223
        %v1225 = vpop.f32.mrb[0].mxu0
        %1226 = vmatprep.mubr.f32.mxu0 0.0
        %1227 = vmatmul.mubr.f32.gmra.mrb[0].mxu0 %v970
        %v1228 = vpop.f32.mrb[0].mxu0
        %v1229 = vadd.f32 %v777, %v1228
        %v1230 = vpop.f32.mrb[0].mxu0
        %1231 = vmatprep.mubr.f32.mxu0 0.0
        %1232 = vmatmul.mubr.f32.gmra.mrb[0].mxu0 %v973
        %v1233 = vpop.f32.mrb[0].mxu0
        %v1234 = vadd.f32 %v782, %v1233
        %v1235 = vpop.f32.mrb[0].mxu0
        %1236 = vmatprep.mubr.f32.mxu0 0.0
        %1237 = vmatmul.mubr.f32.gmra.mrb[0].mxu0 %v976
        %v1238 = vpop.f32.mrb[0].mxu0
        %v1239 = vadd.f32 %v787, %v1238
        %v1240 = vpop.f32.mrb[0].mxu0
        %1241 = vmatprep.mubr.f32.mxu0 0.0
        %1242 = vmatmul.mubr.f32.gmra.mrb[0].mxu0 %v979
        %v1243 = vpop.f32.mrb[0].mxu0
        %v1244 = vadd.f32 %v792, %v1243
        %v1245 = vpop.f32.mrb[0].mxu0
        %1246 = vmatprep.mubr.f32.mxu0 0.0
        %1247 = vmatmul.mubr.f32.gmra.mrb[0].mxu0 %v982
        %v1248 = vpop.f32.mrb[0].mxu0
        %v1249 = vadd.f32 %v797, %v1248
        %v1250 = vpop.f32.mrb[0].mxu0
        %1251 = vmatprep.mubr.f32.mxu0 0.0
        %1252 = vmatmul.mubr.f32.gmra.mrb[0].mxu0 %v985
        %v1253 = vpop.f32.mrb[0].mxu0
        %v1254 = vadd.f32 %v802, %v1253
        %v1255 = vpop.f32.mrb[0].mxu0
        %1256 = vmatprep.mubr.f32.mxu0 0.0
        %1257 = vmatmul.mubr.f32.gmra.mrb[0].mxu0 %v988
        %v1258 = vpop.f32.mrb[0].mxu0
        %v1259 = vadd.f32 %v807, %v1258
        %v1260 = vpop.f32.mrb[0].mxu0
        %1261 = vmatprep.mubr.f32.mxu0 0.0
        %1262 = vmatmul.mubr.f32.gmra.mrb[0].mxu0 %v991
        %v1263 = vpop.f32.mrb[0].mxu0
        %v1264 = vadd.f32 %v812, %v1263
        %v1265 = vpop.f32.mrb[0].mxu0
        %1266 = vmatprep.mubr.f32.mxu0 0.0
        %1267 = vmatmul.mubr.f32.gmra.mrb[0].mxu0 %v994
        %v1268 = vpop.f32.mrb[0].mxu0
        %v1269 = vadd.f32 %v817, %v1268
        %v1270 = vpop.f32.mrb[0].mxu0
        %1271 = vmatprep.mubr.f32.mxu0 0.0
        %1272 = vmatmul.mubr.f32.gmra.mrb[0].mxu0 %v997
        %v1273 = vpop.f32.mrb[0].mxu0
        %v1274 = vadd.f32 %v822, %v1273
        %v1275 = vpop.f32.mrb[0].mxu0
        %1276 = vmatprep.mubr.f32.mxu0 0.0
        %1277 = vmatmul.mubr.f32.gmra.mrb[0].mxu0 %v1000
        %v1278 = vpop.f32.mrb[0].mxu0
        %v1279 = vadd.f32 %v827, %v1278
        %v1280 = vpop.f32.mrb[0].mxu0
        %1281 = vmatprep.mubr.f32.mxu0 0.0
        %1282 = vmatmul.mubr.f32.gmra.mrb[0].mxu0 %v1003
        %v1283 = vpop.f32.mrb[0].mxu0
        %v1284 = vadd.f32 %v832, %v1283
        %v1285 = vpop.f32.mrb[0].mxu0
        %1286 = vmatprep.mubr.f32.mxu0 0.0
        %1287 = vmatmul.mubr.f32.gmra.mrb[0].mxu0 %v1006
        %v1288 = vpop.f32.mrb[0].mxu0
        %v1289 = vadd.f32 %v837, %v1288
        %v1290 = vpop.f32.mrb[0].mxu0
        %1291 = vmatprep.mubr.f32.mxu0 0.0
        %1292 = vmatmul.mubr.f32.gmra.mrb[0].mxu0 %v1009
        %v1293 = vpop.f32.mrb[0].mxu0
        %v1294 = vadd.f32 %v842, %v1293
        %v1295 = vpop.f32.mrb[0].mxu0
        %1296 = vmatprep.mubr.f32.mxu0 0.0
        %1297 = vmatmul.mubr.f32.gmra.mrb[0].mxu0 %v1012
        %v1298 = vpop.f32.mrb[0].mxu0
        %v1299 = vadd.f32 %v847, %v1298
        %v1300 = vpop.f32.mrb[0].mxu0
        %1301 = vmatprep.mubr.f32.mxu0 0.0
        %1302 = vmatmul.mubr.f32.gmra.mrb[0].mxu0 %v1015
        %v1303 = vpop.f32.mrb[0].mxu0
        %v1304 = vadd.f32 %v852, %v1303
        %v1305 = vpop.f32.mrb[0].mxu0
        %1306 = vmatprep.mubr.f32.mxu0 0.0
        %1307 = vmatmul.mubr.f32.gmra.mrb[0].mxu0 %v1018
        %v1308 = vpop.f32.mrb[0].mxu0
        %v1309 = vadd.f32 %v857, %v1308
        %v1310 = vpop.f32.mrb[0].mxu0
        %1311 = vmatprep.mubr.f32.mxu0 0.0
        %1312 = vmatmul.mubr.f32.gmra.mrb[0].mxu0 %v1021
        %v1313 = vpop.f32.mrb[0].mxu0
        %v1314 = vadd.f32 %v862, %v1313
        %v1315 = vpop.f32.mrb[0].mxu0
        %1316 = vmatprep.mubr.f32.mxu0 0.0
        %1317 = vmatmul.mubr.f32.gmra.mrb[0].mxu0 %v1024
        %v1318 = vpop.f32.mrb[0].mxu0
        %v1319 = vadd.f32 %v867, %v1318
        %v1320 = vpop.f32.mrb[0].mxu0
        %1321 = vmatprep.mubr.f32.mxu0 0.0
        %1322 = vmatmul.mubr.f32.gmra.mrb[0].mxu0 %v1027
        %v1323 = vpop.f32.mrb[0].mxu0
        %v1324 = vadd.f32 %v872, %v1323
        %v1325 = vpop.f32.mrb[0].mxu0
        %1326 = vmatprep.mubr.f32.mxu0 0.0
        %1327 = vmatmul.mubr.f32.gmra.mrb[0].mxu0 %v1030
        %v1328 = vpop.f32.mrb[0].mxu0
        %v1329 = vadd.f32 %v877, %v1328
        %v1330 = vpop.f32.mrb[0].mxu0
        %1331 = vmatprep.mubr.f32.mxu0 0.0
        %1332 = vmatmul.mubr.f32.gmra.mrb[0].mxu0 %v1033
        %v1333 = vpop.f32.mrb[0].mxu0
        %v1334 = vadd.f32 %v882, %v1333
        %v1335 = vpop.f32.mrb[0].mxu0
        %1336 = vmatprep.mubr.f32.mxu0 0.0
        %1337 = vmatmul.mubr.f32.gmra.mrb[0].mxu0 %v1036
        %v1338 = vpop.f32.mrb[0].mxu0
        %v1339 = vadd.f32 %v887, %v1338
        %v1340 = vpop.f32.mrb[0].mxu0
        %1341 = vmatprep.mubr.f32.mxu0 0.0
        %1342 = vmatmul.mubr.f32.gmra.mrb[0].mxu0 %v1039
        %v1343 = vpop.f32.mrb[0].mxu0
        %v1344 = vadd.f32 %v892, %v1343
        %v1345 = vpop.f32.mrb[0].mxu0
        %1346 = vmatprep.mubr.f32.mxu0 0.0
        %1347 = vmatmul.mubr.f32.gmra.mrb[0].mxu0 %v1042
        %v1348 = vpop.f32.mrb[0].mxu0
        %v1349 = vadd.f32 %v897, %v1348
        %v1350 = vpop.f32.mrb[0].mxu0
        %1351 = vdwg.mxu0
        %s1352 = scalar_lea.vmem %s226, 2
        %v1353 = vld [vmem:[%s1352] ss:$2 sm:$0xff]
        %s1354 = scalar_lea.vmem %s226, 18
        %v1355 = vld [vmem:[%s1354] ss:$2 sm:$0xff]
        %s1356 = scalar_lea.vmem %s226, 34
        %v1357 = vld [vmem:[%s1356] ss:$2 sm:$0xff]
        %s1358 = scalar_lea.vmem %s226, 50
        %v1359 = vld [vmem:[%s1358] ss:$2 sm:$0xff]
        %s1360 = scalar_lea.vmem %s226, 66
        %v1361 = vld [vmem:[%s1360] ss:$2 sm:$0xff]
        %s1362 = scalar_lea.vmem %s226, 82
        %v1363 = vld [vmem:[%s1362] ss:$2 sm:$0xff]
        %s1364 = scalar_lea.vmem %s226, 106
        %v1365 = vld [vmem:[%s1364] ss:$2 sm:$0xff]
        %s1366 = scalar_lea.vmem %s226, 122
        %v1367 = vld [vmem:[%s1366] ss:$2 sm:$0xff]
        %s1368 = scalar_lea.vmem %s226, 138
        %v1369 = vld [vmem:[%s1368] ss:$2 sm:$0xff]
        %s1370 = scalar_lea.vmem %s226, 154
        %v1371 = vld [vmem:[%s1370] ss:$2 sm:$0xff]
        %s1372 = scalar_lea.vmem %s226, 170
        %v1373 = vld [vmem:[%s1372] ss:$2 sm:$0xff]
        %s1374 = scalar_lea.vmem %s226, 186
        %v1375 = vld [vmem:[%s1374] ss:$2 sm:$0xff]
        %s1376 = scalar_lea.vmem %s226, 210
        %v1377 = vld [vmem:[%s1376] ss:$2 sm:$0xff]
        %s1378 = scalar_lea.vmem %s226, 226
        %v1379 = vld [vmem:[%s1378] ss:$2 sm:$0xff]
        %s1380 = scalar_lea.vmem %s226, 242
        %v1381 = vld [vmem:[%s1380] ss:$2 sm:$0xff]
        %s1382 = scalar_lea.vmem %s226, 258
        %v1383 = vld [vmem:[%s1382] ss:$2 sm:$0xff]
        %s1384 = scalar_lea.vmem %s226, 274
        %v1385 = vld [vmem:[%s1384] ss:$2 sm:$0xff]
        %s1386 = scalar_lea.vmem %s226, 290
        %v1387 = vld [vmem:[%s1386] ss:$2 sm:$0xff]
        %s1388 = scalar_lea.vmem %s226, 314
        %v1389 = vld [vmem:[%s1388] ss:$2 sm:$0xff]
        %s1390 = scalar_lea.vmem %s226, 330
        %v1391 = vld [vmem:[%s1390] ss:$2 sm:$0xff]
        %s1392 = scalar_lea.vmem %s226, 346
        %v1393 = vld [vmem:[%s1392] ss:$2 sm:$0xff]
        %s1394 = scalar_lea.vmem %s226, 362
        %v1395 = vld [vmem:[%s1394] ss:$2 sm:$0xff]
        %s1396 = scalar_lea.vmem %s226, 378
        %v1397 = vld [vmem:[%s1396] ss:$2 sm:$0xff]
        %s1398 = scalar_lea.vmem %s226, 394
        %v1399 = vld [vmem:[%s1398] ss:$2 sm:$0xff]
        %s1400 = scalar_lea.vmem %s226, 418
        %v1401 = vld [vmem:[%s1400] ss:$2 sm:$0xff]
        %s1402 = scalar_lea.vmem %s226, 434
        %v1403 = vld [vmem:[%s1402] ss:$2 sm:$0xff]
        %s1404 = scalar_lea.vmem %s226, 450
        %v1405 = vld [vmem:[%s1404] ss:$2 sm:$0xff]
        %s1406 = scalar_lea.vmem %s226, 466
        %v1407 = vld [vmem:[%s1406] ss:$2 sm:$0xff]
        %s1408 = scalar_lea.vmem %s226, 482
        %v1409 = vld [vmem:[%s1408] ss:$2 sm:$0xff]
        %s1410 = scalar_lea.vmem %s226, 498
        %v1411 = vld [vmem:[%s1410] ss:$2 sm:$0xff]
        %s1412 = scalar_lea.vmem %s226, 522
        %v1413 = vld [vmem:[%s1412] ss:$2 sm:$0xff]
        %s1414 = scalar_lea.vmem %s226, 538
        %v1415 = vld [vmem:[%s1414] ss:$2 sm:$0xff]
        %s1416 = scalar_lea.vmem %s226, 554
        %v1417 = vld [vmem:[%s1416] ss:$2 sm:$0xff]
        %s1418 = scalar_lea.vmem %s226, 570
        %v1419 = vld [vmem:[%s1418] ss:$2 sm:$0xff]
        %s1420 = scalar_lea.vmem %s226, 586
        %v1421 = vld [vmem:[%s1420] ss:$2 sm:$0xff]
        %s1422 = scalar_lea.vmem %s226, 602
        %v1423 = vld [vmem:[%s1422] ss:$2 sm:$0xff]
        %s1424 = scalar_lea.vmem %s226, 626
        %v1425 = vld [vmem:[%s1424] ss:$2 sm:$0xff]
        %s1426 = scalar_lea.vmem %s226, 642
        %v1427 = vld [vmem:[%s1426] ss:$2 sm:$0xff]
        %s1428 = scalar_lea.vmem %s226, 658
        %v1429 = vld [vmem:[%s1428] ss:$2 sm:$0xff]
        %s1430 = scalar_lea.vmem %s226, 674
        %v1431 = vld [vmem:[%s1430] ss:$2 sm:$0xff]
        %s1432 = scalar_lea.vmem %s226, 690
        %v1433 = vld [vmem:[%s1432] ss:$2 sm:$0xff]
        %s1434 = scalar_lea.vmem %s226, 706
        %v1435 = vld [vmem:[%s1434] ss:$2 sm:$0xff]
        %s1436 = scalar_lea.vmem %s226, 730
        %v1437 = vld [vmem:[%s1436] ss:$2 sm:$0xff]
        %s1438 = scalar_lea.vmem %s226, 746
        %v1439 = vld [vmem:[%s1438] ss:$2 sm:$0xff]
        %s1440 = scalar_lea.vmem %s226, 762
        %v1441 = vld [vmem:[%s1440] ss:$2 sm:$0xff]
        %s1442 = scalar_lea.vmem %s226, 778
        %v1443 = vld [vmem:[%s1442] ss:$2 sm:$0xff]
        %s1444 = scalar_lea.vmem %s226, 794
        %v1445 = vld [vmem:[%s1444] ss:$2 sm:$0xff]
        %s1446 = scalar_lea.vmem %s226, 810
        %v1447 = vld [vmem:[%s1446] ss:$2 sm:$0xff]
        %s1448 = scalar_lea.vmem %s1, 208
        %v1449 = vld [vmem:[%s1448] sm:$0xff]
        %v1450 = vld [vmem:[%s1448 + $0x8] sm:$0xff]
        %v1451 = vld [vmem:[%s1448 + $0x10] sm:$0xff]
        %v1452 = vld [vmem:[%s1448 + $0x18] sm:$0xff]
        %v1453 = vld [vmem:[%s1448 + $0x20] sm:$0xff]
        %v1454 = vld [vmem:[%s1448 + $0x28] sm:$0xff]
        %v1455 = vld [vmem:[%s1448 + $0x30] sm:$0xff]
        %v1456 = vld [vmem:[%s1448 + $0x38] sm:$0xff]
        %v1457 = vld [vmem:[%s1448 + $0x40] sm:$0xff]
        %v1458 = vld [vmem:[%s1448 + $0x48] sm:$0xff]
        %v1459 = vld [vmem:[%s1448 + $0x50] sm:$0xff]
        %v1460 = vld [vmem:[%s1448 + $0x58] sm:$0xff]
        %v1461 = vld [vmem:[%s1448 + $0x60] sm:$0x3]
        %v1463 = vsel %vm446, %v1353, 0
        %v1466 = vsel %vm446, %v1355, 0
        %v1469 = vsel %vm446, %v1357, 0
        %v1472 = vsel %vm446, %v1359, 0
        %v1475 = vsel %vm446, %v1361, 0
        %v1478 = vsel %vm446, %v1363, 0
        %v1481 = vsel %vm446, %v1365, 0
        %v1484 = vsel %vm446, %v1367, 0
        %v1487 = vsel %vm446, %v1369, 0
        %v1490 = vsel %vm446, %v1371, 0
        %v1493 = vsel %vm446, %v1373, 0
        %v1496 = vsel %vm446, %v1375, 0
        %v1499 = vsel %vm446, %v1377, 0
        %v1502 = vsel %vm446, %v1379, 0
        %v1505 = vsel %vm446, %v1381, 0
        %v1508 = vsel %vm446, %v1383, 0
        %v1511 = vsel %vm446, %v1385, 0
        %v1514 = vsel %vm446, %v1387, 0
        %v1517 = vsel %vm446, %v1389, 0
        %v1520 = vsel %vm446, %v1391, 0
        %v1523 = vsel %vm446, %v1393, 0
        %v1526 = vsel %vm446, %v1395, 0
        %v1529 = vsel %vm446, %v1397, 0
        %v1532 = vsel %vm446, %v1399, 0
        %v1535 = vsel %vm446, %v1401, 0
        %v1538 = vsel %vm446, %v1403, 0
        %v1541 = vsel %vm446, %v1405, 0
        %v1544 = vsel %vm446, %v1407, 0
        %v1547 = vsel %vm446, %v1409, 0
        %v1550 = vsel %vm446, %v1411, 0
        %v1553 = vsel %vm446, %v1413, 0
        %v1556 = vsel %vm446, %v1415, 0
        %v1559 = vsel %vm446, %v1417, 0
        %v1562 = vsel %vm446, %v1419, 0
        %v1565 = vsel %vm446, %v1421, 0
        %v1568 = vsel %vm446, %v1423, 0
        %v1571 = vsel %vm446, %v1425, 0
        %v1574 = vsel %vm446, %v1427, 0
        %v1577 = vsel %vm446, %v1429, 0
        %v1580 = vsel %vm446, %v1431, 0
        %v1583 = vsel %vm446, %v1433, 0
        %v1586 = vsel %vm446, %v1435, 0
        %v1589 = vsel %vm446, %v1437, 0
        %v1592 = vsel %vm446, %v1439, 0
        %v1595 = vsel %vm446, %v1441, 0
        %v1598 = vsel %vm446, %v1443, 0
        %v1601 = vsel %vm446, %v1445, 0
        %v1604 = vsel %vm446, %v1447, 0
        %v1607 = vsel %vm591, %v1461, 0
        %1609 = vmatprep.subr.mxu0 0.0
        %1610 = vmatpush1.msra.mxu0 %v1449
        %1611 = vmatprep.subr.mxu0 0.0
        %1612 = vmatpush1.msra.mxu0 %v1450
        %1613 = vmatprep.subr.mxu0 0.0
        %1614 = vmatpush1.msra.mxu0 %v1451
        %1615 = vmatprep.subr.mxu0 0.0
        %1616 = vmatpush1.msra.mxu0 %v1452
        %1617 = vmatprep.subr.mxu0 0.0
        %1618 = vmatpush1.msra.mxu0 %v1453
        %1619 = vmatprep.subr.mxu0 0.0
        %1620 = vmatpush1.msra.mxu0 %v1454
        %1621 = vmatprep.subr.mxu0 0.0
        %1622 = vmatpush1.msra.mxu0 %v1455
        %1623 = vmatprep.subr.mxu0 0.0
        %1624 = vmatpush1.msra.mxu0 %v1456
        %1625 = vmatprep.subr.mxu0 0.0
        %1626 = vmatpush1.msra.mxu0 %v1457
        %1627 = vmatprep.subr.mxu0 0.0
        %1628 = vmatpush1.msra.mxu0 %v1458
        %1629 = vmatprep.subr.mxu0 0.0
        %1630 = vmatpush1.msra.mxu0 %v1459
        %1631 = vmatprep.subr.mxu0 0.0
        %1632 = vmatpush1.msra.mxu0 %v1460
        %1633 = vmatprep.subr.mxu0 0.0
        %1634 = vmatpush1.msra.mxu0 %v1607
        %1635 = vmatprep.subr.mxu0 0.0
        %1636 = vmatpush1.msra.mxu0 0.0
        %1637 = vmatprep.subr.mxu0 0.0
        %1638 = vmatpush1.msra.mxu0 0.0
        %1639 = vmatprep.subr.mxu0 0.0
        %1640 = vmatpush1.msra.mxu0 0.0
        %1641 = vmatprep.subr.mxu0 0.0
        %1642 = vmatpush1.msra.mxu0 0.0
        %1643 = vmatprep.subr.mxu0 0.0
        %1644 = vmatpush1.msra.mxu0 0.0
        %1645 = vmatprep.subr.mxu0 0.0
        %1646 = vmatpush1.msra.mxu0 0.0
        %1647 = vmatprep.subr.mxu0 0.0
        %1648 = vmatpush1.msra.mxu0 0.0
        %1649 = vmatprep.subr.mxu0 0.0
        %1650 = vmatpush1.msra.mxu0 0.0
        %1651 = vmatprep.subr.mxu0 0.0
        %1652 = vmatpush1.msra.mxu0 0.0
        %1653 = vmatprep.subr.mxu0 0.0
        %1654 = vmatpush1.msra.mxu0 0.0
        %1655 = vmatprep.subr.mxu0 0.0
        %1656 = vmatpush1.msra.mxu0 0.0
        %1657 = vmatprep.subr.mxu0 0.0
        %1658 = vmatpush1.msra.mxu0 0.0
        %1659 = vmatprep.subr.mxu0 0.0
        %1660 = vmatpush1.msra.mxu0 0.0
        %1661 = vmatprep.subr.mxu0 0.0
        %1662 = vmatpush1.msra.mxu0 0.0
        %1663 = vmatprep.subr.mxu0 0.0
        %1664 = vmatpush1.msra.mxu0 0.0
        %1665 = vmatprep.subr.mxu0 0.0
        %1666 = vmatpush1.msra.mxu0 0.0
        %1667 = vmatprep.subr.mxu0 0.0
        %1668 = vmatpush1.msra.mxu0 0.0
        %1669 = vmatprep.subr.mxu0 0.0
        %1670 = vmatpush1.msra.mxu0 0.0
        %1671 = vmatprep.subr.mxu0 0.0
        %1672 = vmatpush1.msra.mxu0 0.0
        %1673 = vmatprep.mubr.f32.mxu0 0.0
        %1674 = vmatmul.mubr.f32.gmra.mrb[0].mxu0 %v1463
        %v1675 = vpop.f32.mrb[0].mxu0
        %v1676 = vadd.f32 0.0, %v1675
        %v1677 = vpop.f32.mrb[0].mxu0
        %1678 = vmatprep.mubr.f32.mxu0 0.0
        %1679 = vmatmul.mubr.f32.gmra.mrb[0].mxu0 %v1466
        %v1680 = vpop.f32.mrb[0].mxu0
        %v1681 = vadd.f32 0.0, %v1680
        %v1682 = vpop.f32.mrb[0].mxu0
        %1683 = vmatprep.mubr.f32.mxu0 0.0
        %1684 = vmatmul.mubr.f32.gmra.mrb[0].mxu0 %v1469
        %v1685 = vpop.f32.mrb[0].mxu0
        %v1686 = vadd.f32 0.0, %v1685
        %v1687 = vpop.f32.mrb[0].mxu0
        %1688 = vmatprep.mubr.f32.mxu0 0.0
        %1689 = vmatmul.mubr.f32.gmra.mrb[0].mxu0 %v1472
        %v1690 = vpop.f32.mrb[0].mxu0
        %v1691 = vadd.f32 0.0, %v1690
        %v1692 = vpop.f32.mrb[0].mxu0
        %1693 = vmatprep.mubr.f32.mxu0 0.0
        %1694 = vmatmul.mubr.f32.gmra.mrb[0].mxu0 %v1475
        %v1695 = vpop.f32.mrb[0].mxu0
        %v1696 = vadd.f32 0.0, %v1695
        %v1697 = vpop.f32.mrb[0].mxu0
        %1698 = vmatprep.mubr.f32.mxu0 0.0
        %1699 = vmatmul.mubr.f32.gmra.mrb[0].mxu0 %v1478
        %v1700 = vpop.f32.mrb[0].mxu0
        %v1701 = vadd.f32 0.0, %v1700
        %v1702 = vpop.f32.mrb[0].mxu0
        %1703 = vmatprep.mubr.f32.mxu0 0.0
        %1704 = vmatmul.mubr.f32.gmra.mrb[0].mxu0 %v1481
        %v1705 = vpop.f32.mrb[0].mxu0
        %v1706 = vadd.f32 0.0, %v1705
        %v1707 = vpop.f32.mrb[0].mxu0
        %1708 = vmatprep.mubr.f32.mxu0 0.0
        %1709 = vmatmul.mubr.f32.gmra.mrb[0].mxu0 %v1484
        %v1710 = vpop.f32.mrb[0].mxu0
        %v1711 = vadd.f32 0.0, %v1710
        %v1712 = vpop.f32.mrb[0].mxu0
        %1713 = vmatprep.mubr.f32.mxu0 0.0
        %1714 = vmatmul.mubr.f32.gmra.mrb[0].mxu0 %v1487
        %v1715 = vpop.f32.mrb[0].mxu0
        %v1716 = vadd.f32 0.0, %v1715
        %v1717 = vpop.f32.mrb[0].mxu0
        %1718 = vmatprep.mubr.f32.mxu0 0.0
        %1719 = vmatmul.mubr.f32.gmra.mrb[0].mxu0 %v1490
        %v1720 = vpop.f32.mrb[0].mxu0
        %v1721 = vadd.f32 0.0, %v1720
        %v1722 = vpop.f32.mrb[0].mxu0
        %1723 = vmatprep.mubr.f32.mxu0 0.0
        %1724 = vmatmul.mubr.f32.gmra.mrb[0].mxu0 %v1493
        %v1725 = vpop.f32.mrb[0].mxu0
        %v1726 = vadd.f32 0.0, %v1725
        %v1727 = vpop.f32.mrb[0].mxu0
        %1728 = vmatprep.mubr.f32.mxu0 0.0
        %1729 = vmatmul.mubr.f32.gmra.mrb[0].mxu0 %v1496
        %v1730 = vpop.f32.mrb[0].mxu0
        %v1731 = vadd.f32 0.0, %v1730
        %v1732 = vpop.f32.mrb[0].mxu0
        %1733 = vmatprep.mubr.f32.mxu0 0.0
        %1734 = vmatmul.mubr.f32.gmra.mrb[0].mxu0 %v1499
        %v1735 = vpop.f32.mrb[0].mxu0
        %v1736 = vadd.f32 0.0, %v1735
        %v1737 = vpop.f32.mrb[0].mxu0
        %1738 = vmatprep.mubr.f32.mxu0 0.0
        %1739 = vmatmul.mubr.f32.gmra.mrb[0].mxu0 %v1502
        %v1740 = vpop.f32.mrb[0].mxu0
        %v1741 = vadd.f32 0.0, %v1740
        %v1742 = vpop.f32.mrb[0].mxu0
        %1743 = vmatprep.mubr.f32.mxu0 0.0
        %1744 = vmatmul.mubr.f32.gmra.mrb[0].mxu0 %v1505
        %v1745 = vpop.f32.mrb[0].mxu0
        %v1746 = vadd.f32 0.0, %v1745
        %v1747 = vpop.f32.mrb[0].mxu0
        %1748 = vmatprep.mubr.f32.mxu0 0.0
        %1749 = vmatmul.mubr.f32.gmra.mrb[0].mxu0 %v1508
        %v1750 = vpop.f32.mrb[0].mxu0
        %v1751 = vadd.f32 0.0, %v1750
        %v1752 = vpop.f32.mrb[0].mxu0
        %1753 = vmatprep.mubr.f32.mxu0 0.0
        %1754 = vmatmul.mubr.f32.gmra.mrb[0].mxu0 %v1511
        %v1755 = vpop.f32.mrb[0].mxu0
        %v1756 = vadd.f32 0.0, %v1755
        %v1757 = vpop.f32.mrb[0].mxu0
        %1758 = vmatprep.mubr.f32.mxu0 0.0
        %1759 = vmatmul.mubr.f32.gmra.mrb[0].mxu0 %v1514
        %v1760 = vpop.f32.mrb[0].mxu0
        %v1761 = vadd.f32 0.0, %v1760
        %v1762 = vpop.f32.mrb[0].mxu0
        %1763 = vmatprep.mubr.f32.mxu0 0.0
        %1764 = vmatmul.mubr.f32.gmra.mrb[0].mxu0 %v1517
        %v1765 = vpop.f32.mrb[0].mxu0
        %v1766 = vadd.f32 0.0, %v1765
        %v1767 = vpop.f32.mrb[0].mxu0
        %1768 = vmatprep.mubr.f32.mxu0 0.0
        %1769 = vmatmul.mubr.f32.gmra.mrb[0].mxu0 %v1520
        %v1770 = vpop.f32.mrb[0].mxu0
        %v1771 = vadd.f32 0.0, %v1770
        %v1772 = vpop.f32.mrb[0].mxu0
        %1773 = vmatprep.mubr.f32.mxu0 0.0
        %1774 = vmatmul.mubr.f32.gmra.mrb[0].mxu0 %v1523
        %v1775 = vpop.f32.mrb[0].mxu0
        %v1776 = vadd.f32 0.0, %v1775
        %v1777 = vpop.f32.mrb[0].mxu0
        %1778 = vmatprep.mubr.f32.mxu0 0.0
        %1779 = vmatmul.mubr.f32.gmra.mrb[0].mxu0 %v1526
        %v1780 = vpop.f32.mrb[0].mxu0
        %v1781 = vadd.f32 0.0, %v1780
        %v1782 = vpop.f32.mrb[0].mxu0
        %1783 = vmatprep.mubr.f32.mxu0 0.0
        %1784 = vmatmul.mubr.f32.gmra.mrb[0].mxu0 %v1529
        %v1785 = vpop.f32.mrb[0].mxu0
        %v1786 = vadd.f32 0.0, %v1785
        %v1787 = vpop.f32.mrb[0].mxu0
        %1788 = vmatprep.mubr.f32.mxu0 0.0
        %1789 = vmatmul.mubr.f32.gmra.mrb[0].mxu0 %v1532
        %v1790 = vpop.f32.mrb[0].mxu0
        %v1791 = vadd.f32 0.0, %v1790
        %v1792 = vpop.f32.mrb[0].mxu0
        %1793 = vmatprep.mubr.f32.mxu0 0.0
        %1794 = vmatmul.mubr.f32.gmra.mrb[0].mxu0 %v1535
        %v1795 = vpop.f32.mrb[0].mxu0
        %v1796 = vadd.f32 0.0, %v1795
        %v1797 = vpop.f32.mrb[0].mxu0
        %1798 = vmatprep.mubr.f32.mxu0 0.0
        %1799 = vmatmul.mubr.f32.gmra.mrb[0].mxu0 %v1538
        %v1800 = vpop.f32.mrb[0].mxu0
        %v1801 = vadd.f32 0.0, %v1800
        %v1802 = vpop.f32.mrb[0].mxu0
        %1803 = vmatprep.mubr.f32.mxu0 0.0
        %1804 = vmatmul.mubr.f32.gmra.mrb[0].mxu0 %v1541
        %v1805 = vpop.f32.mrb[0].mxu0
        %v1806 = vadd.f32 0.0, %v1805
        %v1807 = vpop.f32.mrb[0].mxu0
        %1808 = vmatprep.mubr.f32.mxu0 0.0
        %1809 = vmatmul.mubr.f32.gmra.mrb[0].mxu0 %v1544
        %v1810 = vpop.f32.mrb[0].mxu0
        %v1811 = vadd.f32 0.0, %v1810
        %v1812 = vpop.f32.mrb[0].mxu0
        %1813 = vmatprep.mubr.f32.mxu0 0.0
        %1814 = vmatmul.mubr.f32.gmra.mrb[0].mxu0 %v1547
        %v1815 = vpop.f32.mrb[0].mxu0
        %v1816 = vadd.f32 0.0, %v1815
        %v1817 = vpop.f32.mrb[0].mxu0
        %1818 = vmatprep.mubr.f32.mxu0 0.0
        %1819 = vmatmul.mubr.f32.gmra.mrb[0].mxu0 %v1550
        %v1820 = vpop.f32.mrb[0].mxu0
        %v1821 = vadd.f32 0.0, %v1820
        %v1822 = vpop.f32.mrb[0].mxu0
        %1823 = vmatprep.mubr.f32.mxu0 0.0
        %1824 = vmatmul.mubr.f32.gmra.mrb[0].mxu0 %v1553
        %v1825 = vpop.f32.mrb[0].mxu0
        %v1826 = vadd.f32 0.0, %v1825
        %v1827 = vpop.f32.mrb[0].mxu0
        %1828 = vmatprep.mubr.f32.mxu0 0.0
        %1829 = vmatmul.mubr.f32.gmra.mrb[0].mxu0 %v1556
        %v1830 = vpop.f32.mrb[0].mxu0
        %v1831 = vadd.f32 0.0, %v1830
        %v1832 = vpop.f32.mrb[0].mxu0
        %1833 = vmatprep.mubr.f32.mxu0 0.0
        %1834 = vmatmul.mubr.f32.gmra.mrb[0].mxu0 %v1559
        %v1835 = vpop.f32.mrb[0].mxu0
        %v1836 = vadd.f32 0.0, %v1835
        %v1837 = vpop.f32.mrb[0].mxu0
        %1838 = vmatprep.mubr.f32.mxu0 0.0
        %1839 = vmatmul.mubr.f32.gmra.mrb[0].mxu0 %v1562
        %v1840 = vpop.f32.mrb[0].mxu0
        %v1841 = vadd.f32 0.0, %v1840
        %v1842 = vpop.f32.mrb[0].mxu0
        %1843 = vmatprep.mubr.f32.mxu0 0.0
        %1844 = vmatmul.mubr.f32.gmra.mrb[0].mxu0 %v1565
        %v1845 = vpop.f32.mrb[0].mxu0
        %v1846 = vadd.f32 0.0, %v1845
        %v1847 = vpop.f32.mrb[0].mxu0
        %1848 = vmatprep.mubr.f32.mxu0 0.0
        %1849 = vmatmul.mubr.f32.gmra.mrb[0].mxu0 %v1568
        %v1850 = vpop.f32.mrb[0].mxu0
        %v1851 = vadd.f32 0.0, %v1850
        %v1852 = vpop.f32.mrb[0].mxu0
        %1853 = vmatprep.mubr.f32.mxu0 0.0
        %1854 = vmatmul.mubr.f32.gmra.mrb[0].mxu0 %v1571
        %v1855 = vpop.f32.mrb[0].mxu0
        %v1856 = vadd.f32 0.0, %v1855
        %v1857 = vpop.f32.mrb[0].mxu0
        %1858 = vmatprep.mubr.f32.mxu0 0.0
        %1859 = vmatmul.mubr.f32.gmra.mrb[0].mxu0 %v1574
        %v1860 = vpop.f32.mrb[0].mxu0
        %v1861 = vadd.f32 0.0, %v1860
        %v1862 = vpop.f32.mrb[0].mxu0
        %1863 = vmatprep.mubr.f32.mxu0 0.0
        %1864 = vmatmul.mubr.f32.gmra.mrb[0].mxu0 %v1577
        %v1865 = vpop.f32.mrb[0].mxu0
        %v1866 = vadd.f32 0.0, %v1865
        %v1867 = vpop.f32.mrb[0].mxu0
        %1868 = vmatprep.mubr.f32.mxu0 0.0
        %1869 = vmatmul.mubr.f32.gmra.mrb[0].mxu0 %v1580
        %v1870 = vpop.f32.mrb[0].mxu0
        %v1871 = vadd.f32 0.0, %v1870
        %v1872 = vpop.f32.mrb[0].mxu0
        %1873 = vmatprep.mubr.f32.mxu0 0.0
        %1874 = vmatmul.mubr.f32.gmra.mrb[0].mxu0 %v1583
        %v1875 = vpop.f32.mrb[0].mxu0
        %v1876 = vadd.f32 0.0, %v1875
        %v1877 = vpop.f32.mrb[0].mxu0
        %1878 = vmatprep.mubr.f32.mxu0 0.0
        %1879 = vmatmul.mubr.f32.gmra.mrb[0].mxu0 %v1586
        %v1880 = vpop.f32.mrb[0].mxu0
        %v1881 = vadd.f32 0.0, %v1880
        %v1882 = vpop.f32.mrb[0].mxu0
        %1883 = vmatprep.mubr.f32.mxu0 0.0
        %1884 = vmatmul.mubr.f32.gmra.mrb[0].mxu0 %v1589
        %v1885 = vpop.f32.mrb[0].mxu0
        %v1886 = vadd.f32 0.0, %v1885
        %v1887 = vpop.f32.mrb[0].mxu0
        %1888 = vmatprep.mubr.f32.mxu0 0.0
        %1889 = vmatmul.mubr.f32.gmra.mrb[0].mxu0 %v1592
        %v1890 = vpop.f32.mrb[0].mxu0
        %v1891 = vadd.f32 0.0, %v1890
        %v1892 = vpop.f32.mrb[0].mxu0
        %1893 = vmatprep.mubr.f32.mxu0 0.0
        %1894 = vmatmul.mubr.f32.gmra.mrb[0].mxu0 %v1595
        %v1895 = vpop.f32.mrb[0].mxu0
        %v1896 = vadd.f32 0.0, %v1895
        %v1897 = vpop.f32.mrb[0].mxu0
        %1898 = vmatprep.mubr.f32.mxu0 0.0
        %1899 = vmatmul.mubr.f32.gmra.mrb[0].mxu0 %v1598
        %v1900 = vpop.f32.mrb[0].mxu0
        %v1901 = vadd.f32 0.0, %v1900
        %v1902 = vpop.f32.mrb[0].mxu0
        %1903 = vmatprep.mubr.f32.mxu0 0.0
        %1904 = vmatmul.mubr.f32.gmra.mrb[0].mxu0 %v1601
        %v1905 = vpop.f32.mrb[0].mxu0
        %v1906 = vadd.f32 0.0, %v1905
        %v1907 = vpop.f32.mrb[0].mxu0
        %1908 = vmatprep.mubr.f32.mxu0 0.0
        %1909 = vmatmul.mubr.f32.gmra.mrb[0].mxu0 %v1604
        %v1910 = vpop.f32.mrb[0].mxu0
        %v1911 = vadd.f32 0.0, %v1910
        %v1912 = vpop.f32.mrb[0].mxu0
        %1913 = vdwg.mxu0
        %v1914 = vadd.f32 %v1114, %v1676
        %v1915 = vadd.f32 %v1119, %v1681
        %v1916 = vadd.f32 %v1124, %v1686
        %v1917 = vadd.f32 %v1129, %v1691
        %v1918 = vadd.f32 %v1134, %v1696
        %v1919 = vadd.f32 %v1139, %v1701
        %v1920 = vadd.f32 %v1144, %v1706
        %v1921 = vadd.f32 %v1149, %v1711
        %v1922 = vadd.f32 %v1154, %v1716
        %v1923 = vadd.f32 %v1159, %v1721
        %v1924 = vadd.f32 %v1164, %v1726
        %v1925 = vadd.f32 %v1169, %v1731
        %v1926 = vadd.f32 %v1174, %v1736
        %v1927 = vadd.f32 %v1179, %v1741
        %v1928 = vadd.f32 %v1184, %v1746
        %v1929 = vadd.f32 %v1189, %v1751
        %v1930 = vadd.f32 %v1194, %v1756
        %v1931 = vadd.f32 %v1199, %v1761
        %v1932 = vadd.f32 %v1204, %v1766
        %v1933 = vadd.f32 %v1209, %v1771
        %v1934 = vadd.f32 %v1214, %v1776
        %v1935 = vadd.f32 %v1219, %v1781
        %v1936 = vadd.f32 %v1224, %v1786
        %v1937 = vadd.f32 %v1229, %v1791
        %v1938 = vadd.f32 %v1234, %v1796
        %v1939 = vadd.f32 %v1239, %v1801
        %v1940 = vadd.f32 %v1244, %v1806
        %v1941 = vadd.f32 %v1249, %v1811
        %v1942 = vadd.f32 %v1254, %v1816
        %v1943 = vadd.f32 %v1259, %v1821
        %v1944 = vadd.f32 %v1264, %v1826
        %v1945 = vadd.f32 %v1269, %v1831
        %v1946 = vadd.f32 %v1274, %v1836
        %v1947 = vadd.f32 %v1279, %v1841
        %v1948 = vadd.f32 %v1284, %v1846
        %v1949 = vadd.f32 %v1289, %v1851
        %v1950 = vadd.f32 %v1294, %v1856
        %v1951 = vadd.f32 %v1299, %v1861
        %v1952 = vadd.f32 %v1304, %v1866
        %v1953 = vadd.f32 %v1309, %v1871
        %v1954 = vadd.f32 %v1314, %v1876
        %v1955 = vadd.f32 %v1319, %v1881
        %v1956 = vadd.f32 %v1324, %v1886
        %v1957 = vadd.f32 %v1329, %v1891
        %v1958 = vadd.f32 %v1334, %v1896
        %v1959 = vadd.f32 %v1339, %v1901
        %v1960 = vadd.f32 %v1344, %v1906
        %v1961 = vadd.f32 %v1349, %v1911
        %s1962 = scalar_lea.vmem %s226, 3
        %v1963 = vld [vmem:[%s1962] ss:$2 sm:$0xff]
        %s1964 = scalar_lea.vmem %s226, 19
        %v1965 = vld [vmem:[%s1964] ss:$2 sm:$0xff]
        %s1966 = scalar_lea.vmem %s226, 35
        %v1967 = vld [vmem:[%s1966] ss:$2 sm:$0xff]
        %s1968 = scalar_lea.vmem %s226, 51
        %v1969 = vld [vmem:[%s1968] ss:$2 sm:$0xff]
        %s1970 = scalar_lea.vmem %s226, 67
        %v1971 = vld [vmem:[%s1970] ss:$2 sm:$0xff]
        %s1972 = scalar_lea.vmem %s226, 83
        %v1973 = vld [vmem:[%s1972] ss:$2 sm:$0xff]
        %s1974 = scalar_lea.vmem %s226, 107
        %v1975 = vld [vmem:[%s1974] ss:$2 sm:$0xff]
        %s1976 = scalar_lea.vmem %s226, 123
        %v1977 = vld [vmem:[%s1976] ss:$2 sm:$0xff]
        %s1978 = scalar_lea.vmem %s226, 139
        %v1979 = vld [vmem:[%s1978] ss:$2 sm:$0xff]
        %s1980 = scalar_lea.vmem %s226, 155
        %v1981 = vld [vmem:[%s1980] ss:$2 sm:$0xff]
        %s1982 = scalar_lea.vmem %s226, 171
        %v1983 = vld [vmem:[%s1982] ss:$2 sm:$0xff]
        %s1984 = scalar_lea.vmem %s226, 187
        %v1985 = vld [vmem:[%s1984] ss:$2 sm:$0xff]
        %s1986 = scalar_lea.vmem %s226, 211
        %v1987 = vld [vmem:[%s1986] ss:$2 sm:$0xff]
        %s1988 = scalar_lea.vmem %s226, 227
        %v1989 = vld [vmem:[%s1988] ss:$2 sm:$0xff]
        %s1990 = scalar_lea.vmem %s226, 243
        %v1991 = vld [vmem:[%s1990] ss:$2 sm:$0xff]
        %s1992 = scalar_lea.vmem %s226, 259
        %v1993 = vld [vmem:[%s1992] ss:$2 sm:$0xff]
        %s1994 = scalar_lea.vmem %s226, 275
        %v1995 = vld [vmem:[%s1994] ss:$2 sm:$0xff]
        %s1996 = scalar_lea.vmem %s226, 291
        %v1997 = vld [vmem:[%s1996] ss:$2 sm:$0xff]
        %s1998 = scalar_lea.vmem %s226, 315
        %v1999 = vld [vmem:[%s1998] ss:$2 sm:$0xff]
        %s2000 = scalar_lea.vmem %s226, 331
        %v2001 = vld [vmem:[%s2000] ss:$2 sm:$0xff]
        %s2002 = scalar_lea.vmem %s226, 347
        %v2003 = vld [vmem:[%s2002] ss:$2 sm:$0xff]
        %s2004 = scalar_lea.vmem %s226, 363
        %v2005 = vld [vmem:[%s2004] ss:$2 sm:$0xff]
        %s2006 = scalar_lea.vmem %s226, 379
        %v2007 = vld [vmem:[%s2006] ss:$2 sm:$0xff]
        %s2008 = scalar_lea.vmem %s226, 395
        %v2009 = vld [vmem:[%s2008] ss:$2 sm:$0xff]
        %s2010 = scalar_lea.vmem %s226, 419
        %v2011 = vld [vmem:[%s2010] ss:$2 sm:$0xff]
        %s2012 = scalar_lea.vmem %s226, 435
        %v2013 = vld [vmem:[%s2012] ss:$2 sm:$0xff]
        %s2014 = scalar_lea.vmem %s226, 451
        %v2015 = vld [vmem:[%s2014] ss:$2 sm:$0xff]
        %s2016 = scalar_lea.vmem %s226, 467
        %v2017 = vld [vmem:[%s2016] ss:$2 sm:$0xff]
        %s2018 = scalar_lea.vmem %s226, 483
        %v2019 = vld [vmem:[%s2018] ss:$2 sm:$0xff]
        %s2020 = scalar_lea.vmem %s226, 499
        %v2021 = vld [vmem:[%s2020] ss:$2 sm:$0xff]
        %s2022 = scalar_lea.vmem %s226, 523
        %v2023 = vld [vmem:[%s2022] ss:$2 sm:$0xff]
        %s2024 = scalar_lea.vmem %s226, 539
        %v2025 = vld [vmem:[%s2024] ss:$2 sm:$0xff]
        %s2026 = scalar_lea.vmem %s226, 555
        %v2027 = vld [vmem:[%s2026] ss:$2 sm:$0xff]
        %s2028 = scalar_lea.vmem %s226, 571
        %v2029 = vld [vmem:[%s2028] ss:$2 sm:$0xff]
        %s2030 = scalar_lea.vmem %s226, 587
        %v2031 = vld [vmem:[%s2030] ss:$2 sm:$0xff]
        %s2032 = scalar_lea.vmem %s226, 603
        %v2033 = vld [vmem:[%s2032] ss:$2 sm:$0xff]
        %s2034 = scalar_lea.vmem %s226, 627
        %v2035 = vld [vmem:[%s2034] ss:$2 sm:$0xff]
        %s2036 = scalar_lea.vmem %s226, 643
        %v2037 = vld [vmem:[%s2036] ss:$2 sm:$0xff]
        %s2038 = scalar_lea.vmem %s226, 659
        %v2039 = vld [vmem:[%s2038] ss:$2 sm:$0xff]
        %s2040 = scalar_lea.vmem %s226, 675
        %v2041 = vld [vmem:[%s2040] ss:$2 sm:$0xff]
        %s2042 = scalar_lea.vmem %s226, 691
        %v2043 = vld [vmem:[%s2042] ss:$2 sm:$0xff]
        %s2044 = scalar_lea.vmem %s226, 707
        %v2045 = vld [vmem:[%s2044] ss:$2 sm:$0xff]
        %s2046 = scalar_lea.vmem %s226, 731
        %v2047 = vld [vmem:[%s2046] ss:$2 sm:$0xff]
        %s2048 = scalar_lea.vmem %s226, 747
        %v2049 = vld [vmem:[%s2048] ss:$2 sm:$0xff]
        %s2050 = scalar_lea.vmem %s226, 763
        %v2051 = vld [vmem:[%s2050] ss:$2 sm:$0xff]
        %s2052 = scalar_lea.vmem %s226, 779
        %v2053 = vld [vmem:[%s2052] ss:$2 sm:$0xff]
        %s2054 = scalar_lea.vmem %s226, 795
        %v2055 = vld [vmem:[%s2054] ss:$2 sm:$0xff]
        %s2056 = scalar_lea.vmem %s226, 811
        %v2057 = vld [vmem:[%s2056] ss:$2 sm:$0xff]
        %s2058 = scalar_lea.vmem %s1, 312
        %v2059 = vld [vmem:[%s2058] sm:$0xff]
        %v2060 = vld [vmem:[%s2058 + $0x8] sm:$0xff]
        %v2061 = vld [vmem:[%s2058 + $0x10] sm:$0xff]
        %v2062 = vld [vmem:[%s2058 + $0x18] sm:$0xff]
        %v2063 = vld [vmem:[%s2058 + $0x20] sm:$0xff]
        %v2064 = vld [vmem:[%s2058 + $0x28] sm:$0xff]
        %v2065 = vld [vmem:[%s2058 + $0x30] sm:$0xff]
        %v2066 = vld [vmem:[%s2058 + $0x38] sm:$0xff]
        %v2067 = vld [vmem:[%s2058 + $0x40] sm:$0xff]
        %v2068 = vld [vmem:[%s2058 + $0x48] sm:$0xff]
        %v2069 = vld [vmem:[%s2058 + $0x50] sm:$0xff]
        %v2070 = vld [vmem:[%s2058 + $0x58] sm:$0xff]
        %v2071 = vld [vmem:[%s2058 + $0x60] sm:$0x3]
        %v2073 = vsel %vm446, %v1963, 0
        %v2076 = vsel %vm446, %v1965, 0
        %v2079 = vsel %vm446, %v1967, 0
        %v2082 = vsel %vm446, %v1969, 0
        %v2085 = vsel %vm446, %v1971, 0
        %v2088 = vsel %vm446, %v1973, 0
        %v2091 = vsel %vm446, %v1975, 0
        %v2094 = vsel %vm446, %v1977, 0
        %v2097 = vsel %vm446, %v1979, 0
        %v2100 = vsel %vm446, %v1981, 0
        %v2103 = vsel %vm446, %v1983, 0
        %v2106 = vsel %vm446, %v1985, 0
        %v2109 = vsel %vm446, %v1987, 0
        %v2112 = vsel %vm446, %v1989, 0
        %v2115 = vsel %vm446, %v1991, 0
        %v2118 = vsel %vm446, %v1993, 0
        %v2121 = vsel %vm446, %v1995, 0
        %v2124 = vsel %vm446, %v1997, 0
        %v2127 = vsel %vm446, %v1999, 0
        %v2130 = vsel %vm446, %v2001, 0
        %v2133 = vsel %vm446, %v2003, 0
        %v2136 = vsel %vm446, %v2005, 0
        %v2139 = vsel %vm446, %v2007, 0
        %v2142 = vsel %vm446, %v2009, 0
        %v2145 = vsel %vm446, %v2011, 0
        %v2148 = vsel %vm446, %v2013, 0
        %v2151 = vsel %vm446, %v2015, 0
        %v2154 = vsel %vm446, %v2017, 0
        %v2157 = vsel %vm446, %v2019, 0
        %v2160 = vsel %vm446, %v2021, 0
        %v2163 = vsel %vm446, %v2023, 0
        %v2166 = vsel %vm446, %v2025, 0
        %v2169 = vsel %vm446, %v2027, 0
        %v2172 = vsel %vm446, %v2029, 0
        %v2175 = vsel %vm446, %v2031, 0
        %v2178 = vsel %vm446, %v2033, 0
        %v2181 = vsel %vm446, %v2035, 0
        %v2184 = vsel %vm446, %v2037, 0
        %v2187 = vsel %vm446, %v2039, 0
        %v2190 = vsel %vm446, %v2041, 0
        %v2193 = vsel %vm446, %v2043, 0
        %v2196 = vsel %vm446, %v2045, 0
        %v2199 = vsel %vm446, %v2047, 0
        %v2202 = vsel %vm446, %v2049, 0
        %v2205 = vsel %vm446, %v2051, 0
        %v2208 = vsel %vm446, %v2053, 0
        %v2211 = vsel %vm446, %v2055, 0
        %v2214 = vsel %vm446, %v2057, 0
        %v2217 = vsel %vm591, %v2071, 0
        %2219 = vmatprep.subr.mxu0 0.0
        %2220 = vmatpush1.msra.mxu0 %v2059
        %2221 = vmatprep.subr.mxu0 0.0
        %2222 = vmatpush1.msra.mxu0 %v2060
        %2223 = vmatprep.subr.mxu0 0.0
        %2224 = vmatpush1.msra.mxu0 %v2061
        %2225 = vmatprep.subr.mxu0 0.0
        %2226 = vmatpush1.msra.mxu0 %v2062
        %2227 = vmatprep.subr.mxu0 0.0
        %2228 = vmatpush1.msra.mxu0 %v2063
        %2229 = vmatprep.subr.mxu0 0.0
        %2230 = vmatpush1.msra.mxu0 %v2064
        %2231 = vmatprep.subr.mxu0 0.0
        %2232 = vmatpush1.msra.mxu0 %v2065
        %2233 = vmatprep.subr.mxu0 0.0
        %2234 = vmatpush1.msra.mxu0 %v2066
        %2235 = vmatprep.subr.mxu0 0.0
        %2236 = vmatpush1.msra.mxu0 %v2067
        %2237 = vmatprep.subr.mxu0 0.0
        %2238 = vmatpush1.msra.mxu0 %v2068
        %2239 = vmatprep.subr.mxu0 0.0
        %2240 = vmatpush1.msra.mxu0 %v2069
        %2241 = vmatprep.subr.mxu0 0.0
        %2242 = vmatpush1.msra.mxu0 %v2070
        %2243 = vmatprep.subr.mxu0 0.0
        %2244 = vmatpush1.msra.mxu0 %v2217
        %2245 = vmatprep.subr.mxu0 0.0
        %2246 = vmatpush1.msra.mxu0 0.0
        %2247 = vmatprep.subr.mxu0 0.0
        %2248 = vmatpush1.msra.mxu0 0.0
        %2249 = vmatprep.subr.mxu0 0.0
        %2250 = vmatpush1.msra.mxu0 0.0
        %2251 = vmatprep.subr.mxu0 0.0
        %2252 = vmatpush1.msra.mxu0 0.0
        %2253 = vmatprep.subr.mxu0 0.0
        %2254 = vmatpush1.msra.mxu0 0.0
        %2255 = vmatprep.subr.mxu0 0.0
        %2256 = vmatpush1.msra.mxu0 0.0
        %2257 = vmatprep.subr.mxu0 0.0
        %2258 = vmatpush1.msra.mxu0 0.0
        %2259 = vmatprep.subr.mxu0 0.0
        %2260 = vmatpush1.msra.mxu0 0.0
        %2261 = vmatprep.subr.mxu0 0.0
        %2262 = vmatpush1.msra.mxu0 0.0
        %2263 = vmatprep.subr.mxu0 0.0
        %2264 = vmatpush1.msra.mxu0 0.0
        %2265 = vmatprep.subr.mxu0 0.0
        %2266 = vmatpush1.msra.mxu0 0.0
        %2267 = vmatprep.subr.mxu0 0.0
        %2268 = vmatpush1.msra.mxu0 0.0
        %2269 = vmatprep.subr.mxu0 0.0
        %2270 = vmatpush1.msra.mxu0 0.0
        %2271 = vmatprep.subr.mxu0 0.0
        %2272 = vmatpush1.msra.mxu0 0.0
        %2273 = vmatprep.subr.mxu0 0.0
        %2274 = vmatpush1.msra.mxu0 0.0
        %2275 = vmatprep.subr.mxu0 0.0
        %2276 = vmatpush1.msra.mxu0 0.0
        %2277 = vmatprep.subr.mxu0 0.0
        %2278 = vmatpush1.msra.mxu0 0.0
        %2279 = vmatprep.subr.mxu0 0.0
        %2280 = vmatpush1.msra.mxu0 0.0
        %2281 = vmatprep.subr.mxu0 0.0
        %2282 = vmatpush1.msra.mxu0 0.0
        %2283 = vmatprep.mubr.f32.mxu0 0.0
        %2284 = vmatmul.mubr.f32.gmra.mrb[0].mxu0 %v2073
        %v2285 = vpop.f32.mrb[0].mxu0
        %v2286 = vadd.f32 0.0, %v2285
        %v2287 = vpop.f32.mrb[0].mxu0
        %2288 = vmatprep.mubr.f32.mxu0 0.0
        %2289 = vmatmul.mubr.f32.gmra.mrb[0].mxu0 %v2076
        %v2290 = vpop.f32.mrb[0].mxu0
        %v2291 = vadd.f32 0.0, %v2290
        %v2292 = vpop.f32.mrb[0].mxu0
        %2293 = vmatprep.mubr.f32.mxu0 0.0
        %2294 = vmatmul.mubr.f32.gmra.mrb[0].mxu0 %v2079
        %v2295 = vpop.f32.mrb[0].mxu0
        %v2296 = vadd.f32 0.0, %v2295
        %v2297 = vpop.f32.mrb[0].mxu0
        %2298 = vmatprep.mubr.f32.mxu0 0.0
        %2299 = vmatmul.mubr.f32.gmra.mrb[0].mxu0 %v2082
        %v2300 = vpop.f32.mrb[0].mxu0
        %v2301 = vadd.f32 0.0, %v2300
        %v2302 = vpop.f32.mrb[0].mxu0
        %2303 = vmatprep.mubr.f32.mxu0 0.0
        %2304 = vmatmul.mubr.f32.gmra.mrb[0].mxu0 %v2085
        %v2305 = vpop.f32.mrb[0].mxu0
        %v2306 = vadd.f32 0.0, %v2305
        %v2307 = vpop.f32.mrb[0].mxu0
        %2308 = vmatprep.mubr.f32.mxu0 0.0
        %2309 = vmatmul.mubr.f32.gmra.mrb[0].mxu0 %v2088
        %v2310 = vpop.f32.mrb[0].mxu0
        %v2311 = vadd.f32 0.0, %v2310
        %v2312 = vpop.f32.mrb[0].mxu0
        %2313 = vmatprep.mubr.f32.mxu0 0.0
        %2314 = vmatmul.mubr.f32.gmra.mrb[0].mxu0 %v2091
        %v2315 = vpop.f32.mrb[0].mxu0
        %v2316 = vadd.f32 0.0, %v2315
        %v2317 = vpop.f32.mrb[0].mxu0
        %2318 = vmatprep.mubr.f32.mxu0 0.0
        %2319 = vmatmul.mubr.f32.gmra.mrb[0].mxu0 %v2094
        %v2320 = vpop.f32.mrb[0].mxu0
        %v2321 = vadd.f32 0.0, %v2320
        %v2322 = vpop.f32.mrb[0].mxu0
        %2323 = vmatprep.mubr.f32.mxu0 0.0
        %2324 = vmatmul.mubr.f32.gmra.mrb[0].mxu0 %v2097
        %v2325 = vpop.f32.mrb[0].mxu0
        %v2326 = vadd.f32 0.0, %v2325
        %v2327 = vpop.f32.mrb[0].mxu0
        %2328 = vmatprep.mubr.f32.mxu0 0.0
        %2329 = vmatmul.mubr.f32.gmra.mrb[0].mxu0 %v2100
        %v2330 = vpop.f32.mrb[0].mxu0
        %v2331 = vadd.f32 0.0, %v2330
        %v2332 = vpop.f32.mrb[0].mxu0
        %2333 = vmatprep.mubr.f32.mxu0 0.0
        %2334 = vmatmul.mubr.f32.gmra.mrb[0].mxu0 %v2103
        %v2335 = vpop.f32.mrb[0].mxu0
        %v2336 = vadd.f32 0.0, %v2335
        %v2337 = vpop.f32.mrb[0].mxu0
        %2338 = vmatprep.mubr.f32.mxu0 0.0
        %2339 = vmatmul.mubr.f32.gmra.mrb[0].mxu0 %v2106
        %v2340 = vpop.f32.mrb[0].mxu0
        %v2341 = vadd.f32 0.0, %v2340
        %v2342 = vpop.f32.mrb[0].mxu0
        %2343 = vmatprep.mubr.f32.mxu0 0.0
        %2344 = vmatmul.mubr.f32.gmra.mrb[0].mxu0 %v2109
        %v2345 = vpop.f32.mrb[0].mxu0
        %v2346 = vadd.f32 0.0, %v2345
        %v2347 = vpop.f32.mrb[0].mxu0
        %2348 = vmatprep.mubr.f32.mxu0 0.0
        %2349 = vmatmul.mubr.f32.gmra.mrb[0].mxu0 %v2112
        %v2350 = vpop.f32.mrb[0].mxu0
        %v2351 = vadd.f32 0.0, %v2350
        %v2352 = vpop.f32.mrb[0].mxu0
        %2353 = vmatprep.mubr.f32.mxu0 0.0
        %2354 = vmatmul.mubr.f32.gmra.mrb[0].mxu0 %v2115
        %v2355 = vpop.f32.mrb[0].mxu0
        %v2356 = vadd.f32 0.0, %v2355
        %v2357 = vpop.f32.mrb[0].mxu0
        %2358 = vmatprep.mubr.f32.mxu0 0.0
        %2359 = vmatmul.mubr.f32.gmra.mrb[0].mxu0 %v2118
        %v2360 = vpop.f32.mrb[0].mxu0
        %v2361 = vadd.f32 0.0, %v2360
        %v2362 = vpop.f32.mrb[0].mxu0
        %2363 = vmatprep.mubr.f32.mxu0 0.0
        %2364 = vmatmul.mubr.f32.gmra.mrb[0].mxu0 %v2121
        %v2365 = vpop.f32.mrb[0].mxu0
        %v2366 = vadd.f32 0.0, %v2365
        %v2367 = vpop.f32.mrb[0].mxu0
        %2368 = vmatprep.mubr.f32.mxu0 0.0
        %2369 = vmatmul.mubr.f32.gmra.mrb[0].mxu0 %v2124
        %v2370 = vpop.f32.mrb[0].mxu0
        %v2371 = vadd.f32 0.0, %v2370
        %v2372 = vpop.f32.mrb[0].mxu0
        %2373 = vmatprep.mubr.f32.mxu0 0.0
        %2374 = vmatmul.mubr.f32.gmra.mrb[0].mxu0 %v2127
        %v2375 = vpop.f32.mrb[0].mxu0
        %v2376 = vadd.f32 0.0, %v2375
        %v2377 = vpop.f32.mrb[0].mxu0
        %2378 = vmatprep.mubr.f32.mxu0 0.0
        %2379 = vmatmul.mubr.f32.gmra.mrb[0].mxu0 %v2130
        %v2380 = vpop.f32.mrb[0].mxu0
        %v2381 = vadd.f32 0.0, %v2380
        %v2382 = vpop.f32.mrb[0].mxu0
        %2383 = vmatprep.mubr.f32.mxu0 0.0
        %2384 = vmatmul.mubr.f32.gmra.mrb[0].mxu0 %v2133
        %v2385 = vpop.f32.mrb[0].mxu0
        %v2386 = vadd.f32 0.0, %v2385
        %v2387 = vpop.f32.mrb[0].mxu0
        %2388 = vmatprep.mubr.f32.mxu0 0.0
        %2389 = vmatmul.mubr.f32.gmra.mrb[0].mxu0 %v2136
        %v2390 = vpop.f32.mrb[0].mxu0
        %v2391 = vadd.f32 0.0, %v2390
        %v2392 = vpop.f32.mrb[0].mxu0
        %2393 = vmatprep.mubr.f32.mxu0 0.0
        %2394 = vmatmul.mubr.f32.gmra.mrb[0].mxu0 %v2139
        %v2395 = vpop.f32.mrb[0].mxu0
        %v2396 = vadd.f32 0.0, %v2395
        %v2397 = vpop.f32.mrb[0].mxu0
        %2398 = vmatprep.mubr.f32.mxu0 0.0
        %2399 = vmatmul.mubr.f32.gmra.mrb[0].mxu0 %v2142
        %v2400 = vpop.f32.mrb[0].mxu0
        %v2401 = vadd.f32 0.0, %v2400
        %v2402 = vpop.f32.mrb[0].mxu0
        %2403 = vmatprep.mubr.f32.mxu0 0.0
        %2404 = vmatmul.mubr.f32.gmra.mrb[0].mxu0 %v2145
        %v2405 = vpop.f32.mrb[0].mxu0
        %v2406 = vadd.f32 0.0, %v2405
        %v2407 = vpop.f32.mrb[0].mxu0
        %2408 = vmatprep.mubr.f32.mxu0 0.0
        %2409 = vmatmul.mubr.f32.gmra.mrb[0].mxu0 %v2148
        %v2410 = vpop.f32.mrb[0].mxu0
        %v2411 = vadd.f32 0.0, %v2410
        %v2412 = vpop.f32.mrb[0].mxu0
        %2413 = vmatprep.mubr.f32.mxu0 0.0
        %2414 = vmatmul.mubr.f32.gmra.mrb[0].mxu0 %v2151
        %v2415 = vpop.f32.mrb[0].mxu0
        %v2416 = vadd.f32 0.0, %v2415
        %v2417 = vpop.f32.mrb[0].mxu0
        %2418 = vmatprep.mubr.f32.mxu0 0.0
        %2419 = vmatmul.mubr.f32.gmra.mrb[0].mxu0 %v2154
        %v2420 = vpop.f32.mrb[0].mxu0
        %v2421 = vadd.f32 0.0, %v2420
        %v2422 = vpop.f32.mrb[0].mxu0
        %2423 = vmatprep.mubr.f32.mxu0 0.0
        %2424 = vmatmul.mubr.f32.gmra.mrb[0].mxu0 %v2157
        %v2425 = vpop.f32.mrb[0].mxu0
        %v2426 = vadd.f32 0.0, %v2425
        %v2427 = vpop.f32.mrb[0].mxu0
        %2428 = vmatprep.mubr.f32.mxu0 0.0
        %2429 = vmatmul.mubr.f32.gmra.mrb[0].mxu0 %v2160
        %v2430 = vpop.f32.mrb[0].mxu0
        %v2431 = vadd.f32 0.0, %v2430
        %v2432 = vpop.f32.mrb[0].mxu0
        %2433 = vmatprep.mubr.f32.mxu0 0.0
        %2434 = vmatmul.mubr.f32.gmra.mrb[0].mxu0 %v2163
        %v2435 = vpop.f32.mrb[0].mxu0
        %v2436 = vadd.f32 0.0, %v2435
        %v2437 = vpop.f32.mrb[0].mxu0
        %2438 = vmatprep.mubr.f32.mxu0 0.0
        %2439 = vmatmul.mubr.f32.gmra.mrb[0].mxu0 %v2166
        %v2440 = vpop.f32.mrb[0].mxu0
        %v2441 = vadd.f32 0.0, %v2440
        %v2442 = vpop.f32.mrb[0].mxu0
        %2443 = vmatprep.mubr.f32.mxu0 0.0
        %2444 = vmatmul.mubr.f32.gmra.mrb[0].mxu0 %v2169
        %v2445 = vpop.f32.mrb[0].mxu0
        %v2446 = vadd.f32 0.0, %v2445
        %v2447 = vpop.f32.mrb[0].mxu0
        %2448 = vmatprep.mubr.f32.mxu0 0.0
        %2449 = vmatmul.mubr.f32.gmra.mrb[0].mxu0 %v2172
        %v2450 = vpop.f32.mrb[0].mxu0
        %v2451 = vadd.f32 0.0, %v2450
        %v2452 = vpop.f32.mrb[0].mxu0
        %2453 = vmatprep.mubr.f32.mxu0 0.0
        %2454 = vmatmul.mubr.f32.gmra.mrb[0].mxu0 %v2175
        %v2455 = vpop.f32.mrb[0].mxu0
        %v2456 = vadd.f32 0.0, %v2455
        %v2457 = vpop.f32.mrb[0].mxu0
        %2458 = vmatprep.mubr.f32.mxu0 0.0
        %2459 = vmatmul.mubr.f32.gmra.mrb[0].mxu0 %v2178
        %v2460 = vpop.f32.mrb[0].mxu0
        %v2461 = vadd.f32 0.0, %v2460
        %v2462 = vpop.f32.mrb[0].mxu0
        %2463 = vmatprep.mubr.f32.mxu0 0.0
        %2464 = vmatmul.mubr.f32.gmra.mrb[0].mxu0 %v2181
        %v2465 = vpop.f32.mrb[0].mxu0
        %v2466 = vadd.f32 0.0, %v2465
        %v2467 = vpop.f32.mrb[0].mxu0
        %2468 = vmatprep.mubr.f32.mxu0 0.0
        %2469 = vmatmul.mubr.f32.gmra.mrb[0].mxu0 %v2184
        %v2470 = vpop.f32.mrb[0].mxu0
        %v2471 = vadd.f32 0.0, %v2470
        %v2472 = vpop.f32.mrb[0].mxu0
        %2473 = vmatprep.mubr.f32.mxu0 0.0
        %2474 = vmatmul.mubr.f32.gmra.mrb[0].mxu0 %v2187
        %v2475 = vpop.f32.mrb[0].mxu0
        %v2476 = vadd.f32 0.0, %v2475
        %v2477 = vpop.f32.mrb[0].mxu0
        %2478 = vmatprep.mubr.f32.mxu0 0.0
        %2479 = vmatmul.mubr.f32.gmra.mrb[0].mxu0 %v2190
        %v2480 = vpop.f32.mrb[0].mxu0
        %v2481 = vadd.f32 0.0, %v2480
        %v2482 = vpop.f32.mrb[0].mxu0
        %2483 = vmatprep.mubr.f32.mxu0 0.0
        %2484 = vmatmul.mubr.f32.gmra.mrb[0].mxu0 %v2193
        %v2485 = vpop.f32.mrb[0].mxu0
        %v2486 = vadd.f32 0.0, %v2485
        %v2487 = vpop.f32.mrb[0].mxu0
        %2488 = vmatprep.mubr.f32.mxu0 0.0
        %2489 = vmatmul.mubr.f32.gmra.mrb[0].mxu0 %v2196
        %v2490 = vpop.f32.mrb[0].mxu0
        %v2491 = vadd.f32 0.0, %v2490
        %v2492 = vpop.f32.mrb[0].mxu0
        %2493 = vmatprep.mubr.f32.mxu0 0.0
        %2494 = vmatmul.mubr.f32.gmra.mrb[0].mxu0 %v2199
        %v2495 = vpop.f32.mrb[0].mxu0
        %v2496 = vadd.f32 0.0, %v2495
        %v2497 = vpop.f32.mrb[0].mxu0
        %2498 = vmatprep.mubr.f32.mxu0 0.0
        %2499 = vmatmul.mubr.f32.gmra.mrb[0].mxu0 %v2202
        %v2500 = vpop.f32.mrb[0].mxu0
        %v2501 = vadd.f32 0.0, %v2500
        %v2502 = vpop.f32.mrb[0].mxu0
        %2503 = vmatprep.mubr.f32.mxu0 0.0
        %2504 = vmatmul.mubr.f32.gmra.mrb[0].mxu0 %v2205
        %v2505 = vpop.f32.mrb[0].mxu0
        %v2506 = vadd.f32 0.0, %v2505
        %v2507 = vpop.f32.mrb[0].mxu0
        %2508 = vmatprep.mubr.f32.mxu0 0.0
        %2509 = vmatmul.mubr.f32.gmra.mrb[0].mxu0 %v2208
        %v2510 = vpop.f32.mrb[0].mxu0
        %v2511 = vadd.f32 0.0, %v2510
        %v2512 = vpop.f32.mrb[0].mxu0
        %2513 = vmatprep.mubr.f32.mxu0 0.0
        %2514 = vmatmul.mubr.f32.gmra.mrb[0].mxu0 %v2211
        %v2515 = vpop.f32.mrb[0].mxu0
        %v2516 = vadd.f32 0.0, %v2515
        %v2517 = vpop.f32.mrb[0].mxu0
        %2518 = vmatprep.mubr.f32.mxu0 0.0
        %2519 = vmatmul.mubr.f32.gmra.mrb[0].mxu0 %v2214
        %v2520 = vpop.f32.mrb[0].mxu0
        %v2521 = vadd.f32 0.0, %v2520
        %v2522 = vpop.f32.mrb[0].mxu0
        %2523 = vdwg.mxu0
        %v2524 = vadd.f32 %v1914, %v2286
        %v2525 = vadd.f32 %v1915, %v2291
        %v2526 = vadd.f32 %v1916, %v2296
        %v2527 = vadd.f32 %v1917, %v2301
        %v2528 = vadd.f32 %v1918, %v2306
        %v2529 = vadd.f32 %v1919, %v2311
        %v2530 = vadd.f32 %v1920, %v2316
        %v2531 = vadd.f32 %v1921, %v2321
        %v2532 = vadd.f32 %v1922, %v2326
        %v2533 = vadd.f32 %v1923, %v2331
        %v2534 = vadd.f32 %v1924, %v2336
        %v2535 = vadd.f32 %v1925, %v2341
        %v2536 = vadd.f32 %v1926, %v2346
        %v2537 = vadd.f32 %v1927, %v2351
        %v2538 = vadd.f32 %v1928, %v2356
        %v2539 = vadd.f32 %v1929, %v2361
        %v2540 = vadd.f32 %v1930, %v2366
        %v2541 = vadd.f32 %v1931, %v2371
        %v2542 = vadd.f32 %v1932, %v2376
        %v2543 = vadd.f32 %v1933, %v2381
        %v2544 = vadd.f32 %v1934, %v2386
        %v2545 = vadd.f32 %v1935, %v2391
        %v2546 = vadd.f32 %v1936, %v2396
        %v2547 = vadd.f32 %v1937, %v2401
        %v2548 = vadd.f32 %v1938, %v2406
        %v2549 = vadd.f32 %v1939, %v2411
        %v2550 = vadd.f32 %v1940, %v2416
        %v2551 = vadd.f32 %v1941, %v2421
        %v2552 = vadd.f32 %v1942, %v2426
        %v2553 = vadd.f32 %v1943, %v2431
        %v2554 = vadd.f32 %v1944, %v2436
        %v2555 = vadd.f32 %v1945, %v2441
        %v2556 = vadd.f32 %v1946, %v2446
        %v2557 = vadd.f32 %v1947, %v2451
        %v2558 = vadd.f32 %v1948, %v2456
        %v2559 = vadd.f32 %v1949, %v2461
        %v2560 = vadd.f32 %v1950, %v2466
        %v2561 = vadd.f32 %v1951, %v2471
        %v2562 = vadd.f32 %v1952, %v2476
        %v2563 = vadd.f32 %v1953, %v2481
        %v2564 = vadd.f32 %v1954, %v2486
        %v2565 = vadd.f32 %v1955, %v2491
        %v2566 = vadd.f32 %v1956, %v2496
        %v2567 = vadd.f32 %v1957, %v2501
        %v2568 = vadd.f32 %v1958, %v2506
        %v2569 = vadd.f32 %v1959, %v2511
        %v2570 = vadd.f32 %v1960, %v2516
        %v2571 = vadd.f32 %v1961, %v2521
        %v2572 = vmax.f32 %v2524, 0.0
        %v2573 = vmax.f32 %v2525, 0.0
        %v2574 = vmax.f32 %v2526, 0.0
        %v2575 = vmax.f32 %v2527, 0.0
        %v2576 = vmax.f32 %v2528, 0.0
        %v2577 = vmax.f32 %v2529, 0.0
        %v2578 = vmax.f32 %v2530, 0.0
        %v2579 = vmax.f32 %v2531, 0.0
        %v2580 = vmax.f32 %v2532, 0.0
        %v2581 = vmax.f32 %v2533, 0.0
        %v2582 = vmax.f32 %v2534, 0.0
        %v2583 = vmax.f32 %v2535, 0.0
        %v2584 = vmax.f32 %v2536, 0.0
        %v2585 = vmax.f32 %v2537, 0.0
        %v2586 = vmax.f32 %v2538, 0.0
        %v2587 = vmax.f32 %v2539, 0.0
        %v2588 = vmax.f32 %v2540, 0.0
        %v2589 = vmax.f32 %v2541, 0.0
        %v2590 = vmax.f32 %v2542, 0.0
        %v2591 = vmax.f32 %v2543, 0.0
        %v2592 = vmax.f32 %v2544, 0.0
        %v2593 = vmax.f32 %v2545, 0.0
        %v2594 = vmax.f32 %v2546, 0.0
        %v2595 = vmax.f32 %v2547, 0.0
        %v2596 = vmax.f32 %v2548, 0.0
        %v2597 = vmax.f32 %v2549, 0.0
        %v2598 = vmax.f32 %v2550, 0.0
        %v2599 = vmax.f32 %v2551, 0.0
        %v2600 = vmax.f32 %v2552, 0.0
        %v2601 = vmax.f32 %v2553, 0.0
        %v2602 = vmax.f32 %v2554, 0.0
        %v2603 = vmax.f32 %v2555, 0.0
        %v2604 = vmax.f32 %v2556, 0.0
        %v2605 = vmax.f32 %v2557, 0.0
        %v2606 = vmax.f32 %v2558, 0.0
        %v2607 = vmax.f32 %v2559, 0.0
        %v2608 = vmax.f32 %v2560, 0.0
        %v2609 = vmax.f32 %v2561, 0.0
        %v2610 = vmax.f32 %v2562, 0.0
        %v2611 = vmax.f32 %v2563, 0.0
        %v2612 = vmax.f32 %v2564, 0.0
        %v2613 = vmax.f32 %v2565, 0.0
        %v2614 = vmax.f32 %v2566, 0.0
        %v2615 = vmax.f32 %v2567, 0.0
        %v2616 = vmax.f32 %v2568, 0.0
        %v2617 = vmax.f32 %v2569, 0.0
        %v2618 = vmax.f32 %v2570, 0.0
        %v2619 = vmax.f32 %v2571, 0.0
        %vm2620 = vcmask 392192
        %2621 = vst.msk [vmem:[#allocation2] sm:$0xff] %vm2620, %v2572
        %2622 = vst.msk [vmem:[#allocation2 + $0x8] sm:$0xff] %vm2620, %v2573
        %2623 = vst.msk [vmem:[#allocation2 + $0x10] sm:$0xff] %vm2620, %v2574
        %2624 = vst.msk [vmem:[#allocation2 + $0x18] sm:$0xff] %vm2620, %v2575
        %2625 = vst.msk [vmem:[#allocation2 + $0x20] sm:$0xff] %vm2620, %v2576
        %2626 = vst.msk [vmem:[#allocation2 + $0x28] sm:$0xff] %vm2620, %v2577
        %2627 = vst.msk [vmem:[#allocation2 + $0x30] sm:$0xff] %vm2620, %v2578
        %2628 = vst.msk [vmem:[#allocation2 + $0x38] sm:$0xff] %vm2620, %v2579
        %2629 = vst.msk [vmem:[#allocation2 + $0x40] sm:$0xff] %vm2620, %v2580
        %2630 = vst.msk [vmem:[#allocation2 + $0x48] sm:$0xff] %vm2620, %v2581
        %2631 = vst.msk [vmem:[#allocation2 + $0x50] sm:$0xff] %vm2620, %v2582
        %2632 = vst.msk [vmem:[#allocation2 + $0x58] sm:$0xff] %vm2620, %v2583
        %2633 = vst.msk [vmem:[#allocation2 + $0x60] sm:$0xff] %vm2620, %v2584
        %2634 = vst.msk [vmem:[#allocation2 + $0x68] sm:$0xff] %vm2620, %v2585
        %2635 = vst.msk [vmem:[#allocation2 + $0x70] sm:$0xff] %vm2620, %v2586
        %2636 = vst.msk [vmem:[#allocation2 + $0x78] sm:$0xff] %vm2620, %v2587
        %2637 = vst.msk [vmem:[#allocation2 + $0x80] sm:$0xff] %vm2620, %v2588
        %2638 = vst.msk [vmem:[#allocation2 + $0x88] sm:$0xff] %vm2620, %v2589
        %2639 = vst.msk [vmem:[#allocation2 + $0x90] sm:$0xff] %vm2620, %v2590
        %2640 = vst.msk [vmem:[#allocation2 + $0x98] sm:$0xff] %vm2620, %v2591
        %2641 = vst.msk [vmem:[#allocation2 + $0xa0] sm:$0xff] %vm2620, %v2592
        %2642 = vst.msk [vmem:[#allocation2 + $0xa8] sm:$0xff] %vm2620, %v2593
        %2643 = vst.msk [vmem:[#allocation2 + $0xb0] sm:$0xff] %vm2620, %v2594
        %2644 = vst.msk [vmem:[#allocation2 + $0xb8] sm:$0xff] %vm2620, %v2595
        %2645 = vst.msk [vmem:[#allocation2 + $0xc0] sm:$0xff] %vm2620, %v2596
        %2646 = vst.msk [vmem:[#allocation2 + $0xc8] sm:$0xff] %vm2620, %v2597
        %2647 = vst.msk [vmem:[#allocation2 + $0xd0] sm:$0xff] %vm2620, %v2598
        %2648 = vst.msk [vmem:[#allocation2 + $0xd8] sm:$0xff] %vm2620, %v2599
        %2649 = vst.msk [vmem:[#allocation2 + $0xe0] sm:$0xff] %vm2620, %v2600
        %2650 = vst.msk [vmem:[#allocation2 + $0xe8] sm:$0xff] %vm2620, %v2601
        %2651 = vst.msk [vmem:[#allocation2 + $0xf0] sm:$0xff] %vm2620, %v2602
        %2652 = vst.msk [vmem:[#allocation2 + $0xf8] sm:$0xff] %vm2620, %v2603
        %2653 = vst.msk [vmem:[#allocation2 + $0x100] sm:$0xff] %vm2620, %v2604
        %2654 = vst.msk [vmem:[#allocation2 + $0x108] sm:$0xff] %vm2620, %v2605
        %2655 = vst.msk [vmem:[#allocation2 + $0x110] sm:$0xff] %vm2620, %v2606
        %2656 = vst.msk [vmem:[#allocation2 + $0x118] sm:$0xff] %vm2620, %v2607
        %2657 = vst.msk [vmem:[#allocation2 + $0x120] sm:$0xff] %vm2620, %v2608
        %2658 = vst.msk [vmem:[#allocation2 + $0x128] sm:$0xff] %vm2620, %v2609
        %2659 = vst.msk [vmem:[#allocation2 + $0x130] sm:$0xff] %vm2620, %v2610
        %2660 = vst.msk [vmem:[#allocation2 + $0x138] sm:$0xff] %vm2620, %v2611
        %2661 = vst.msk [vmem:[#allocation2 + $0x140] sm:$0xff] %vm2620, %v2612
        %2662 = vst.msk [vmem:[#allocation2 + $0x148] sm:$0xff] %vm2620, %v2613
        %2663 = vst.msk [vmem:[#allocation2 + $0x150] sm:$0xff] %vm2620, %v2614
        %2664 = vst.msk [vmem:[#allocation2 + $0x158] sm:$0xff] %vm2620, %v2615
        %2665 = vst.msk [vmem:[#allocation2 + $0x160] sm:$0xff] %vm2620, %v2616
        %2666 = vst.msk [vmem:[#allocation2 + $0x168] sm:$0xff] %vm2620, %v2617
        %2667 = vst.msk [vmem:[#allocation2 + $0x170] sm:$0xff] %vm2620, %v2618
        %2668 = vst.msk [vmem:[#allocation2 + $0x178] sm:$0xff] %vm2620, %v2619
        %2669 = vst.msk [vmem:[#allocation2 + $0x180] sm:$0xff] %vm2620, 0.0
        %v2670 = vld [vmem:[#allocation2] ss:$2 sm:$0xff]
        %s2671 = scalar_lea.vmem [#allocation2], 16
        %v2672 = vld [vmem:[%s2671] ss:$2 sm:$0xff]
        %s2673 = scalar_lea.vmem [#allocation2], 32
        %v2674 = vld [vmem:[%s2673] ss:$2 sm:$0xff]
        %s2675 = scalar_lea.vmem [#allocation2], 48
        %v2676 = vld [vmem:[%s2675] ss:$2 sm:$0xff]
        %s2677 = scalar_lea.vmem [#allocation2], 64
        %v2678 = vld [vmem:[%s2677] ss:$2 sm:$0xff]
        %s2679 = scalar_lea.vmem [#allocation2], 80
        %v2680 = vld [vmem:[%s2679] ss:$2 sm:$0xff]
        %s2681 = scalar_lea.vmem [#allocation2], 96
        %v2682 = vld [vmem:[%s2681] ss:$2 sm:$0xff]
        %s2683 = scalar_lea.vmem [#allocation2], 112
        %v2684 = vld [vmem:[%s2683] ss:$2 sm:$0xff]
        %s2685 = scalar_lea.vmem [#allocation2], 128
        %v2686 = vld [vmem:[%s2685] ss:$2 sm:$0xff]
        %s2687 = scalar_lea.vmem [#allocation2], 144
        %v2688 = vld [vmem:[%s2687] ss:$2 sm:$0xff]
        %s2689 = scalar_lea.vmem [#allocation2], 160
        %v2690 = vld [vmem:[%s2689] ss:$2 sm:$0xff]
        %s2691 = scalar_lea.vmem [#allocation2], 176
        %v2692 = vld [vmem:[%s2691] ss:$2 sm:$0xff]
        %s2693 = scalar_lea.vmem [#allocation2], 192
        %v2694 = vld [vmem:[%s2693] ss:$2 sm:$0xff]
        %s2695 = scalar_lea.vmem [#allocation2], 208
        %v2696 = vld [vmem:[%s2695] ss:$2 sm:$0xff]
        %s2697 = scalar_lea.vmem [#allocation2], 224
        %v2698 = vld [vmem:[%s2697] ss:$2 sm:$0xff]
        %s2699 = scalar_lea.vmem [#allocation2], 240
        %v2700 = vld [vmem:[%s2699] ss:$2 sm:$0xff]
        %s2701 = scalar_lea.vmem [#allocation2], 256
        %v2702 = vld [vmem:[%s2701] ss:$2 sm:$0xff]
        %s2703 = scalar_lea.vmem [#allocation2], 272
        %v2704 = vld [vmem:[%s2703] ss:$2 sm:$0xff]
        %s2705 = scalar_lea.vmem [#allocation2], 288
        %v2706 = vld [vmem:[%s2705] ss:$2 sm:$0xff]
        %s2707 = scalar_lea.vmem [#allocation2], 304
        %v2708 = vld [vmem:[%s2707] ss:$2 sm:$0xff]
        %s2709 = scalar_lea.vmem [#allocation2], 320
        %v2710 = vld [vmem:[%s2709] ss:$2 sm:$0xff]
        %s2711 = scalar_lea.vmem [#allocation2], 336
        %v2712 = vld [vmem:[%s2711] ss:$2 sm:$0xff]
        %s2713 = scalar_lea.vmem [#allocation2], 352
        %v2714 = vld [vmem:[%s2713] ss:$2 sm:$0xff]
        %s2715 = scalar_lea.vmem [#allocation2], 368
        %v2716 = vld [vmem:[%s2715] ss:$2 sm:$0xff]
        %v2717 = vld [vmem:[%s2] sm:$0xff]
        %v2718 = vld [vmem:[%s2 + $0x8] sm:$0xff]
        %v2719 = vld [vmem:[%s2 + $0x10] sm:$0xff]
        %v2720 = vld [vmem:[%s2 + $0x18] sm:$0xff]
        %v2721 = vld [vmem:[%s2 + $0x20] sm:$0xff]
        %v2722 = vld [vmem:[%s2 + $0x28] sm:$0xff]
        %s2723 = scalar_lea.vmem [#allocation2], 1
        %v2724 = vld [vmem:[%s2723] ss:$2 sm:$0xff]
        %s2725 = scalar_lea.vmem [#allocation2], 17
        %v2726 = vld [vmem:[%s2725] ss:$2 sm:$0xff]
        %s2727 = scalar_lea.vmem [#allocation2], 33
        %v2728 = vld [vmem:[%s2727] ss:$2 sm:$0xff]
        %s2729 = scalar_lea.vmem [#allocation2], 49
        %v2730 = vld [vmem:[%s2729] ss:$2 sm:$0xff]
        %s2731 = scalar_lea.vmem [#allocation2], 65
        %v2732 = vld [vmem:[%s2731] ss:$2 sm:$0xff]
        %s2733 = scalar_lea.vmem [#allocation2], 81
        %v2734 = vld [vmem:[%s2733] ss:$2 sm:$0xff]
        %s2735 = scalar_lea.vmem [#allocation2], 97
        %v2736 = vld [vmem:[%s2735] ss:$2 sm:$0xff]
        %s2737 = scalar_lea.vmem [#allocation2], 113
        %v2738 = vld [vmem:[%s2737] ss:$2 sm:$0xff]
        %s2739 = scalar_lea.vmem [#allocation2], 129
        %v2740 = vld [vmem:[%s2739] ss:$2 sm:$0xff]
        %s2741 = scalar_lea.vmem [#allocation2], 145
        %v2742 = vld [vmem:[%s2741] ss:$2 sm:$0xff]
        %s2743 = scalar_lea.vmem [#allocation2], 161
        %v2744 = vld [vmem:[%s2743] ss:$2 sm:$0xff]
        %s2745 = scalar_lea.vmem [#allocation2], 177
        %v2746 = vld [vmem:[%s2745] ss:$2 sm:$0xff]
        %s2747 = scalar_lea.vmem [#allocation2], 193
        %v2748 = vld [vmem:[%s2747] ss:$2 sm:$0xff]
        %s2749 = scalar_lea.vmem [#allocation2], 209
        %v2750 = vld [vmem:[%s2749] ss:$2 sm:$0xff]
        %s2751 = scalar_lea.vmem [#allocation2], 225
        %v2752 = vld [vmem:[%s2751] ss:$2 sm:$0xff]
        %s2753 = scalar_lea.vmem [#allocation2], 241
        %v2754 = vld [vmem:[%s2753] ss:$2 sm:$0xff]
        %s2755 = scalar_lea.vmem [#allocation2], 257
        %v2756 = vld [vmem:[%s2755] ss:$2 sm:$0xff]
        %s2757 = scalar_lea.vmem [#allocation2], 273
        %v2758 = vld [vmem:[%s2757] ss:$2 sm:$0xff]
        %s2759 = scalar_lea.vmem [#allocation2], 289
        %v2760 = vld [vmem:[%s2759] ss:$2 sm:$0xff]
        %s2761 = scalar_lea.vmem [#allocation2], 305
        %v2762 = vld [vmem:[%s2761] ss:$2 sm:$0xff]
        %s2763 = scalar_lea.vmem [#allocation2], 321
        %v2764 = vld [vmem:[%s2763] ss:$2 sm:$0xff]
        %s2765 = scalar_lea.vmem [#allocation2], 337
        %v2766 = vld [vmem:[%s2765] ss:$2 sm:$0xff]
        %s2767 = scalar_lea.vmem [#allocation2], 353
        %v2768 = vld [vmem:[%s2767] ss:$2 sm:$0xff]
        %s2769 = scalar_lea.vmem [#allocation2], 369
        %v2770 = vld [vmem:[%s2769] ss:$2 sm:$0xff]
        %s2771 = scalar_lea.vmem %s2, 48
        %v2772 = vld [vmem:[%s2771] sm:$0xff]
        %v2773 = vld [vmem:[%s2771 + $0x8] sm:$0xff]
        %v2774 = vld [vmem:[%s2771 + $0x10] sm:$0xff]
        %v2775 = vld [vmem:[%s2771 + $0x18] sm:$0xff]
        %v2776 = vld [vmem:[%s2771 + $0x20] sm:$0xff]
        %v2777 = vld [vmem:[%s2771 + $0x28] sm:$0xff]
        %v2779 = vsel %vm2620, %v2724, 0
        %v2782 = vsel %vm2620, %v2726, 0
        %v2785 = vsel %vm2620, %v2728, 0
        %v2788 = vsel %vm2620, %v2730, 0
        %v2791 = vsel %vm2620, %v2732, 0
        %v2794 = vsel %vm2620, %v2734, 0
        %v2797 = vsel %vm2620, %v2736, 0
        %v2800 = vsel %vm2620, %v2738, 0
        %v2803 = vsel %vm2620, %v2740, 0
        %v2806 = vsel %vm2620, %v2742, 0
        %v2809 = vsel %vm2620, %v2744, 0
        %v2812 = vsel %vm2620, %v2746, 0
        %v2815 = vsel %vm2620, %v2748, 0
        %v2818 = vsel %vm2620, %v2750, 0
        %v2821 = vsel %vm2620, %v2752, 0
        %v2824 = vsel %vm2620, %v2754, 0
        %v2827 = vsel %vm2620, %v2756, 0
        %v2830 = vsel %vm2620, %v2758, 0
        %v2833 = vsel %vm2620, %v2760, 0
        %v2836 = vsel %vm2620, %v2762, 0
        %v2839 = vsel %vm2620, %v2764, 0
        %v2842 = vsel %vm2620, %v2766, 0
        %v2845 = vsel %vm2620, %v2768, 0
        %v2848 = vsel %vm2620, %v2770, 0
        %2850 = vmatprep.subr.mxu0 0.0
        %2851 = vmatpush1.msra.mxu0 %v2772
        %2852 = vmatprep.subr.mxu0 0.0
        %2853 = vmatpush1.msra.mxu0 %v2773
        %2854 = vmatprep.subr.mxu0 0.0
        %2855 = vmatpush1.msra.mxu0 %v2774
        %2856 = vmatprep.subr.mxu0 0.0
        %2857 = vmatpush1.msra.mxu0 %v2775
        %2858 = vmatprep.subr.mxu0 0.0
        %2859 = vmatpush1.msra.mxu0 %v2776
        %2860 = vmatprep.subr.mxu0 0.0
        %2861 = vmatpush1.msra.mxu0 %v2777
        %2862 = vmatprep.subr.mxu0 0.0
        %2863 = vmatpush1.msra.mxu0 0.0
        %2864 = vmatprep.subr.mxu0 0.0
        %2865 = vmatpush1.msra.mxu0 0.0
        %2866 = vmatprep.subr.mxu0 0.0
        %2867 = vmatpush1.msra.mxu0 0.0
        %2868 = vmatprep.subr.mxu0 0.0
        %2869 = vmatpush1.msra.mxu0 0.0
        %2870 = vmatprep.subr.mxu0 0.0
        %2871 = vmatpush1.msra.mxu0 0.0
        %2872 = vmatprep.subr.mxu0 0.0
        %2873 = vmatpush1.msra.mxu0 0.0
        %2874 = vmatprep.subr.mxu0 0.0
        %2875 = vmatpush1.msra.mxu0 0.0
        %2876 = vmatprep.subr.mxu0 0.0
        %2877 = vmatpush1.msra.mxu0 0.0
        %2878 = vmatprep.subr.mxu0 0.0
        %2879 = vmatpush1.msra.mxu0 0.0
        %2880 = vmatprep.subr.mxu0 0.0
        %2881 = vmatpush1.msra.mxu0 0.0
        %2882 = vmatprep.subr.mxu0 0.0
        %2883 = vmatpush1.msra.mxu0 0.0
        %2884 = vmatprep.subr.mxu0 0.0
        %2885 = vmatpush1.msra.mxu0 0.0
        %2886 = vmatprep.subr.mxu0 0.0
        %2887 = vmatpush1.msra.mxu0 0.0
        %2888 = vmatprep.subr.mxu0 0.0
        %2889 = vmatpush1.msra.mxu0 0.0
        %2890 = vmatprep.subr.mxu0 0.0
        %2891 = vmatpush1.msra.mxu0 0.0
        %2892 = vmatprep.subr.mxu0 0.0
        %2893 = vmatpush1.msra.mxu0 0.0
        %2894 = vmatprep.subr.mxu0 0.0
        %2895 = vmatpush1.msra.mxu0 0.0
        %2896 = vmatprep.subr.mxu0 0.0
        %2897 = vmatpush1.msra.mxu0 0.0
        %2898 = vmatprep.subr.mxu0 0.0
        %2899 = vmatpush1.msra.mxu0 0.0
        %2900 = vmatprep.subr.mxu0 0.0
        %2901 = vmatpush1.msra.mxu0 0.0
        %2902 = vmatprep.subr.mxu0 0.0
        %2903 = vmatpush1.msra.mxu0 0.0
        %2904 = vmatprep.subr.mxu0 0.0
        %2905 = vmatpush1.msra.mxu0 0.0
        %2906 = vmatprep.subr.mxu0 0.0
        %2907 = vmatpush1.msra.mxu0 0.0
        %2908 = vmatprep.subr.mxu0 0.0
        %2909 = vmatpush1.msra.mxu0 0.0
        %2910 = vmatprep.subr.mxu0 0.0
        %2911 = vmatpush1.msra.mxu0 0.0
        %2912 = vmatprep.subr.mxu0 0.0
        %2913 = vmatpush1.msra.mxu0 0.0
        %2914 = vmatprep.mubr.f32.mxu0 0.0
        %2915 = vmatmul.mubr.f32.gmra.mrb[0].mxu0 %v2779
        %v2916 = vpop.f32.mrb[0].mxu0
        %v2917 = vadd.f32 0.0, %v2916
        %v2918 = vpop.f32.mrb[0].mxu0
        %2919 = vmatprep.mubr.f32.mxu0 0.0
        %2920 = vmatmul.mubr.f32.gmra.mrb[0].mxu0 %v2782
        %v2921 = vpop.f32.mrb[0].mxu0
        %v2922 = vadd.f32 0.0, %v2921
        %v2923 = vpop.f32.mrb[0].mxu0
        %2924 = vmatprep.mubr.f32.mxu0 0.0
        %2925 = vmatmul.mubr.f32.gmra.mrb[0].mxu0 %v2785
        %v2926 = vpop.f32.mrb[0].mxu0
        %v2927 = vadd.f32 0.0, %v2926
        %v2928 = vpop.f32.mrb[0].mxu0
        %2929 = vmatprep.mubr.f32.mxu0 0.0
        %2930 = vmatmul.mubr.f32.gmra.mrb[0].mxu0 %v2788
        %v2931 = vpop.f32.mrb[0].mxu0
        %v2932 = vadd.f32 0.0, %v2931
        %v2933 = vpop.f32.mrb[0].mxu0
        %2934 = vmatprep.mubr.f32.mxu0 0.0
        %2935 = vmatmul.mubr.f32.gmra.mrb[0].mxu0 %v2791
        %v2936 = vpop.f32.mrb[0].mxu0
        %v2937 = vadd.f32 0.0, %v2936
        %v2938 = vpop.f32.mrb[0].mxu0
        %2939 = vmatprep.mubr.f32.mxu0 0.0
        %2940 = vmatmul.mubr.f32.gmra.mrb[0].mxu0 %v2794
        %v2941 = vpop.f32.mrb[0].mxu0
        %v2942 = vadd.f32 0.0, %v2941
        %v2943 = vpop.f32.mrb[0].mxu0
        %2944 = vmatprep.mubr.f32.mxu0 0.0
        %2945 = vmatmul.mubr.f32.gmra.mrb[0].mxu0 %v2797
        %v2946 = vpop.f32.mrb[0].mxu0
        %v2947 = vadd.f32 0.0, %v2946
        %v2948 = vpop.f32.mrb[0].mxu0
        %2949 = vmatprep.mubr.f32.mxu0 0.0
        %2950 = vmatmul.mubr.f32.gmra.mrb[0].mxu0 %v2800
        %v2951 = vpop.f32.mrb[0].mxu0
        %v2952 = vadd.f32 0.0, %v2951
        %v2953 = vpop.f32.mrb[0].mxu0
        %2954 = vmatprep.mubr.f32.mxu0 0.0
        %2955 = vmatmul.mubr.f32.gmra.mrb[0].mxu0 %v2803
        %v2956 = vpop.f32.mrb[0].mxu0
        %v2957 = vadd.f32 0.0, %v2956
        %v2958 = vpop.f32.mrb[0].mxu0
        %2959 = vmatprep.mubr.f32.mxu0 0.0
        %2960 = vmatmul.mubr.f32.gmra.mrb[0].mxu0 %v2806
        %v2961 = vpop.f32.mrb[0].mxu0
        %v2962 = vadd.f32 0.0, %v2961
        %v2963 = vpop.f32.mrb[0].mxu0
        %2964 = vmatprep.mubr.f32.mxu0 0.0
        %2965 = vmatmul.mubr.f32.gmra.mrb[0].mxu0 %v2809
        %v2966 = vpop.f32.mrb[0].mxu0
        %v2967 = vadd.f32 0.0, %v2966
        %v2968 = vpop.f32.mrb[0].mxu0
        %2969 = vmatprep.mubr.f32.mxu0 0.0
        %2970 = vmatmul.mubr.f32.gmra.mrb[0].mxu0 %v2812
        %v2971 = vpop.f32.mrb[0].mxu0
        %v2972 = vadd.f32 0.0, %v2971
        %v2973 = vpop.f32.mrb[0].mxu0
        %2974 = vmatprep.mubr.f32.mxu0 0.0
        %2975 = vmatmul.mubr.f32.gmra.mrb[0].mxu0 %v2815
        %v2976 = vpop.f32.mrb[0].mxu0
        %v2977 = vadd.f32 0.0, %v2976
        %v2978 = vpop.f32.mrb[0].mxu0
        %2979 = vmatprep.mubr.f32.mxu0 0.0
        %2980 = vmatmul.mubr.f32.gmra.mrb[0].mxu0 %v2818
        %v2981 = vpop.f32.mrb[0].mxu0
        %v2982 = vadd.f32 0.0, %v2981
        %v2983 = vpop.f32.mrb[0].mxu0
        %2984 = vmatprep.mubr.f32.mxu0 0.0
        %2985 = vmatmul.mubr.f32.gmra.mrb[0].mxu0 %v2821
        %v2986 = vpop.f32.mrb[0].mxu0
        %v2987 = vadd.f32 0.0, %v2986
        %v2988 = vpop.f32.mrb[0].mxu0
        %2989 = vmatprep.mubr.f32.mxu0 0.0
        %2990 = vmatmul.mubr.f32.gmra.mrb[0].mxu0 %v2824
        %v2991 = vpop.f32.mrb[0].mxu0
        %v2992 = vadd.f32 0.0, %v2991
        %v2993 = vpop.f32.mrb[0].mxu0
        %2994 = vmatprep.mubr.f32.mxu0 0.0
        %2995 = vmatmul.mubr.f32.gmra.mrb[0].mxu0 %v2827
        %v2996 = vpop.f32.mrb[0].mxu0
        %v2997 = vadd.f32 0.0, %v2996
        %v2998 = vpop.f32.mrb[0].mxu0
        %2999 = vmatprep.mubr.f32.mxu0 0.0
        %3000 = vmatmul.mubr.f32.gmra.mrb[0].mxu0 %v2830
        %v3001 = vpop.f32.mrb[0].mxu0
        %v3002 = vadd.f32 0.0, %v3001
        %v3003 = vpop.f32.mrb[0].mxu0
        %3004 = vmatprep.mubr.f32.mxu0 0.0
        %3005 = vmatmul.mubr.f32.gmra.mrb[0].mxu0 %v2833
        %v3006 = vpop.f32.mrb[0].mxu0
        %v3007 = vadd.f32 0.0, %v3006
        %v3008 = vpop.f32.mrb[0].mxu0
        %3009 = vmatprep.mubr.f32.mxu0 0.0
        %3010 = vmatmul.mubr.f32.gmra.mrb[0].mxu0 %v2836
        %v3011 = vpop.f32.mrb[0].mxu0
        %v3012 = vadd.f32 0.0, %v3011
        %v3013 = vpop.f32.mrb[0].mxu0
        %3014 = vmatprep.mubr.f32.mxu0 0.0
        %3015 = vmatmul.mubr.f32.gmra.mrb[0].mxu0 %v2839
        %v3016 = vpop.f32.mrb[0].mxu0
        %v3017 = vadd.f32 0.0, %v3016
        %v3018 = vpop.f32.mrb[0].mxu0
        %3019 = vmatprep.mubr.f32.mxu0 0.0
        %3020 = vmatmul.mubr.f32.gmra.mrb[0].mxu0 %v2842
        %v3021 = vpop.f32.mrb[0].mxu0
        %v3022 = vadd.f32 0.0, %v3021
        %v3023 = vpop.f32.mrb[0].mxu0
        %3024 = vmatprep.mubr.f32.mxu0 0.0
        %3025 = vmatmul.mubr.f32.gmra.mrb[0].mxu0 %v2845
        %v3026 = vpop.f32.mrb[0].mxu0
        %v3027 = vadd.f32 0.0, %v3026
        %v3028 = vpop.f32.mrb[0].mxu0
        %3029 = vmatprep.mubr.f32.mxu0 0.0
        %3030 = vmatmul.mubr.f32.gmra.mrb[0].mxu0 %v2848
        %v3031 = vpop.f32.mrb[0].mxu0
        %v3032 = vadd.f32 0.0, %v3031
        %v3033 = vpop.f32.mrb[0].mxu0
        %3034 = vdwg.mxu0
        %v3036 = vsel %vm2620, %v2670, 0
        %v3039 = vsel %vm2620, %v2672, 0
        %v3042 = vsel %vm2620, %v2674, 0
        %v3045 = vsel %vm2620, %v2676, 0
        %v3048 = vsel %vm2620, %v2678, 0
        %v3051 = vsel %vm2620, %v2680, 0
        %v3054 = vsel %vm2620, %v2682, 0
        %v3057 = vsel %vm2620, %v2684, 0
        %v3060 = vsel %vm2620, %v2686, 0
        %v3063 = vsel %vm2620, %v2688, 0
        %v3066 = vsel %vm2620, %v2690, 0
        %v3069 = vsel %vm2620, %v2692, 0
        %v3072 = vsel %vm2620, %v2694, 0
        %v3075 = vsel %vm2620, %v2696, 0
        %v3078 = vsel %vm2620, %v2698, 0
        %v3081 = vsel %vm2620, %v2700, 0
        %v3084 = vsel %vm2620, %v2702, 0
        %v3087 = vsel %vm2620, %v2704, 0
        %v3090 = vsel %vm2620, %v2706, 0
        %v3093 = vsel %vm2620, %v2708, 0
        %v3096 = vsel %vm2620, %v2710, 0
        %v3099 = vsel %vm2620, %v2712, 0
        %v3102 = vsel %vm2620, %v2714, 0
        %v3105 = vsel %vm2620, %v2716, 0
        %3107 = vmatprep.subr.mxu0 0.0
        %3108 = vmatpush1.msra.mxu0 %v2717
        %3109 = vmatprep.subr.mxu0 0.0
        %3110 = vmatpush1.msra.mxu0 %v2718
        %3111 = vmatprep.subr.mxu0 0.0
        %3112 = vmatpush1.msra.mxu0 %v2719
        %3113 = vmatprep.subr.mxu0 0.0
        %3114 = vmatpush1.msra.mxu0 %v2720
        %3115 = vmatprep.subr.mxu0 0.0
        %3116 = vmatpush1.msra.mxu0 %v2721
        %3117 = vmatprep.subr.mxu0 0.0
        %3118 = vmatpush1.msra.mxu0 %v2722
        %3119 = vmatprep.subr.mxu0 0.0
        %3120 = vmatpush1.msra.mxu0 0.0
        %3121 = vmatprep.subr.mxu0 0.0
        %3122 = vmatpush1.msra.mxu0 0.0
        %3123 = vmatprep.subr.mxu0 0.0
        %3124 = vmatpush1.msra.mxu0 0.0
        %3125 = vmatprep.subr.mxu0 0.0
        %3126 = vmatpush1.msra.mxu0 0.0
        %3127 = vmatprep.subr.mxu0 0.0
        %3128 = vmatpush1.msra.mxu0 0.0
        %3129 = vmatprep.subr.mxu0 0.0
        %3130 = vmatpush1.msra.mxu0 0.0
        %3131 = vmatprep.subr.mxu0 0.0
        %3132 = vmatpush1.msra.mxu0 0.0
        %3133 = vmatprep.subr.mxu0 0.0
        %3134 = vmatpush1.msra.mxu0 0.0
        %3135 = vmatprep.subr.mxu0 0.0
        %3136 = vmatpush1.msra.mxu0 0.0
        %3137 = vmatprep.subr.mxu0 0.0
        %3138 = vmatpush1.msra.mxu0 0.0
        %3139 = vmatprep.subr.mxu0 0.0
        %3140 = vmatpush1.msra.mxu0 0.0
        %3141 = vmatprep.subr.mxu0 0.0
        %3142 = vmatpush1.msra.mxu0 0.0
        %3143 = vmatprep.subr.mxu0 0.0
        %3144 = vmatpush1.msra.mxu0 0.0
        %3145 = vmatprep.subr.mxu0 0.0
        %3146 = vmatpush1.msra.mxu0 0.0
        %3147 = vmatprep.subr.mxu0 0.0
        %3148 = vmatpush1.msra.mxu0 0.0
        %3149 = vmatprep.subr.mxu0 0.0
        %3150 = vmatpush1.msra.mxu0 0.0
        %3151 = vmatprep.subr.mxu0 0.0
        %3152 = vmatpush1.msra.mxu0 0.0
        %3153 = vmatprep.subr.mxu0 0.0
        %3154 = vmatpush1.msra.mxu0 0.0
        %3155 = vmatprep.subr.mxu0 0.0
        %3156 = vmatpush1.msra.mxu0 0.0
        %3157 = vmatprep.subr.mxu0 0.0
        %3158 = vmatpush1.msra.mxu0 0.0
        %3159 = vmatprep.subr.mxu0 0.0
        %3160 = vmatpush1.msra.mxu0 0.0
        %3161 = vmatprep.subr.mxu0 0.0
        %3162 = vmatpush1.msra.mxu0 0.0
        %3163 = vmatprep.subr.mxu0 0.0
        %3164 = vmatpush1.msra.mxu0 0.0
        %3165 = vmatprep.subr.mxu0 0.0
        %3166 = vmatpush1.msra.mxu0 0.0
        %3167 = vmatprep.subr.mxu0 0.0
        %3168 = vmatpush1.msra.mxu0 0.0
        %3169 = vmatprep.subr.mxu0 0.0
        %3170 = vmatpush1.msra.mxu0 0.0
        %3171 = vmatprep.mubr.f32.mxu0 0.0
        %3172 = vmatmul.mubr.f32.gmra.mrb[0].mxu0 %v3036
        %v3173 = vpop.f32.mrb[0].mxu0
        %v3174 = vadd.f32 %v2917, %v3173
        %v3175 = vpop.f32.mrb[0].mxu0
        %3176 = vmatprep.mubr.f32.mxu0 0.0
        %3177 = vmatmul.mubr.f32.gmra.mrb[0].mxu0 %v3039
        %v3178 = vpop.f32.mrb[0].mxu0
        %v3179 = vadd.f32 %v2922, %v3178
        %v3180 = vpop.f32.mrb[0].mxu0
        %3181 = vmatprep.mubr.f32.mxu0 0.0
        %3182 = vmatmul.mubr.f32.gmra.mrb[0].mxu0 %v3042
        %v3183 = vpop.f32.mrb[0].mxu0
        %v3184 = vadd.f32 %v2927, %v3183
        %v3185 = vpop.f32.mrb[0].mxu0
        %3186 = vmatprep.mubr.f32.mxu0 0.0
        %3187 = vmatmul.mubr.f32.gmra.mrb[0].mxu0 %v3045
        %v3188 = vpop.f32.mrb[0].mxu0
        %v3189 = vadd.f32 %v2932, %v3188
        %v3190 = vpop.f32.mrb[0].mxu0
        %3191 = vmatprep.mubr.f32.mxu0 0.0
        %3192 = vmatmul.mubr.f32.gmra.mrb[0].mxu0 %v3048
        %v3193 = vpop.f32.mrb[0].mxu0
        %v3194 = vadd.f32 %v2937, %v3193
        %v3195 = vpop.f32.mrb[0].mxu0
        %3196 = vmatprep.mubr.f32.mxu0 0.0
        %3197 = vmatmul.mubr.f32.gmra.mrb[0].mxu0 %v3051
        %v3198 = vpop.f32.mrb[0].mxu0
        %v3199 = vadd.f32 %v2942, %v3198
        %v3200 = vpop.f32.mrb[0].mxu0
        %3201 = vmatprep.mubr.f32.mxu0 0.0
        %3202 = vmatmul.mubr.f32.gmra.mrb[0].mxu0 %v3054
        %v3203 = vpop.f32.mrb[0].mxu0
        %v3204 = vadd.f32 %v2947, %v3203
        %v3205 = vpop.f32.mrb[0].mxu0
        %3206 = vmatprep.mubr.f32.mxu0 0.0
        %3207 = vmatmul.mubr.f32.gmra.mrb[0].mxu0 %v3057
        %v3208 = vpop.f32.mrb[0].mxu0
        %v3209 = vadd.f32 %v2952, %v3208
        %v3210 = vpop.f32.mrb[0].mxu0
        %3211 = vmatprep.mubr.f32.mxu0 0.0
        %3212 = vmatmul.mubr.f32.gmra.mrb[0].mxu0 %v3060
        %v3213 = vpop.f32.mrb[0].mxu0
        %v3214 = vadd.f32 %v2957, %v3213
        %v3215 = vpop.f32.mrb[0].mxu0
        %3216 = vmatprep.mubr.f32.mxu0 0.0
        %3217 = vmatmul.mubr.f32.gmra.mrb[0].mxu0 %v3063
        %v3218 = vpop.f32.mrb[0].mxu0
        %v3219 = vadd.f32 %v2962, %v3218
        %v3220 = vpop.f32.mrb[0].mxu0
        %3221 = vmatprep.mubr.f32.mxu0 0.0
        %3222 = vmatmul.mubr.f32.gmra.mrb[0].mxu0 %v3066
        %v3223 = vpop.f32.mrb[0].mxu0
        %v3224 = vadd.f32 %v2967, %v3223
        %v3225 = vpop.f32.mrb[0].mxu0
        %3226 = vmatprep.mubr.f32.mxu0 0.0
        %3227 = vmatmul.mubr.f32.gmra.mrb[0].mxu0 %v3069
        %v3228 = vpop.f32.mrb[0].mxu0
        %v3229 = vadd.f32 %v2972, %v3228
        %v3230 = vpop.f32.mrb[0].mxu0
        %3231 = vmatprep.mubr.f32.mxu0 0.0
        %3232 = vmatmul.mubr.f32.gmra.mrb[0].mxu0 %v3072
        %v3233 = vpop.f32.mrb[0].mxu0
        %v3234 = vadd.f32 %v2977, %v3233
        %v3235 = vpop.f32.mrb[0].mxu0
        %3236 = vmatprep.mubr.f32.mxu0 0.0
        %3237 = vmatmul.mubr.f32.gmra.mrb[0].mxu0 %v3075
        %v3238 = vpop.f32.mrb[0].mxu0
        %v3239 = vadd.f32 %v2982, %v3238
        %v3240 = vpop.f32.mrb[0].mxu0
        %3241 = vmatprep.mubr.f32.mxu0 0.0
        %3242 = vmatmul.mubr.f32.gmra.mrb[0].mxu0 %v3078
        %v3243 = vpop.f32.mrb[0].mxu0
        %v3244 = vadd.f32 %v2987, %v3243
        %v3245 = vpop.f32.mrb[0].mxu0
        %3246 = vmatprep.mubr.f32.mxu0 0.0
        %3247 = vmatmul.mubr.f32.gmra.mrb[0].mxu0 %v3081
        %v3248 = vpop.f32.mrb[0].mxu0
        %v3249 = vadd.f32 %v2992, %v3248
        %v3250 = vpop.f32.mrb[0].mxu0
        %3251 = vmatprep.mubr.f32.mxu0 0.0
        %3252 = vmatmul.mubr.f32.gmra.mrb[0].mxu0 %v3084
        %v3253 = vpop.f32.mrb[0].mxu0
        %v3254 = vadd.f32 %v2997, %v3253
        %v3255 = vpop.f32.mrb[0].mxu0
        %3256 = vmatprep.mubr.f32.mxu0 0.0
        %3257 = vmatmul.mubr.f32.gmra.mrb[0].mxu0 %v3087
        %v3258 = vpop.f32.mrb[0].mxu0
        %v3259 = vadd.f32 %v3002, %v3258
        %v3260 = vpop.f32.mrb[0].mxu0
        %3261 = vmatprep.mubr.f32.mxu0 0.0
        %3262 = vmatmul.mubr.f32.gmra.mrb[0].mxu0 %v3090
        %v3263 = vpop.f32.mrb[0].mxu0
        %v3264 = vadd.f32 %v3007, %v3263
        %v3265 = vpop.f32.mrb[0].mxu0
        %3266 = vmatprep.mubr.f32.mxu0 0.0
        %3267 = vmatmul.mubr.f32.gmra.mrb[0].mxu0 %v3093
        %v3268 = vpop.f32.mrb[0].mxu0
        %v3269 = vadd.f32 %v3012, %v3268
        %v3270 = vpop.f32.mrb[0].mxu0
        %3271 = vmatprep.mubr.f32.mxu0 0.0
        %3272 = vmatmul.mubr.f32.gmra.mrb[0].mxu0 %v3096
        %v3273 = vpop.f32.mrb[0].mxu0
        %v3274 = vadd.f32 %v3017, %v3273
        %v3275 = vpop.f32.mrb[0].mxu0
        %3276 = vmatprep.mubr.f32.mxu0 0.0
        %3277 = vmatmul.mubr.f32.gmra.mrb[0].mxu0 %v3099
        %v3278 = vpop.f32.mrb[0].mxu0
        %v3279 = vadd.f32 %v3022, %v3278
        %v3280 = vpop.f32.mrb[0].mxu0
        %3281 = vmatprep.mubr.f32.mxu0 0.0
        %3282 = vmatmul.mubr.f32.gmra.mrb[0].mxu0 %v3102
        %v3283 = vpop.f32.mrb[0].mxu0
        %v3284 = vadd.f32 %v3027, %v3283
        %v3285 = vpop.f32.mrb[0].mxu0
        %3286 = vmatprep.mubr.f32.mxu0 0.0
        %3287 = vmatmul.mubr.f32.gmra.mrb[0].mxu0 %v3105
        %v3288 = vpop.f32.mrb[0].mxu0
        %v3289 = vadd.f32 %v3032, %v3288
        %v3290 = vpop.f32.mrb[0].mxu0
        %3291 = vdwg.mxu0
        %s3292 = scalar_lea.vmem [#allocation2], 2
        %v3293 = vld [vmem:[%s3292] ss:$2 sm:$0xff]
        %s3294 = scalar_lea.vmem [#allocation2], 18
        %v3295 = vld [vmem:[%s3294] ss:$2 sm:$0xff]
        %s3296 = scalar_lea.vmem [#allocation2], 34
        %v3297 = vld [vmem:[%s3296] ss:$2 sm:$0xff]
        %s3298 = scalar_lea.vmem [#allocation2], 50
        %v3299 = vld [vmem:[%s3298] ss:$2 sm:$0xff]
        %s3300 = scalar_lea.vmem [#allocation2], 66
        %v3301 = vld [vmem:[%s3300] ss:$2 sm:$0xff]
        %s3302 = scalar_lea.vmem [#allocation2], 82
        %v3303 = vld [vmem:[%s3302] ss:$2 sm:$0xff]
        %s3304 = scalar_lea.vmem [#allocation2], 98
        %v3305 = vld [vmem:[%s3304] ss:$2 sm:$0xff]
        %s3306 = scalar_lea.vmem [#allocation2], 114
        %v3307 = vld [vmem:[%s3306] ss:$2 sm:$0xff]
        %s3308 = scalar_lea.vmem [#allocation2], 130
        %v3309 = vld [vmem:[%s3308] ss:$2 sm:$0xff]
        %s3310 = scalar_lea.vmem [#allocation2], 146
        %v3311 = vld [vmem:[%s3310] ss:$2 sm:$0xff]
        %s3312 = scalar_lea.vmem [#allocation2], 162
        %v3313 = vld [vmem:[%s3312] ss:$2 sm:$0xff]
        %s3314 = scalar_lea.vmem [#allocation2], 178
        %v3315 = vld [vmem:[%s3314] ss:$2 sm:$0xff]
        %s3316 = scalar_lea.vmem [#allocation2], 194
        %v3317 = vld [vmem:[%s3316] ss:$2 sm:$0xff]
        %s3318 = scalar_lea.vmem [#allocation2], 210
        %v3319 = vld [vmem:[%s3318] ss:$2 sm:$0xff]
        %s3320 = scalar_lea.vmem [#allocation2], 226
        %v3321 = vld [vmem:[%s3320] ss:$2 sm:$0xff]
        %s3322 = scalar_lea.vmem [#allocation2], 242
        %v3323 = vld [vmem:[%s3322] ss:$2 sm:$0xff]
        %s3324 = scalar_lea.vmem [#allocation2], 258
        %v3325 = vld [vmem:[%s3324] ss:$2 sm:$0xff]
        %s3326 = scalar_lea.vmem [#allocation2], 274
        %v3327 = vld [vmem:[%s3326] ss:$2 sm:$0xff]
        %s3328 = scalar_lea.vmem [#allocation2], 290
        %v3329 = vld [vmem:[%s3328] ss:$2 sm:$0xff]
        %s3330 = scalar_lea.vmem [#allocation2], 306
        %v3331 = vld [vmem:[%s3330] ss:$2 sm:$0xff]
        %s3332 = scalar_lea.vmem [#allocation2], 322
        %v3333 = vld [vmem:[%s3332] ss:$2 sm:$0xff]
        %s3334 = scalar_lea.vmem [#allocation2], 338
        %v3335 = vld [vmem:[%s3334] ss:$2 sm:$0xff]
        %s3336 = scalar_lea.vmem [#allocation2], 354
        %v3337 = vld [vmem:[%s3336] ss:$2 sm:$0xff]
        %s3338 = scalar_lea.vmem [#allocation2], 370
        %v3339 = vld [vmem:[%s3338] ss:$2 sm:$0xff]
        %s3340 = scalar_lea.vmem %s2, 96
        %v3341 = vld [vmem:[%s3340] sm:$0xff]
        %v3342 = vld [vmem:[%s3340 + $0x8] sm:$0xff]
        %v3343 = vld [vmem:[%s3340 + $0x10] sm:$0xff]
        %v3344 = vld [vmem:[%s3340 + $0x18] sm:$0xff]
        %v3345 = vld [vmem:[%s3340 + $0x20] sm:$0xff]
        %v3346 = vld [vmem:[%s3340 + $0x28] sm:$0xff]
        %v3348 = vsel %vm2620, %v3293, 0
        %v3351 = vsel %vm2620, %v3295, 0
        %v3354 = vsel %vm2620, %v3297, 0
        %v3357 = vsel %vm2620, %v3299, 0
        %v3360 = vsel %vm2620, %v3301, 0
        %v3363 = vsel %vm2620, %v3303, 0
        %v3366 = vsel %vm2620, %v3305, 0
        %v3369 = vsel %vm2620, %v3307, 0
        %v3372 = vsel %vm2620, %v3309, 0
        %v3375 = vsel %vm2620, %v3311, 0
        %v3378 = vsel %vm2620, %v3313, 0
        %v3381 = vsel %vm2620, %v3315, 0
        %v3384 = vsel %vm2620, %v3317, 0
        %v3387 = vsel %vm2620, %v3319, 0
        %v3390 = vsel %vm2620, %v3321, 0
        %v3393 = vsel %vm2620, %v3323, 0
        %v3396 = vsel %vm2620, %v3325, 0
        %v3399 = vsel %vm2620, %v3327, 0
        %v3402 = vsel %vm2620, %v3329, 0
        %v3405 = vsel %vm2620, %v3331, 0
        %v3408 = vsel %vm2620, %v3333, 0
        %v3411 = vsel %vm2620, %v3335, 0
        %v3414 = vsel %vm2620, %v3337, 0
        %v3417 = vsel %vm2620, %v3339, 0
        %3419 = vmatprep.subr.mxu0 0.0
        %3420 = vmatpush1.msra.mxu0 %v3341
        %3421 = vmatprep.subr.mxu0 0.0
        %3422 = vmatpush1.msra.mxu0 %v3342
        %3423 = vmatprep.subr.mxu0 0.0
        %3424 = vmatpush1.msra.mxu0 %v3343
        %3425 = vmatprep.subr.mxu0 0.0
        %3426 = vmatpush1.msra.mxu0 %v3344
        %3427 = vmatprep.subr.mxu0 0.0
        %3428 = vmatpush1.msra.mxu0 %v3345
        %3429 = vmatprep.subr.mxu0 0.0
        %3430 = vmatpush1.msra.mxu0 %v3346
        %3431 = vmatprep.subr.mxu0 0.0
        %3432 = vmatpush1.msra.mxu0 0.0
        %3433 = vmatprep.subr.mxu0 0.0
        %3434 = vmatpush1.msra.mxu0 0.0
        %3435 = vmatprep.subr.mxu0 0.0
        %3436 = vmatpush1.msra.mxu0 0.0
        %3437 = vmatprep.subr.mxu0 0.0
        %3438 = vmatpush1.msra.mxu0 0.0
        %3439 = vmatprep.subr.mxu0 0.0
        %3440 = vmatpush1.msra.mxu0 0.0
        %3441 = vmatprep.subr.mxu0 0.0
        %3442 = vmatpush1.msra.mxu0 0.0
        %3443 = vmatprep.subr.mxu0 0.0
        %3444 = vmatpush1.msra.mxu0 0.0
        %3445 = vmatprep.subr.mxu0 0.0
        %3446 = vmatpush1.msra.mxu0 0.0
        %3447 = vmatprep.subr.mxu0 0.0
        %3448 = vmatpush1.msra.mxu0 0.0
        %3449 = vmatprep.subr.mxu0 0.0
        %3450 = vmatpush1.msra.mxu0 0.0
        %3451 = vmatprep.subr.mxu0 0.0
        %3452 = vmatpush1.msra.mxu0 0.0
        %3453 = vmatprep.subr.mxu0 0.0
        %3454 = vmatpush1.msra.mxu0 0.0
        %3455 = vmatprep.subr.mxu0 0.0
        %3456 = vmatpush1.msra.mxu0 0.0
        %3457 = vmatprep.subr.mxu0 0.0
        %3458 = vmatpush1.msra.mxu0 0.0
        %3459 = vmatprep.subr.mxu0 0.0
        %3460 = vmatpush1.msra.mxu0 0.0
        %3461 = vmatprep.subr.mxu0 0.0
        %3462 = vmatpush1.msra.mxu0 0.0
        %3463 = vmatprep.subr.mxu0 0.0
        %3464 = vmatpush1.msra.mxu0 0.0
        %3465 = vmatprep.subr.mxu0 0.0
        %3466 = vmatpush1.msra.mxu0 0.0
        %3467 = vmatprep.subr.mxu0 0.0
        %3468 = vmatpush1.msra.mxu0 0.0
        %3469 = vmatprep.subr.mxu0 0.0
        %3470 = vmatpush1.msra.mxu0 0.0
        %3471 = vmatprep.subr.mxu0 0.0
        %3472 = vmatpush1.msra.mxu0 0.0
        %3473 = vmatprep.subr.mxu0 0.0
        %3474 = vmatpush1.msra.mxu0 0.0
        %3475 = vmatprep.subr.mxu0 0.0
        %3476 = vmatpush1.msra.mxu0 0.0
        %3477 = vmatprep.subr.mxu0 0.0
        %3478 = vmatpush1.msra.mxu0 0.0
        %3479 = vmatprep.subr.mxu0 0.0
        %3480 = vmatpush1.msra.mxu0 0.0
        %3481 = vmatprep.subr.mxu0 0.0
        %3482 = vmatpush1.msra.mxu0 0.0
        %3483 = vmatprep.mubr.f32.mxu0 0.0
        %3484 = vmatmul.mubr.f32.gmra.mrb[0].mxu0 %v3348
        %v3485 = vpop.f32.mrb[0].mxu0
        %v3486 = vadd.f32 0.0, %v3485
        %v3487 = vpop.f32.mrb[0].mxu0
        %3488 = vmatprep.mubr.f32.mxu0 0.0
        %3489 = vmatmul.mubr.f32.gmra.mrb[0].mxu0 %v3351
        %v3490 = vpop.f32.mrb[0].mxu0
        %v3491 = vadd.f32 0.0, %v3490
        %v3492 = vpop.f32.mrb[0].mxu0
        %3493 = vmatprep.mubr.f32.mxu0 0.0
        %3494 = vmatmul.mubr.f32.gmra.mrb[0].mxu0 %v3354
        %v3495 = vpop.f32.mrb[0].mxu0
        %v3496 = vadd.f32 0.0, %v3495
        %v3497 = vpop.f32.mrb[0].mxu0
        %3498 = vmatprep.mubr.f32.mxu0 0.0
        %3499 = vmatmul.mubr.f32.gmra.mrb[0].mxu0 %v3357
        %v3500 = vpop.f32.mrb[0].mxu0
        %v3501 = vadd.f32 0.0, %v3500
        %v3502 = vpop.f32.mrb[0].mxu0
        %3503 = vmatprep.mubr.f32.mxu0 0.0
        %3504 = vmatmul.mubr.f32.gmra.mrb[0].mxu0 %v3360
        %v3505 = vpop.f32.mrb[0].mxu0
        %v3506 = vadd.f32 0.0, %v3505
        %v3507 = vpop.f32.mrb[0].mxu0
        %3508 = vmatprep.mubr.f32.mxu0 0.0
        %3509 = vmatmul.mubr.f32.gmra.mrb[0].mxu0 %v3363
        %v3510 = vpop.f32.mrb[0].mxu0
        %v3511 = vadd.f32 0.0, %v3510
        %v3512 = vpop.f32.mrb[0].mxu0
        %3513 = vmatprep.mubr.f32.mxu0 0.0
        %3514 = vmatmul.mubr.f32.gmra.mrb[0].mxu0 %v3366
        %v3515 = vpop.f32.mrb[0].mxu0
        %v3516 = vadd.f32 0.0, %v3515
        %v3517 = vpop.f32.mrb[0].mxu0
        %3518 = vmatprep.mubr.f32.mxu0 0.0
        %3519 = vmatmul.mubr.f32.gmra.mrb[0].mxu0 %v3369
        %v3520 = vpop.f32.mrb[0].mxu0
        %v3521 = vadd.f32 0.0, %v3520
        %v3522 = vpop.f32.mrb[0].mxu0
        %3523 = vmatprep.mubr.f32.mxu0 0.0
        %3524 = vmatmul.mubr.f32.gmra.mrb[0].mxu0 %v3372
        %v3525 = vpop.f32.mrb[0].mxu0
        %v3526 = vadd.f32 0.0, %v3525
        %v3527 = vpop.f32.mrb[0].mxu0
        %3528 = vmatprep.mubr.f32.mxu0 0.0
        %3529 = vmatmul.mubr.f32.gmra.mrb[0].mxu0 %v3375
        %v3530 = vpop.f32.mrb[0].mxu0
        %v3531 = vadd.f32 0.0, %v3530
        %v3532 = vpop.f32.mrb[0].mxu0
        %3533 = vmatprep.mubr.f32.mxu0 0.0
        %3534 = vmatmul.mubr.f32.gmra.mrb[0].mxu0 %v3378
        %v3535 = vpop.f32.mrb[0].mxu0
        %v3536 = vadd.f32 0.0, %v3535
        %v3537 = vpop.f32.mrb[0].mxu0
        %3538 = vmatprep.mubr.f32.mxu0 0.0
        %3539 = vmatmul.mubr.f32.gmra.mrb[0].mxu0 %v3381
        %v3540 = vpop.f32.mrb[0].mxu0
        %v3541 = vadd.f32 0.0, %v3540
        %v3542 = vpop.f32.mrb[0].mxu0
        %3543 = vmatprep.mubr.f32.mxu0 0.0
        %3544 = vmatmul.mubr.f32.gmra.mrb[0].mxu0 %v3384
        %v3545 = vpop.f32.mrb[0].mxu0
        %v3546 = vadd.f32 0.0, %v3545
        %v3547 = vpop.f32.mrb[0].mxu0
        %3548 = vmatprep.mubr.f32.mxu0 0.0
        %3549 = vmatmul.mubr.f32.gmra.mrb[0].mxu0 %v3387
        %v3550 = vpop.f32.mrb[0].mxu0
        %v3551 = vadd.f32 0.0, %v3550
        %v3552 = vpop.f32.mrb[0].mxu0
        %3553 = vmatprep.mubr.f32.mxu0 0.0
        %3554 = vmatmul.mubr.f32.gmra.mrb[0].mxu0 %v3390
        %v3555 = vpop.f32.mrb[0].mxu0
        %v3556 = vadd.f32 0.0, %v3555
        %v3557 = vpop.f32.mrb[0].mxu0
        %3558 = vmatprep.mubr.f32.mxu0 0.0
        %3559 = vmatmul.mubr.f32.gmra.mrb[0].mxu0 %v3393
        %v3560 = vpop.f32.mrb[0].mxu0
        %v3561 = vadd.f32 0.0, %v3560
        %v3562 = vpop.f32.mrb[0].mxu0
        %3563 = vmatprep.mubr.f32.mxu0 0.0
        %3564 = vmatmul.mubr.f32.gmra.mrb[0].mxu0 %v3396
        %v3565 = vpop.f32.mrb[0].mxu0
        %v3566 = vadd.f32 0.0, %v3565
        %v3567 = vpop.f32.mrb[0].mxu0
        %3568 = vmatprep.mubr.f32.mxu0 0.0
        %3569 = vmatmul.mubr.f32.gmra.mrb[0].mxu0 %v3399
        %v3570 = vpop.f32.mrb[0].mxu0
        %v3571 = vadd.f32 0.0, %v3570
        %v3572 = vpop.f32.mrb[0].mxu0
        %3573 = vmatprep.mubr.f32.mxu0 0.0
        %3574 = vmatmul.mubr.f32.gmra.mrb[0].mxu0 %v3402
        %v3575 = vpop.f32.mrb[0].mxu0
        %v3576 = vadd.f32 0.0, %v3575
        %v3577 = vpop.f32.mrb[0].mxu0
        %3578 = vmatprep.mubr.f32.mxu0 0.0
        %3579 = vmatmul.mubr.f32.gmra.mrb[0].mxu0 %v3405
        %v3580 = vpop.f32.mrb[0].mxu0
        %v3581 = vadd.f32 0.0, %v3580
        %v3582 = vpop.f32.mrb[0].mxu0
        %3583 = vmatprep.mubr.f32.mxu0 0.0
        %3584 = vmatmul.mubr.f32.gmra.mrb[0].mxu0 %v3408
        %v3585 = vpop.f32.mrb[0].mxu0
        %v3586 = vadd.f32 0.0, %v3585
        %v3587 = vpop.f32.mrb[0].mxu0
        %3588 = vmatprep.mubr.f32.mxu0 0.0
        %3589 = vmatmul.mubr.f32.gmra.mrb[0].mxu0 %v3411
        %v3590 = vpop.f32.mrb[0].mxu0
        %v3591 = vadd.f32 0.0, %v3590
        %v3592 = vpop.f32.mrb[0].mxu0
        %3593 = vmatprep.mubr.f32.mxu0 0.0
        %3594 = vmatmul.mubr.f32.gmra.mrb[0].mxu0 %v3414
        %v3595 = vpop.f32.mrb[0].mxu0
        %v3596 = vadd.f32 0.0, %v3595
        %v3597 = vpop.f32.mrb[0].mxu0
        %3598 = vmatprep.mubr.f32.mxu0 0.0
        %3599 = vmatmul.mubr.f32.gmra.mrb[0].mxu0 %v3417
        %v3600 = vpop.f32.mrb[0].mxu0
        %v3601 = vadd.f32 0.0, %v3600
        %v3602 = vpop.f32.mrb[0].mxu0
        %3603 = vdwg.mxu0
        %v3604 = vadd.f32 %v3174, %v3486
        %v3605 = vadd.f32 %v3179, %v3491
        %v3606 = vadd.f32 %v3184, %v3496
        %v3607 = vadd.f32 %v3189, %v3501
        %v3608 = vadd.f32 %v3194, %v3506
        %v3609 = vadd.f32 %v3199, %v3511
        %v3610 = vadd.f32 %v3204, %v3516
        %v3611 = vadd.f32 %v3209, %v3521
        %v3612 = vadd.f32 %v3214, %v3526
        %v3613 = vadd.f32 %v3219, %v3531
        %v3614 = vadd.f32 %v3224, %v3536
        %v3615 = vadd.f32 %v3229, %v3541
        %v3616 = vadd.f32 %v3234, %v3546
        %v3617 = vadd.f32 %v3239, %v3551
        %v3618 = vadd.f32 %v3244, %v3556
        %v3619 = vadd.f32 %v3249, %v3561
        %v3620 = vadd.f32 %v3254, %v3566
        %v3621 = vadd.f32 %v3259, %v3571
        %v3622 = vadd.f32 %v3264, %v3576
        %v3623 = vadd.f32 %v3269, %v3581
        %v3624 = vadd.f32 %v3274, %v3586
        %v3625 = vadd.f32 %v3279, %v3591
        %v3626 = vadd.f32 %v3284, %v3596
        %v3627 = vadd.f32 %v3289, %v3601
        %s3628 = scalar_lea.vmem [#allocation2], 3
        %v3629 = vld [vmem:[%s3628] ss:$2 sm:$0xff]
        %s3630 = scalar_lea.vmem [#allocation2], 19
        %v3631 = vld [vmem:[%s3630] ss:$2 sm:$0xff]
        %s3632 = scalar_lea.vmem [#allocation2], 35
        %v3633 = vld [vmem:[%s3632] ss:$2 sm:$0xff]
        %s3634 = scalar_lea.vmem [#allocation2], 51
        %v3635 = vld [vmem:[%s3634] ss:$2 sm:$0xff]
        %s3636 = scalar_lea.vmem [#allocation2], 67
        %v3637 = vld [vmem:[%s3636] ss:$2 sm:$0xff]
        %s3638 = scalar_lea.vmem [#allocation2], 83
        %v3639 = vld [vmem:[%s3638] ss:$2 sm:$0xff]
        %s3640 = scalar_lea.vmem [#allocation2], 99
        %v3641 = vld [vmem:[%s3640] ss:$2 sm:$0xff]
        %s3642 = scalar_lea.vmem [#allocation2], 115
        %v3643 = vld [vmem:[%s3642] ss:$2 sm:$0xff]
        %s3644 = scalar_lea.vmem [#allocation2], 131
        %v3645 = vld [vmem:[%s3644] ss:$2 sm:$0xff]
        %s3646 = scalar_lea.vmem [#allocation2], 147
        %v3647 = vld [vmem:[%s3646] ss:$2 sm:$0xff]
        %s3648 = scalar_lea.vmem [#allocation2], 163
        %v3649 = vld [vmem:[%s3648] ss:$2 sm:$0xff]
        %s3650 = scalar_lea.vmem [#allocation2], 179
        %v3651 = vld [vmem:[%s3650] ss:$2 sm:$0xff]
        %s3652 = scalar_lea.vmem [#allocation2], 195
        %v3653 = vld [vmem:[%s3652] ss:$2 sm:$0xff]
        %s3654 = scalar_lea.vmem [#allocation2], 211
        %v3655 = vld [vmem:[%s3654] ss:$2 sm:$0xff]
        %s3656 = scalar_lea.vmem [#allocation2], 227
        %v3657 = vld [vmem:[%s3656] ss:$2 sm:$0xff]
        %s3658 = scalar_lea.vmem [#allocation2], 243
        %v3659 = vld [vmem:[%s3658] ss:$2 sm:$0xff]
        %s3660 = scalar_lea.vmem [#allocation2], 259
        %v3661 = vld [vmem:[%s3660] ss:$2 sm:$0xff]
        %s3662 = scalar_lea.vmem [#allocation2], 275
        %v3663 = vld [vmem:[%s3662] ss:$2 sm:$0xff]
        %s3664 = scalar_lea.vmem [#allocation2], 291
        %v3665 = vld [vmem:[%s3664] ss:$2 sm:$0xff]
        %s3666 = scalar_lea.vmem [#allocation2], 307
        %v3667 = vld [vmem:[%s3666] ss:$2 sm:$0xff]
        %s3668 = scalar_lea.vmem [#allocation2], 323
        %v3669 = vld [vmem:[%s3668] ss:$2 sm:$0xff]
        %s3670 = scalar_lea.vmem [#allocation2], 339
        %v3671 = vld [vmem:[%s3670] ss:$2 sm:$0xff]
        %s3672 = scalar_lea.vmem [#allocation2], 355
        %v3673 = vld [vmem:[%s3672] ss:$2 sm:$0xff]
        %s3674 = scalar_lea.vmem [#allocation2], 371
        %v3675 = vld [vmem:[%s3674] ss:$2 sm:$0xff]
        %s3676 = scalar_lea.vmem %s2, 144
        %v3677 = vld [vmem:[%s3676] sm:$0xff]
        %v3678 = vld [vmem:[%s3676 + $0x8] sm:$0xff]
        %v3679 = vld [vmem:[%s3676 + $0x10] sm:$0xff]
        %v3680 = vld [vmem:[%s3676 + $0x18] sm:$0xff]
        %v3681 = vld [vmem:[%s3676 + $0x20] sm:$0xff]
        %v3682 = vld [vmem:[%s3676 + $0x28] sm:$0xff]
        %v3684 = vsel %vm2620, %v3629, 0
        %v3687 = vsel %vm2620, %v3631, 0
        %v3690 = vsel %vm2620, %v3633, 0
        %v3693 = vsel %vm2620, %v3635, 0
        %v3696 = vsel %vm2620, %v3637, 0
        %v3699 = vsel %vm2620, %v3639, 0
        %v3702 = vsel %vm2620, %v3641, 0
        %v3705 = vsel %vm2620, %v3643, 0
        %v3708 = vsel %vm2620, %v3645, 0
        %v3711 = vsel %vm2620, %v3647, 0
        %v3714 = vsel %vm2620, %v3649, 0
        %v3717 = vsel %vm2620, %v3651, 0
        %v3720 = vsel %vm2620, %v3653, 0
        %v3723 = vsel %vm2620, %v3655, 0
        %v3726 = vsel %vm2620, %v3657, 0
        %v3729 = vsel %vm2620, %v3659, 0
        %v3732 = vsel %vm2620, %v3661, 0
        %v3735 = vsel %vm2620, %v3663, 0
        %v3738 = vsel %vm2620, %v3665, 0
        %v3741 = vsel %vm2620, %v3667, 0
        %v3744 = vsel %vm2620, %v3669, 0
        %v3747 = vsel %vm2620, %v3671, 0
        %v3750 = vsel %vm2620, %v3673, 0
        %v3753 = vsel %vm2620, %v3675, 0
        %3755 = vmatprep.subr.mxu0 0.0
        %3756 = vmatpush1.msra.mxu0 %v3677
        %3757 = vmatprep.subr.mxu0 0.0
        %3758 = vmatpush1.msra.mxu0 %v3678
        %3759 = vmatprep.subr.mxu0 0.0
        %3760 = vmatpush1.msra.mxu0 %v3679
        %3761 = vmatprep.subr.mxu0 0.0
        %3762 = vmatpush1.msra.mxu0 %v3680
        %3763 = vmatprep.subr.mxu0 0.0
        %3764 = vmatpush1.msra.mxu0 %v3681
        %3765 = vmatprep.subr.mxu0 0.0
        %3766 = vmatpush1.msra.mxu0 %v3682
        %3767 = vmatprep.subr.mxu0 0.0
        %3768 = vmatpush1.msra.mxu0 0.0
        %3769 = vmatprep.subr.mxu0 0.0
        %3770 = vmatpush1.msra.mxu0 0.0
        %3771 = vmatprep.subr.mxu0 0.0
        %3772 = vmatpush1.msra.mxu0 0.0
        %3773 = vmatprep.subr.mxu0 0.0
        %3774 = vmatpush1.msra.mxu0 0.0
        %3775 = vmatprep.subr.mxu0 0.0
        %3776 = vmatpush1.msra.mxu0 0.0
        %3777 = vmatprep.subr.mxu0 0.0
        %3778 = vmatpush1.msra.mxu0 0.0
        %3779 = vmatprep.subr.mxu0 0.0
        %3780 = vmatpush1.msra.mxu0 0.0
        %3781 = vmatprep.subr.mxu0 0.0
        %3782 = vmatpush1.msra.mxu0 0.0
        %3783 = vmatprep.subr.mxu0 0.0
        %3784 = vmatpush1.msra.mxu0 0.0
        %3785 = vmatprep.subr.mxu0 0.0
        %3786 = vmatpush1.msra.mxu0 0.0
        %3787 = vmatprep.subr.mxu0 0.0
        %3788 = vmatpush1.msra.mxu0 0.0
        %3789 = vmatprep.subr.mxu0 0.0
        %3790 = vmatpush1.msra.mxu0 0.0
        %3791 = vmatprep.subr.mxu0 0.0
        %3792 = vmatpush1.msra.mxu0 0.0
        %3793 = vmatprep.subr.mxu0 0.0
        %3794 = vmatpush1.msra.mxu0 0.0
        %3795 = vmatprep.subr.mxu0 0.0
        %3796 = vmatpush1.msra.mxu0 0.0
        %3797 = vmatprep.subr.mxu0 0.0
        %3798 = vmatpush1.msra.mxu0 0.0
        %3799 = vmatprep.subr.mxu0 0.0
        %3800 = vmatpush1.msra.mxu0 0.0
        %3801 = vmatprep.subr.mxu0 0.0
        %3802 = vmatpush1.msra.mxu0 0.0
        %3803 = vmatprep.subr.mxu0 0.0
        %3804 = vmatpush1.msra.mxu0 0.0
        %3805 = vmatprep.subr.mxu0 0.0
        %3806 = vmatpush1.msra.mxu0 0.0
        %3807 = vmatprep.subr.mxu0 0.0
        %3808 = vmatpush1.msra.mxu0 0.0
        %3809 = vmatprep.subr.mxu0 0.0
        %3810 = vmatpush1.msra.mxu0 0.0
        %3811 = vmatprep.subr.mxu0 0.0
        %3812 = vmatpush1.msra.mxu0 0.0
        %3813 = vmatprep.subr.mxu0 0.0
        %3814 = vmatpush1.msra.mxu0 0.0
        %3815 = vmatprep.subr.mxu0 0.0
        %3816 = vmatpush1.msra.mxu0 0.0
        %3817 = vmatprep.subr.mxu0 0.0
        %3818 = vmatpush1.msra.mxu0 0.0
        %3819 = vmatprep.mubr.f32.mxu0 0.0
        %3820 = vmatmul.mubr.f32.gmra.mrb[0].mxu0 %v3684
        %v3821 = vpop.f32.mrb[0].mxu0
        %v3822 = vadd.f32 0.0, %v3821
        %v3823 = vpop.f32.mrb[0].mxu0
        %3824 = vmatprep.mubr.f32.mxu0 0.0
        %3825 = vmatmul.mubr.f32.gmra.mrb[0].mxu0 %v3687
        %v3826 = vpop.f32.mrb[0].mxu0
        %v3827 = vadd.f32 0.0, %v3826
        %v3828 = vpop.f32.mrb[0].mxu0
        %3829 = vmatprep.mubr.f32.mxu0 0.0
        %3830 = vmatmul.mubr.f32.gmra.mrb[0].mxu0 %v3690
        %v3831 = vpop.f32.mrb[0].mxu0
        %v3832 = vadd.f32 0.0, %v3831
        %v3833 = vpop.f32.mrb[0].mxu0
        %3834 = vmatprep.mubr.f32.mxu0 0.0
        %3835 = vmatmul.mubr.f32.gmra.mrb[0].mxu0 %v3693
        %v3836 = vpop.f32.mrb[0].mxu0
        %v3837 = vadd.f32 0.0, %v3836
        %v3838 = vpop.f32.mrb[0].mxu0
        %3839 = vmatprep.mubr.f32.mxu0 0.0
        %3840 = vmatmul.mubr.f32.gmra.mrb[0].mxu0 %v3696
        %v3841 = vpop.f32.mrb[0].mxu0
        %v3842 = vadd.f32 0.0, %v3841
        %v3843 = vpop.f32.mrb[0].mxu0
        %3844 = vmatprep.mubr.f32.mxu0 0.0
        %3845 = vmatmul.mubr.f32.gmra.mrb[0].mxu0 %v3699
        %v3846 = vpop.f32.mrb[0].mxu0
        %v3847 = vadd.f32 0.0, %v3846
        %v3848 = vpop.f32.mrb[0].mxu0
        %3849 = vmatprep.mubr.f32.mxu0 0.0
        %3850 = vmatmul.mubr.f32.gmra.mrb[0].mxu0 %v3702
        %v3851 = vpop.f32.mrb[0].mxu0
        %v3852 = vadd.f32 0.0, %v3851
        %v3853 = vpop.f32.mrb[0].mxu0
        %3854 = vmatprep.mubr.f32.mxu0 0.0
        %3855 = vmatmul.mubr.f32.gmra.mrb[0].mxu0 %v3705
        %v3856 = vpop.f32.mrb[0].mxu0
        %v3857 = vadd.f32 0.0, %v3856
        %v3858 = vpop.f32.mrb[0].mxu0
        %3859 = vmatprep.mubr.f32.mxu0 0.0
        %3860 = vmatmul.mubr.f32.gmra.mrb[0].mxu0 %v3708
        %v3861 = vpop.f32.mrb[0].mxu0
        %v3862 = vadd.f32 0.0, %v3861
        %v3863 = vpop.f32.mrb[0].mxu0
        %3864 = vmatprep.mubr.f32.mxu0 0.0
        %3865 = vmatmul.mubr.f32.gmra.mrb[0].mxu0 %v3711
        %v3866 = vpop.f32.mrb[0].mxu0
        %v3867 = vadd.f32 0.0, %v3866
        %v3868 = vpop.f32.mrb[0].mxu0
        %3869 = vmatprep.mubr.f32.mxu0 0.0
        %3870 = vmatmul.mubr.f32.gmra.mrb[0].mxu0 %v3714
        %v3871 = vpop.f32.mrb[0].mxu0
        %v3872 = vadd.f32 0.0, %v3871
        %v3873 = vpop.f32.mrb[0].mxu0
        %3874 = vmatprep.mubr.f32.mxu0 0.0
        %3875 = vmatmul.mubr.f32.gmra.mrb[0].mxu0 %v3717
        %v3876 = vpop.f32.mrb[0].mxu0
        %v3877 = vadd.f32 0.0, %v3876
        %v3878 = vpop.f32.mrb[0].mxu0
        %3879 = vmatprep.mubr.f32.mxu0 0.0
        %3880 = vmatmul.mubr.f32.gmra.mrb[0].mxu0 %v3720
        %v3881 = vpop.f32.mrb[0].mxu0
        %v3882 = vadd.f32 0.0, %v3881
        %v3883 = vpop.f32.mrb[0].mxu0
        %3884 = vmatprep.mubr.f32.mxu0 0.0
        %3885 = vmatmul.mubr.f32.gmra.mrb[0].mxu0 %v3723
        %v3886 = vpop.f32.mrb[0].mxu0
        %v3887 = vadd.f32 0.0, %v3886
        %v3888 = vpop.f32.mrb[0].mxu0
        %3889 = vmatprep.mubr.f32.mxu0 0.0
        %3890 = vmatmul.mubr.f32.gmra.mrb[0].mxu0 %v3726
        %v3891 = vpop.f32.mrb[0].mxu0
        %v3892 = vadd.f32 0.0, %v3891
        %v3893 = vpop.f32.mrb[0].mxu0
        %3894 = vmatprep.mubr.f32.mxu0 0.0
        %3895 = vmatmul.mubr.f32.gmra.mrb[0].mxu0 %v3729
        %v3896 = vpop.f32.mrb[0].mxu0
        %v3897 = vadd.f32 0.0, %v3896
        %v3898 = vpop.f32.mrb[0].mxu0
        %3899 = vmatprep.mubr.f32.mxu0 0.0
        %3900 = vmatmul.mubr.f32.gmra.mrb[0].mxu0 %v3732
        %v3901 = vpop.f32.mrb[0].mxu0
        %v3902 = vadd.f32 0.0, %v3901
        %v3903 = vpop.f32.mrb[0].mxu0
        %3904 = vmatprep.mubr.f32.mxu0 0.0
        %3905 = vmatmul.mubr.f32.gmra.mrb[0].mxu0 %v3735
        %v3906 = vpop.f32.mrb[0].mxu0
        %v3907 = vadd.f32 0.0, %v3906
        %v3908 = vpop.f32.mrb[0].mxu0
        %3909 = vmatprep.mubr.f32.mxu0 0.0
        %3910 = vmatmul.mubr.f32.gmra.mrb[0].mxu0 %v3738
        %v3911 = vpop.f32.mrb[0].mxu0
        %v3912 = vadd.f32 0.0, %v3911
        %v3913 = vpop.f32.mrb[0].mxu0
        %3914 = vmatprep.mubr.f32.mxu0 0.0
        %3915 = vmatmul.mubr.f32.gmra.mrb[0].mxu0 %v3741
        %v3916 = vpop.f32.mrb[0].mxu0
        %v3917 = vadd.f32 0.0, %v3916
        %v3918 = vpop.f32.mrb[0].mxu0
        %3919 = vmatprep.mubr.f32.mxu0 0.0
        %3920 = vmatmul.mubr.f32.gmra.mrb[0].mxu0 %v3744
        %v3921 = vpop.f32.mrb[0].mxu0
        %v3922 = vadd.f32 0.0, %v3921
        %v3923 = vpop.f32.mrb[0].mxu0
        %3924 = vmatprep.mubr.f32.mxu0 0.0
        %3925 = vmatmul.mubr.f32.gmra.mrb[0].mxu0 %v3747
        %v3926 = vpop.f32.mrb[0].mxu0
        %v3927 = vadd.f32 0.0, %v3926
        %v3928 = vpop.f32.mrb[0].mxu0
        %3929 = vmatprep.mubr.f32.mxu0 0.0
        %3930 = vmatmul.mubr.f32.gmra.mrb[0].mxu0 %v3750
        %v3931 = vpop.f32.mrb[0].mxu0
        %v3932 = vadd.f32 0.0, %v3931
        %v3933 = vpop.f32.mrb[0].mxu0
        %3934 = vmatprep.mubr.f32.mxu0 0.0
        %3935 = vmatmul.mubr.f32.gmra.mrb[0].mxu0 %v3753
        %v3936 = vpop.f32.mrb[0].mxu0
        %v3937 = vadd.f32 0.0, %v3936
        %v3938 = vpop.f32.mrb[0].mxu0
        %3939 = vdwg.mxu0
        %v3940 = vadd.f32 %v3604, %v3822
        %v3941 = vadd.f32 %v3605, %v3827
        %v3942 = vadd.f32 %v3606, %v3832
        %v3943 = vadd.f32 %v3607, %v3837
        %v3944 = vadd.f32 %v3608, %v3842
        %v3945 = vadd.f32 %v3609, %v3847
        %v3946 = vadd.f32 %v3610, %v3852
        %v3947 = vadd.f32 %v3611, %v3857
        %v3948 = vadd.f32 %v3612, %v3862
        %v3949 = vadd.f32 %v3613, %v3867
        %v3950 = vadd.f32 %v3614, %v3872
        %v3951 = vadd.f32 %v3615, %v3877
        %v3952 = vadd.f32 %v3616, %v3882
        %v3953 = vadd.f32 %v3617, %v3887
        %v3954 = vadd.f32 %v3618, %v3892
        %v3955 = vadd.f32 %v3619, %v3897
        %v3956 = vadd.f32 %v3620, %v3902
        %v3957 = vadd.f32 %v3621, %v3907
        %v3958 = vadd.f32 %v3622, %v3912
        %v3959 = vadd.f32 %v3623, %v3917
        %v3960 = vadd.f32 %v3624, %v3922
        %v3961 = vadd.f32 %v3625, %v3927
        %v3962 = vadd.f32 %v3626, %v3932
        %v3963 = vadd.f32 %v3627, %v3937
        %v3964 = vmax.f32 %v3940, 0.0
        %v3965 = vmax.f32 %v3941, 0.0
        %v3966 = vmax.f32 %v3942, 0.0
        %v3967 = vmax.f32 %v3943, 0.0
        %v3968 = vmax.f32 %v3944, 0.0
        %v3969 = vmax.f32 %v3945, 0.0
        %v3970 = vmax.f32 %v3946, 0.0
        %v3971 = vmax.f32 %v3947, 0.0
        %v3972 = vmax.f32 %v3948, 0.0
        %v3973 = vmax.f32 %v3949, 0.0
        %v3974 = vmax.f32 %v3950, 0.0
        %v3975 = vmax.f32 %v3951, 0.0
        %v3976 = vmax.f32 %v3952, 0.0
        %v3977 = vmax.f32 %v3953, 0.0
        %v3978 = vmax.f32 %v3954, 0.0
        %v3979 = vmax.f32 %v3955, 0.0
        %v3980 = vmax.f32 %v3956, 0.0
        %v3981 = vmax.f32 %v3957, 0.0
        %v3982 = vmax.f32 %v3958, 0.0
        %v3983 = vmax.f32 %v3959, 0.0
        %v3984 = vmax.f32 %v3960, 0.0
        %v3985 = vmax.f32 %v3961, 0.0
        %v3986 = vmax.f32 %v3962, 0.0
        %v3987 = vmax.f32 %v3963, 0.0
        %v3988 = vld [vmem:[%s3] sm:$0xff]
        %v3989 = vld [vmem:[%s3 + $0x8] sm:$0xff]
        %v3990 = vld [vmem:[%s3 + $0x10] sm:$0x7f]
        %s3991 = scalar_lea.vmem %s3, 24
        %v3992 = vld [vmem:[%s3991] sm:$0xff]
        %v3993 = vld [vmem:[%s3991 + $0x8] sm:$0xff]
        %v3994 = vld [vmem:[%s3991 + $0x10] sm:$0x7f]
        %v4003 = vrot.slane %v3964, 1
        %vm4004 = vcmask 1041409
        %v4005 = vsel %vm4004, %v3967, %v4003
        %v4006 = vrot.slane %v3970, 7
        %vm4007 = vcmask 1042434
        %v4008 = vsel %vm4007, %v4006, %v4005
        %v4009 = vrot.slane %v3973, 6
        %vm4010 = vcmask 1043459
        %v4011 = vsel %vm4010, %v4009, %v4008
        %v4012 = vrot.slane %v3976, 5
        %vm4013 = vcmask 1044484
        %v4014 = vsel %vm4013, %v4012, %v4011
        %v4015 = vrot.slane %v3979, 4
        %vm4016 = vcmask 1045509
        %v4017 = vsel %vm4016, %v4015, %v4014
        %v4018 = vrot.slane %v3982, 3
        %vm4019 = vcmask 1046534
        %v4020 = vsel %vm4019, %v4018, %v4017
        %v4021 = vrot.slane %v3985, 2
        %vm4022 = vcmask 1047559
        %v4023 = vsel %vm4022, %v4021, %v4020
        %vm4024 = vcmask 187392
        %v4025 = vsel %vm4024, %v4023, 0
        %vm4027 = vcmask 1046528
        %v4029 = vsel %vm4027, %v3994, 0
        %4031 = vmatprep.subr.mxu0 0.0
        %4032 = vmatpush1.msra.mxu0 %v3992
        %4033 = vmatprep.subr.mxu0 0.0
        %4034 = vmatpush1.msra.mxu0 %v3993
        %4035 = vmatprep.subr.mxu0 0.0
        %4036 = vmatpush1.msra.mxu0 %v4029
        %4037 = vmatprep.subr.mxu0 0.0
        %4038 = vmatpush1.msra.mxu0 0.0
        %4039 = vmatprep.subr.mxu0 0.0
        %4040 = vmatpush1.msra.mxu0 0.0
        %4041 = vmatprep.subr.mxu0 0.0
        %4042 = vmatpush1.msra.mxu0 0.0
        %4043 = vmatprep.subr.mxu0 0.0
        %4044 = vmatpush1.msra.mxu0 0.0
        %4045 = vmatprep.subr.mxu0 0.0
        %4046 = vmatpush1.msra.mxu0 0.0
        %4047 = vmatprep.subr.mxu0 0.0
        %4048 = vmatpush1.msra.mxu0 0.0
        %4049 = vmatprep.subr.mxu0 0.0
        %4050 = vmatpush1.msra.mxu0 0.0
        %4051 = vmatprep.subr.mxu0 0.0
        %4052 = vmatpush1.msra.mxu0 0.0
        %4053 = vmatprep.subr.mxu0 0.0
        %4054 = vmatpush1.msra.mxu0 0.0
        %4055 = vmatprep.subr.mxu0 0.0
        %4056 = vmatpush1.msra.mxu0 0.0
        %4057 = vmatprep.subr.mxu0 0.0
        %4058 = vmatpush1.msra.mxu0 0.0
        %4059 = vmatprep.subr.mxu0 0.0
        %4060 = vmatpush1.msra.mxu0 0.0
        %4061 = vmatprep.subr.mxu0 0.0
        %4062 = vmatpush1.msra.mxu0 0.0
        %4063 = vmatprep.subr.mxu0 0.0
        %4064 = vmatpush1.msra.mxu0 0.0
        %4065 = vmatprep.subr.mxu0 0.0
        %4066 = vmatpush1.msra.mxu0 0.0
        %4067 = vmatprep.subr.mxu0 0.0
        %4068 = vmatpush1.msra.mxu0 0.0
        %4069 = vmatprep.subr.mxu0 0.0
        %4070 = vmatpush1.msra.mxu0 0.0
        %4071 = vmatprep.subr.mxu0 0.0
        %4072 = vmatpush1.msra.mxu0 0.0
        %4073 = vmatprep.subr.mxu0 0.0
        %4074 = vmatpush1.msra.mxu0 0.0
        %4075 = vmatprep.subr.mxu0 0.0
        %4076 = vmatpush1.msra.mxu0 0.0
        %4077 = vmatprep.subr.mxu0 0.0
        %4078 = vmatpush1.msra.mxu0 0.0
        %4079 = vmatprep.subr.mxu0 0.0
        %4080 = vmatpush1.msra.mxu0 0.0
        %4081 = vmatprep.subr.mxu0 0.0
        %4082 = vmatpush1.msra.mxu0 0.0
        %4083 = vmatprep.subr.mxu0 0.0
        %4084 = vmatpush1.msra.mxu0 0.0
        %4085 = vmatprep.subr.mxu0 0.0
        %4086 = vmatpush1.msra.mxu0 0.0
        %4087 = vmatprep.subr.mxu0 0.0
        %4088 = vmatpush1.msra.mxu0 0.0
        %4089 = vmatprep.subr.mxu0 0.0
        %4090 = vmatpush1.msra.mxu0 0.0
        %4091 = vmatprep.subr.mxu0 0.0
        %4092 = vmatpush1.msra.mxu0 0.0
        %4093 = vmatprep.subr.mxu0 0.0
        %4094 = vmatpush1.msra.mxu0 0.0
        %4095 = vmatprep.mubr.f32.mxu0 0.0
        %4096 = vmatmul.mubr.f32.gmra.mrb[0].mxu0 %v4025
        %v4097 = vpop.f32.mrb[0].mxu0
        %v4098 = vadd.f32 0.0, %v4097
        %v4099 = vpop.f32.mrb[0].mxu0
        %4100 = vdwg.mxu0
        %v4101 = vrot.slane %v3967, 7
        %v4102 = vsel %vm4004, %v4101, %v3964
        %v4103 = vrot.slane %v3970, 6
        %v4104 = vsel %vm4007, %v4103, %v4102
        %v4105 = vrot.slane %v3973, 5
        %v4106 = vsel %vm4010, %v4105, %v4104
        %v4107 = vrot.slane %v3976, 4
        %v4108 = vsel %vm4013, %v4107, %v4106
        %v4109 = vrot.slane %v3979, 3
        %v4110 = vsel %vm4016, %v4109, %v4108
        %v4111 = vrot.slane %v3982, 2
        %v4112 = vsel %vm4019, %v4111, %v4110
        %v4113 = vrot.slane %v3985, 1
        %v4114 = vsel %vm4022, %v4113, %v4112
        %v4115 = vsel %vm4024, %v4114, 0
        %v4118 = vsel %vm4027, %v3990, 0
        %4120 = vmatprep.subr.mxu0 0.0
        %4121 = vmatpush1.msra.mxu0 %v3988
        %4122 = vmatprep.subr.mxu0 0.0
        %4123 = vmatpush1.msra.mxu0 %v3989
        %4124 = vmatprep.subr.mxu0 0.0
        %4125 = vmatpush1.msra.mxu0 %v4118
        %4126 = vmatprep.subr.mxu0 0.0
        %4127 = vmatpush1.msra.mxu0 0.0
        %4128 = vmatprep.subr.mxu0 0.0
        %4129 = vmatpush1.msra.mxu0 0.0
        %4130 = vmatprep.subr.mxu0 0.0
        %4131 = vmatpush1.msra.mxu0 0.0
        %4132 = vmatprep.subr.mxu0 0.0
        %4133 = vmatpush1.msra.mxu0 0.0
        %4134 = vmatprep.subr.mxu0 0.0
        %4135 = vmatpush1.msra.mxu0 0.0
        %4136 = vmatprep.subr.mxu0 0.0
        %4137 = vmatpush1.msra.mxu0 0.0
        %4138 = vmatprep.subr.mxu0 0.0
        %4139 = vmatpush1.msra.mxu0 0.0
        %4140 = vmatprep.subr.mxu0 0.0
        %4141 = vmatpush1.msra.mxu0 0.0
        %4142 = vmatprep.subr.mxu0 0.0
        %4143 = vmatpush1.msra.mxu0 0.0
        %4144 = vmatprep.subr.mxu0 0.0
        %4145 = vmatpush1.msra.mxu0 0.0
        %4146 = vmatprep.subr.mxu0 0.0
        %4147 = vmatpush1.msra.mxu0 0.0
        %4148 = vmatprep.subr.mxu0 0.0
        %4149 = vmatpush1.msra.mxu0 0.0
        %4150 = vmatprep.subr.mxu0 0.0
        %4151 = vmatpush1.msra.mxu0 0.0
        %4152 = vmatprep.subr.mxu0 0.0
        %4153 = vmatpush1.msra.mxu0 0.0
        %4154 = vmatprep.subr.mxu0 0.0
        %4155 = vmatpush1.msra.mxu0 0.0
        %4156 = vmatprep.subr.mxu0 0.0
        %4157 = vmatpush1.msra.mxu0 0.0
        %4158 = vmatprep.subr.mxu0 0.0
        %4159 = vmatpush1.msra.mxu0 0.0
        %4160 = vmatprep.subr.mxu0 0.0
        %4161 = vmatpush1.msra.mxu0 0.0
        %4162 = vmatprep.subr.mxu0 0.0
        %4163 = vmatpush1.msra.mxu0 0.0
        %4164 = vmatprep.subr.mxu0 0.0
        %4165 = vmatpush1.msra.mxu0 0.0
        %4166 = vmatprep.subr.mxu0 0.0
        %4167 = vmatpush1.msra.mxu0 0.0
        %4168 = vmatprep.subr.mxu0 0.0
        %4169 = vmatpush1.msra.mxu0 0.0
        %4170 = vmatprep.subr.mxu0 0.0
        %4171 = vmatpush1.msra.mxu0 0.0
        %4172 = vmatprep.subr.mxu0 0.0
        %4173 = vmatpush1.msra.mxu0 0.0
        %4174 = vmatprep.subr.mxu0 0.0
        %4175 = vmatpush1.msra.mxu0 0.0
        %4176 = vmatprep.subr.mxu0 0.0
        %4177 = vmatpush1.msra.mxu0 0.0
        %4178 = vmatprep.subr.mxu0 0.0
        %4179 = vmatpush1.msra.mxu0 0.0
        %4180 = vmatprep.subr.mxu0 0.0
        %4181 = vmatpush1.msra.mxu0 0.0
        %4182 = vmatprep.subr.mxu0 0.0
        %4183 = vmatpush1.msra.mxu0 0.0
        %4184 = vmatprep.mubr.f32.mxu0 0.0
        %4185 = vmatmul.mubr.f32.gmra.mrb[0].mxu0 %v4115
        %v4186 = vpop.f32.mrb[0].mxu0
        %v4187 = vadd.f32 %v4098, %v4186
        %v4188 = vpop.f32.mrb[0].mxu0
        %4189 = vdwg.mxu0
        %s4190 = scalar_lea.vmem %s3, 48
        %v4191 = vld [vmem:[%s4190] sm:$0xff]
        %v4192 = vld [vmem:[%s4190 + $0x8] sm:$0xff]
        %v4193 = vld [vmem:[%s4190 + $0x10] sm:$0x7f]
        %v4194 = vrot.slane %v3964, 2
        %v4195 = vrot.slane %v3967, 1
        %v4196 = vsel %vm4004, %v4195, %v4194
        %v4197 = vsel %vm4007, %v3970, %v4196
        %v4198 = vrot.slane %v3973, 7
        %v4199 = vsel %vm4010, %v4198, %v4197
        %v4200 = vrot.slane %v3976, 6
        %v4201 = vsel %vm4013, %v4200, %v4199
        %v4202 = vrot.slane %v3979, 5
        %v4203 = vsel %vm4016, %v4202, %v4201
        %v4204 = vrot.slane %v3982, 4
        %v4205 = vsel %vm4019, %v4204, %v4203
        %v4206 = vrot.slane %v3985, 3
        %v4207 = vsel %vm4022, %v4206, %v4205
        %v4208 = vsel %vm4024, %v4207, 0
        %v4211 = vsel %vm4027, %v4193, 0
        %4213 = vmatprep.subr.mxu0 0.0
        %4214 = vmatpush1.msra.mxu0 %v4191
        %4215 = vmatprep.subr.mxu0 0.0
        %4216 = vmatpush1.msra.mxu0 %v4192
        %4217 = vmatprep.subr.mxu0 0.0
        %4218 = vmatpush1.msra.mxu0 %v4211
        %4219 = vmatprep.subr.mxu0 0.0
        %4220 = vmatpush1.msra.mxu0 0.0
        %4221 = vmatprep.subr.mxu0 0.0
        %4222 = vmatpush1.msra.mxu0 0.0
        %4223 = vmatprep.subr.mxu0 0.0
        %4224 = vmatpush1.msra.mxu0 0.0
        %4225 = vmatprep.subr.mxu0 0.0
        %4226 = vmatpush1.msra.mxu0 0.0
        %4227 = vmatprep.subr.mxu0 0.0
        %4228 = vmatpush1.msra.mxu0 0.0
        %4229 = vmatprep.subr.mxu0 0.0
        %4230 = vmatpush1.msra.mxu0 0.0
        %4231 = vmatprep.subr.mxu0 0.0
        %4232 = vmatpush1.msra.mxu0 0.0
        %4233 = vmatprep.subr.mxu0 0.0
        %4234 = vmatpush1.msra.mxu0 0.0
        %4235 = vmatprep.subr.mxu0 0.0
        %4236 = vmatpush1.msra.mxu0 0.0
        %4237 = vmatprep.subr.mxu0 0.0
        %4238 = vmatpush1.msra.mxu0 0.0
        %4239 = vmatprep.subr.mxu0 0.0
        %4240 = vmatpush1.msra.mxu0 0.0
        %4241 = vmatprep.subr.mxu0 0.0
        %4242 = vmatpush1.msra.mxu0 0.0
        %4243 = vmatprep.subr.mxu0 0.0
        %4244 = vmatpush1.msra.mxu0 0.0
        %4245 = vmatprep.subr.mxu0 0.0
        %4246 = vmatpush1.msra.mxu0 0.0
        %4247 = vmatprep.subr.mxu0 0.0
        %4248 = vmatpush1.msra.mxu0 0.0
        %4249 = vmatprep.subr.mxu0 0.0
        %4250 = vmatpush1.msra.mxu0 0.0
        %4251 = vmatprep.subr.mxu0 0.0
        %4252 = vmatpush1.msra.mxu0 0.0
        %4253 = vmatprep.subr.mxu0 0.0
        %4254 = vmatpush1.msra.mxu0 0.0
        %4255 = vmatprep.subr.mxu0 0.0
        %4256 = vmatpush1.msra.mxu0 0.0
        %4257 = vmatprep.subr.mxu0 0.0
        %4258 = vmatpush1.msra.mxu0 0.0
        %4259 = vmatprep.subr.mxu0 0.0
        %4260 = vmatpush1.msra.mxu0 0.0
        %4261 = vmatprep.subr.mxu0 0.0
        %4262 = vmatpush1.msra.mxu0 0.0
        %4263 = vmatprep.subr.mxu0 0.0
        %4264 = vmatpush1.msra.mxu0 0.0
        %4265 = vmatprep.subr.mxu0 0.0
        %4266 = vmatpush1.msra.mxu0 0.0
        %4267 = vmatprep.subr.mxu0 0.0
        %4268 = vmatpush1.msra.mxu0 0.0
        %4269 = vmatprep.subr.mxu0 0.0
        %4270 = vmatpush1.msra.mxu0 0.0
        %4271 = vmatprep.subr.mxu0 0.0
        %4272 = vmatpush1.msra.mxu0 0.0
        %4273 = vmatprep.subr.mxu0 0.0
        %4274 = vmatpush1.msra.mxu0 0.0
        %4275 = vmatprep.subr.mxu0 0.0
        %4276 = vmatpush1.msra.mxu0 0.0
        %4277 = vmatprep.mubr.f32.mxu0 0.0
        %4278 = vmatmul.mubr.f32.gmra.mrb[0].mxu0 %v4208
        %v4279 = vpop.f32.mrb[0].mxu0
        %v4280 = vadd.f32 0.0, %v4279
        %v4281 = vpop.f32.mrb[0].mxu0
        %4282 = vdwg.mxu0
        %v4283 = vadd.f32 %v4187, %v4280
        %s4284 = scalar_lea.vmem %s3, 72
        %v4285 = vld [vmem:[%s4284] sm:$0xff]
        %v4286 = vld [vmem:[%s4284 + $0x8] sm:$0xff]
        %v4287 = vld [vmem:[%s4284 + $0x10] sm:$0x7f]
        %v4288 = vrot.slane %v3964, 3
        %v4289 = vrot.slane %v3967, 2
        %v4290 = vsel %vm4004, %v4289, %v4288
        %v4291 = vrot.slane %v3970, 1
        %v4292 = vsel %vm4007, %v4291, %v4290
        %v4293 = vsel %vm4010, %v3973, %v4292
        %v4294 = vrot.slane %v3976, 7
        %v4295 = vsel %vm4013, %v4294, %v4293
        %v4296 = vrot.slane %v3979, 6
        %v4297 = vsel %vm4016, %v4296, %v4295
        %v4298 = vrot.slane %v3982, 5
        %v4299 = vsel %vm4019, %v4298, %v4297
        %v4300 = vrot.slane %v3985, 4
        %v4301 = vsel %vm4022, %v4300, %v4299
        %v4302 = vsel %vm4024, %v4301, 0
        %v4305 = vsel %vm4027, %v4287, 0
        %4307 = vmatprep.subr.mxu0 0.0
        %4308 = vmatpush1.msra.mxu0 %v4285
        %4309 = vmatprep.subr.mxu0 0.0
        %4310 = vmatpush1.msra.mxu0 %v4286
        %4311 = vmatprep.subr.mxu0 0.0
        %4312 = vmatpush1.msra.mxu0 %v4305
        %4313 = vmatprep.subr.mxu0 0.0
        %4314 = vmatpush1.msra.mxu0 0.0
        %4315 = vmatprep.subr.mxu0 0.0
        %4316 = vmatpush1.msra.mxu0 0.0
        %4317 = vmatprep.subr.mxu0 0.0
        %4318 = vmatpush1.msra.mxu0 0.0
        %4319 = vmatprep.subr.mxu0 0.0
        %4320 = vmatpush1.msra.mxu0 0.0
        %4321 = vmatprep.subr.mxu0 0.0
        %4322 = vmatpush1.msra.mxu0 0.0
        %4323 = vmatprep.subr.mxu0 0.0
        %4324 = vmatpush1.msra.mxu0 0.0
        %4325 = vmatprep.subr.mxu0 0.0
        %4326 = vmatpush1.msra.mxu0 0.0
        %4327 = vmatprep.subr.mxu0 0.0
        %4328 = vmatpush1.msra.mxu0 0.0
        %4329 = vmatprep.subr.mxu0 0.0
        %4330 = vmatpush1.msra.mxu0 0.0
        %4331 = vmatprep.subr.mxu0 0.0
        %4332 = vmatpush1.msra.mxu0 0.0
        %4333 = vmatprep.subr.mxu0 0.0
        %4334 = vmatpush1.msra.mxu0 0.0
        %4335 = vmatprep.subr.mxu0 0.0
        %4336 = vmatpush1.msra.mxu0 0.0
        %4337 = vmatprep.subr.mxu0 0.0
        %4338 = vmatpush1.msra.mxu0 0.0
        %4339 = vmatprep.subr.mxu0 0.0
        %4340 = vmatpush1.msra.mxu0 0.0
        %4341 = vmatprep.subr.mxu0 0.0
        %4342 = vmatpush1.msra.mxu0 0.0
        %4343 = vmatprep.subr.mxu0 0.0
        %4344 = vmatpush1.msra.mxu0 0.0
        %4345 = vmatprep.subr.mxu0 0.0
        %4346 = vmatpush1.msra.mxu0 0.0
        %4347 = vmatprep.subr.mxu0 0.0
        %4348 = vmatpush1.msra.mxu0 0.0
        %4349 = vmatprep.subr.mxu0 0.0
        %4350 = vmatpush1.msra.mxu0 0.0
        %4351 = vmatprep.subr.mxu0 0.0
        %4352 = vmatpush1.msra.mxu0 0.0
        %4353 = vmatprep.subr.mxu0 0.0
        %4354 = vmatpush1.msra.mxu0 0.0
        %4355 = vmatprep.subr.mxu0 0.0
        %4356 = vmatpush1.msra.mxu0 0.0
        %4357 = vmatprep.subr.mxu0 0.0
        %4358 = vmatpush1.msra.mxu0 0.0
        %4359 = vmatprep.subr.mxu0 0.0
        %4360 = vmatpush1.msra.mxu0 0.0
        %4361 = vmatprep.subr.mxu0 0.0
        %4362 = vmatpush1.msra.mxu0 0.0
        %4363 = vmatprep.subr.mxu0 0.0
        %4364 = vmatpush1.msra.mxu0 0.0
        %4365 = vmatprep.subr.mxu0 0.0
        %4366 = vmatpush1.msra.mxu0 0.0
        %4367 = vmatprep.subr.mxu0 0.0
        %4368 = vmatpush1.msra.mxu0 0.0
        %4369 = vmatprep.subr.mxu0 0.0
        %4370 = vmatpush1.msra.mxu0 0.0
        %4371 = vmatprep.mubr.f32.mxu0 0.0
        %4372 = vmatmul.mubr.f32.gmra.mrb[0].mxu0 %v4302
        %v4373 = vpop.f32.mrb[0].mxu0
        %v4374 = vadd.f32 0.0, %v4373
        %v4375 = vpop.f32.mrb[0].mxu0
        %4376 = vdwg.mxu0
        %v4377 = vadd.f32 %v4283, %v4374
        %s4378 = scalar_lea.vmem %s3, 96
        %v4379 = vld [vmem:[%s4378] sm:$0xff]
        %v4380 = vld [vmem:[%s4378 + $0x8] sm:$0xff]
        %v4381 = vld [vmem:[%s4378 + $0x10] sm:$0x7f]
        %v4382 = vrot.slane %v3964, 4
        %v4383 = vrot.slane %v3967, 3
        %v4384 = vsel %vm4004, %v4383, %v4382
        %v4385 = vrot.slane %v3970, 2
        %v4386 = vsel %vm4007, %v4385, %v4384
        %v4387 = vrot.slane %v3973, 1
        %v4388 = vsel %vm4010, %v4387, %v4386
        %v4389 = vsel %vm4013, %v3976, %v4388
        %v4390 = vrot.slane %v3979, 7
        %v4391 = vsel %vm4016, %v4390, %v4389
        %v4392 = vrot.slane %v3982, 6
        %v4393 = vsel %vm4019, %v4392, %v4391
        %v4394 = vrot.slane %v3985, 5
        %v4395 = vsel %vm4022, %v4394, %v4393
        %v4396 = vsel %vm4024, %v4395, 0
        %v4399 = vsel %vm4027, %v4381, 0
        %4401 = vmatprep.subr.mxu0 0.0
        %4402 = vmatpush1.msra.mxu0 %v4379
        %4403 = vmatprep.subr.mxu0 0.0
        %4404 = vmatpush1.msra.mxu0 %v4380
        %4405 = vmatprep.subr.mxu0 0.0
        %4406 = vmatpush1.msra.mxu0 %v4399
        %4407 = vmatprep.subr.mxu0 0.0
        %4408 = vmatpush1.msra.mxu0 0.0
        %4409 = vmatprep.subr.mxu0 0.0
        %4410 = vmatpush1.msra.mxu0 0.0
        %4411 = vmatprep.subr.mxu0 0.0
        %4412 = vmatpush1.msra.mxu0 0.0
        %4413 = vmatprep.subr.mxu0 0.0
        %4414 = vmatpush1.msra.mxu0 0.0
        %4415 = vmatprep.subr.mxu0 0.0
        %4416 = vmatpush1.msra.mxu0 0.0
        %4417 = vmatprep.subr.mxu0 0.0
        %4418 = vmatpush1.msra.mxu0 0.0
        %4419 = vmatprep.subr.mxu0 0.0
        %4420 = vmatpush1.msra.mxu0 0.0
        %4421 = vmatprep.subr.mxu0 0.0
        %4422 = vmatpush1.msra.mxu0 0.0
        %4423 = vmatprep.subr.mxu0 0.0
        %4424 = vmatpush1.msra.mxu0 0.0
        %4425 = vmatprep.subr.mxu0 0.0
        %4426 = vmatpush1.msra.mxu0 0.0
        %4427 = vmatprep.subr.mxu0 0.0
        %4428 = vmatpush1.msra.mxu0 0.0
        %4429 = vmatprep.subr.mxu0 0.0
        %4430 = vmatpush1.msra.mxu0 0.0
        %4431 = vmatprep.subr.mxu0 0.0
        %4432 = vmatpush1.msra.mxu0 0.0
        %4433 = vmatprep.subr.mxu0 0.0
        %4434 = vmatpush1.msra.mxu0 0.0
        %4435 = vmatprep.subr.mxu0 0.0
        %4436 = vmatpush1.msra.mxu0 0.0
        %4437 = vmatprep.subr.mxu0 0.0
        %4438 = vmatpush1.msra.mxu0 0.0
        %4439 = vmatprep.subr.mxu0 0.0
        %4440 = vmatpush1.msra.mxu0 0.0
        %4441 = vmatprep.subr.mxu0 0.0
        %4442 = vmatpush1.msra.mxu0 0.0
        %4443 = vmatprep.subr.mxu0 0.0
        %4444 = vmatpush1.msra.mxu0 0.0
        %4445 = vmatprep.subr.mxu0 0.0
        %4446 = vmatpush1.msra.mxu0 0.0
        %4447 = vmatprep.subr.mxu0 0.0
        %4448 = vmatpush1.msra.mxu0 0.0
        %4449 = vmatprep.subr.mxu0 0.0
        %4450 = vmatpush1.msra.mxu0 0.0
        %4451 = vmatprep.subr.mxu0 0.0
        %4452 = vmatpush1.msra.mxu0 0.0
        %4453 = vmatprep.subr.mxu0 0.0
        %4454 = vmatpush1.msra.mxu0 0.0
        %4455 = vmatprep.subr.mxu0 0.0
        %4456 = vmatpush1.msra.mxu0 0.0
        %4457 = vmatprep.subr.mxu0 0.0
        %4458 = vmatpush1.msra.mxu0 0.0
        %4459 = vmatprep.subr.mxu0 0.0
        %4460 = vmatpush1.msra.mxu0 0.0
        %4461 = vmatprep.subr.mxu0 0.0
        %4462 = vmatpush1.msra.mxu0 0.0
        %4463 = vmatprep.subr.mxu0 0.0
        %4464 = vmatpush1.msra.mxu0 0.0
        %4465 = vmatprep.mubr.f32.mxu0 0.0
        %4466 = vmatmul.mubr.f32.gmra.mrb[0].mxu0 %v4396
        %v4467 = vpop.f32.mrb[0].mxu0
        %v4468 = vadd.f32 0.0, %v4467
        %v4469 = vpop.f32.mrb[0].mxu0
        %4470 = vdwg.mxu0
        %v4471 = vadd.f32 %v4377, %v4468
        %s4472 = scalar_lea.vmem %s3, 120
        %v4473 = vld [vmem:[%s4472] sm:$0xff]
        %v4474 = vld [vmem:[%s4472 + $0x8] sm:$0xff]
        %v4475 = vld [vmem:[%s4472 + $0x10] sm:$0x7f]
        %v4476 = vrot.slane %v3964, 5
        %v4477 = vrot.slane %v3967, 4
        %v4478 = vsel %vm4004, %v4477, %v4476
        %v4479 = vrot.slane %v3970, 3
        %v4480 = vsel %vm4007, %v4479, %v4478
        %v4481 = vrot.slane %v3973, 2
        %v4482 = vsel %vm4010, %v4481, %v4480
        %v4483 = vrot.slane %v3976, 1
        %v4484 = vsel %vm4013, %v4483, %v4482
        %v4485 = vsel %vm4016, %v3979, %v4484
        %v4486 = vrot.slane %v3982, 7
        %v4487 = vsel %vm4019, %v4486, %v4485
        %v4488 = vrot.slane %v3985, 6
        %v4489 = vsel %vm4022, %v4488, %v4487
        %v4490 = vsel %vm4024, %v4489, 0
        %v4493 = vsel %vm4027, %v4475, 0
        %4495 = vmatprep.subr.mxu0 0.0
        %4496 = vmatpush1.msra.mxu0 %v4473
        %4497 = vmatprep.subr.mxu0 0.0
        %4498 = vmatpush1.msra.mxu0 %v4474
        %4499 = vmatprep.subr.mxu0 0.0
        %4500 = vmatpush1.msra.mxu0 %v4493
        %4501 = vmatprep.subr.mxu0 0.0
        %4502 = vmatpush1.msra.mxu0 0.0
        %4503 = vmatprep.subr.mxu0 0.0
        %4504 = vmatpush1.msra.mxu0 0.0
        %4505 = vmatprep.subr.mxu0 0.0
        %4506 = vmatpush1.msra.mxu0 0.0
        %4507 = vmatprep.subr.mxu0 0.0
        %4508 = vmatpush1.msra.mxu0 0.0
        %4509 = vmatprep.subr.mxu0 0.0
        %4510 = vmatpush1.msra.mxu0 0.0
        %4511 = vmatprep.subr.mxu0 0.0
        %4512 = vmatpush1.msra.mxu0 0.0
        %4513 = vmatprep.subr.mxu0 0.0
        %4514 = vmatpush1.msra.mxu0 0.0
        %4515 = vmatprep.subr.mxu0 0.0
        %4516 = vmatpush1.msra.mxu0 0.0
        %4517 = vmatprep.subr.mxu0 0.0
        %4518 = vmatpush1.msra.mxu0 0.0
        %4519 = vmatprep.subr.mxu0 0.0
        %4520 = vmatpush1.msra.mxu0 0.0
        %4521 = vmatprep.subr.mxu0 0.0
        %4522 = vmatpush1.msra.mxu0 0.0
        %4523 = vmatprep.subr.mxu0 0.0
        %4524 = vmatpush1.msra.mxu0 0.0
        %4525 = vmatprep.subr.mxu0 0.0
        %4526 = vmatpush1.msra.mxu0 0.0
        %4527 = vmatprep.subr.mxu0 0.0
        %4528 = vmatpush1.msra.mxu0 0.0
        %4529 = vmatprep.subr.mxu0 0.0
        %4530 = vmatpush1.msra.mxu0 0.0
        %4531 = vmatprep.subr.mxu0 0.0
        %4532 = vmatpush1.msra.mxu0 0.0
        %4533 = vmatprep.subr.mxu0 0.0
        %4534 = vmatpush1.msra.mxu0 0.0
        %4535 = vmatprep.subr.mxu0 0.0
        %4536 = vmatpush1.msra.mxu0 0.0
        %4537 = vmatprep.subr.mxu0 0.0
        %4538 = vmatpush1.msra.mxu0 0.0
        %4539 = vmatprep.subr.mxu0 0.0
        %4540 = vmatpush1.msra.mxu0 0.0
        %4541 = vmatprep.subr.mxu0 0.0
        %4542 = vmatpush1.msra.mxu0 0.0
        %4543 = vmatprep.subr.mxu0 0.0
        %4544 = vmatpush1.msra.mxu0 0.0
        %4545 = vmatprep.subr.mxu0 0.0
        %4546 = vmatpush1.msra.mxu0 0.0
        %4547 = vmatprep.subr.mxu0 0.0
        %4548 = vmatpush1.msra.mxu0 0.0
        %4549 = vmatprep.subr.mxu0 0.0
        %4550 = vmatpush1.msra.mxu0 0.0
        %4551 = vmatprep.subr.mxu0 0.0
        %4552 = vmatpush1.msra.mxu0 0.0
        %4553 = vmatprep.subr.mxu0 0.0
        %4554 = vmatpush1.msra.mxu0 0.0
        %4555 = vmatprep.subr.mxu0 0.0
        %4556 = vmatpush1.msra.mxu0 0.0
        %4557 = vmatprep.subr.mxu0 0.0
        %4558 = vmatpush1.msra.mxu0 0.0
        %4559 = vmatprep.mubr.f32.mxu0 0.0
        %4560 = vmatmul.mubr.f32.gmra.mrb[0].mxu0 %v4490
        %v4561 = vpop.f32.mrb[0].mxu0
        %v4562 = vadd.f32 0.0, %v4561
        %v4563 = vpop.f32.mrb[0].mxu0
        %4564 = vdwg.mxu0
        %v4565 = vadd.f32 %v4471, %v4562
        %s4566 = scalar_lea.vmem %s3, 144
        %v4567 = vld [vmem:[%s4566] sm:$0xff]
        %v4568 = vld [vmem:[%s4566 + $0x8] sm:$0xff]
        %v4569 = vld [vmem:[%s4566 + $0x10] sm:$0x7f]
        %v4570 = vrot.slane %v3964, 6
        %v4571 = vrot.slane %v3967, 5
        %v4572 = vsel %vm4004, %v4571, %v4570
        %v4573 = vrot.slane %v3970, 4
        %v4574 = vsel %vm4007, %v4573, %v4572
        %v4575 = vrot.slane %v3973, 3
        %v4576 = vsel %vm4010, %v4575, %v4574
        %v4577 = vrot.slane %v3976, 2
        %v4578 = vsel %vm4013, %v4577, %v4576
        %v4579 = vrot.slane %v3979, 1
        %v4580 = vsel %vm4016, %v4579, %v4578
        %v4581 = vsel %vm4019, %v3982, %v4580
        %v4582 = vrot.slane %v3985, 7
        %v4583 = vsel %vm4022, %v4582, %v4581
        %v4584 = vsel %vm4024, %v4583, 0
        %v4587 = vsel %vm4027, %v4569, 0
        %4589 = vmatprep.subr.mxu0 0.0
        %4590 = vmatpush1.msra.mxu0 %v4567
        %4591 = vmatprep.subr.mxu0 0.0
        %4592 = vmatpush1.msra.mxu0 %v4568
        %4593 = vmatprep.subr.mxu0 0.0
        %4594 = vmatpush1.msra.mxu0 %v4587
        %4595 = vmatprep.subr.mxu0 0.0
        %4596 = vmatpush1.msra.mxu0 0.0
        %4597 = vmatprep.subr.mxu0 0.0
        %4598 = vmatpush1.msra.mxu0 0.0
        %4599 = vmatprep.subr.mxu0 0.0
        %4600 = vmatpush1.msra.mxu0 0.0
        %4601 = vmatprep.subr.mxu0 0.0
        %4602 = vmatpush1.msra.mxu0 0.0
        %4603 = vmatprep.subr.mxu0 0.0
        %4604 = vmatpush1.msra.mxu0 0.0
        %4605 = vmatprep.subr.mxu0 0.0
        %4606 = vmatpush1.msra.mxu0 0.0
        %4607 = vmatprep.subr.mxu0 0.0
        %4608 = vmatpush1.msra.mxu0 0.0
        %4609 = vmatprep.subr.mxu0 0.0
        %4610 = vmatpush1.msra.mxu0 0.0
        %4611 = vmatprep.subr.mxu0 0.0
        %4612 = vmatpush1.msra.mxu0 0.0
        %4613 = vmatprep.subr.mxu0 0.0
        %4614 = vmatpush1.msra.mxu0 0.0
        %4615 = vmatprep.subr.mxu0 0.0
        %4616 = vmatpush1.msra.mxu0 0.0
        %4617 = vmatprep.subr.mxu0 0.0
        %4618 = vmatpush1.msra.mxu0 0.0
        %4619 = vmatprep.subr.mxu0 0.0
        %4620 = vmatpush1.msra.mxu0 0.0
        %4621 = vmatprep.subr.mxu0 0.0
        %4622 = vmatpush1.msra.mxu0 0.0
        %4623 = vmatprep.subr.mxu0 0.0
        %4624 = vmatpush1.msra.mxu0 0.0
        %4625 = vmatprep.subr.mxu0 0.0
        %4626 = vmatpush1.msra.mxu0 0.0
        %4627 = vmatprep.subr.mxu0 0.0
        %4628 = vmatpush1.msra.mxu0 0.0
        %4629 = vmatprep.subr.mxu0 0.0
        %4630 = vmatpush1.msra.mxu0 0.0
        %4631 = vmatprep.subr.mxu0 0.0
        %4632 = vmatpush1.msra.mxu0 0.0
        %4633 = vmatprep.subr.mxu0 0.0
        %4634 = vmatpush1.msra.mxu0 0.0
        %4635 = vmatprep.subr.mxu0 0.0
        %4636 = vmatpush1.msra.mxu0 0.0
        %4637 = vmatprep.subr.mxu0 0.0
        %4638 = vmatpush1.msra.mxu0 0.0
        %4639 = vmatprep.subr.mxu0 0.0
        %4640 = vmatpush1.msra.mxu0 0.0
        %4641 = vmatprep.subr.mxu0 0.0
        %4642 = vmatpush1.msra.mxu0 0.0
        %4643 = vmatprep.subr.mxu0 0.0
        %4644 = vmatpush1.msra.mxu0 0.0
        %4645 = vmatprep.subr.mxu0 0.0
        %4646 = vmatpush1.msra.mxu0 0.0
        %4647 = vmatprep.subr.mxu0 0.0
        %4648 = vmatpush1.msra.mxu0 0.0
        %4649 = vmatprep.subr.mxu0 0.0
        %4650 = vmatpush1.msra.mxu0 0.0
        %4651 = vmatprep.subr.mxu0 0.0
        %4652 = vmatpush1.msra.mxu0 0.0
        %4653 = vmatprep.mubr.f32.mxu0 0.0
        %4654 = vmatmul.mubr.f32.gmra.mrb[0].mxu0 %v4584
        %v4655 = vpop.f32.mrb[0].mxu0
        %v4656 = vadd.f32 0.0, %v4655
        %v4657 = vpop.f32.mrb[0].mxu0
        %4658 = vdwg.mxu0
        %v4659 = vadd.f32 %v4565, %v4656
        %s4660 = scalar_lea.vmem %s3, 168
        %v4661 = vld [vmem:[%s4660] sm:$0xff]
        %v4662 = vld [vmem:[%s4660 + $0x8] sm:$0xff]
        %v4663 = vld [vmem:[%s4660 + $0x10] sm:$0x7f]
        %v4664 = vrot.slane %v3964, 7
        %v4665 = vrot.slane %v3967, 6
        %v4666 = vsel %vm4004, %v4665, %v4664
        %v4667 = vrot.slane %v3970, 5
        %v4668 = vsel %vm4007, %v4667, %v4666
        %v4669 = vrot.slane %v3973, 4
        %v4670 = vsel %vm4010, %v4669, %v4668
        %v4671 = vrot.slane %v3976, 3
        %v4672 = vsel %vm4013, %v4671, %v4670
        %v4673 = vrot.slane %v3979, 2
        %v4674 = vsel %vm4016, %v4673, %v4672
        %v4675 = vrot.slane %v3982, 1
        %v4676 = vsel %vm4019, %v4675, %v4674
        %v4677 = vsel %vm4022, %v3985, %v4676
        %v4678 = vsel %vm4024, %v4677, 0
        %v4681 = vsel %vm4027, %v4663, 0
        %4683 = vmatprep.subr.mxu0 0.0
        %4684 = vmatpush1.msra.mxu0 %v4661
        %4685 = vmatprep.subr.mxu0 0.0
        %4686 = vmatpush1.msra.mxu0 %v4662
        %4687 = vmatprep.subr.mxu0 0.0
        %4688 = vmatpush1.msra.mxu0 %v4681
        %4689 = vmatprep.subr.mxu0 0.0
        %4690 = vmatpush1.msra.mxu0 0.0
        %4691 = vmatprep.subr.mxu0 0.0
        %4692 = vmatpush1.msra.mxu0 0.0
        %4693 = vmatprep.subr.mxu0 0.0
        %4694 = vmatpush1.msra.mxu0 0.0
        %4695 = vmatprep.subr.mxu0 0.0
        %4696 = vmatpush1.msra.mxu0 0.0
        %4697 = vmatprep.subr.mxu0 0.0
        %4698 = vmatpush1.msra.mxu0 0.0
        %4699 = vmatprep.subr.mxu0 0.0
        %4700 = vmatpush1.msra.mxu0 0.0
        %4701 = vmatprep.subr.mxu0 0.0
        %4702 = vmatpush1.msra.mxu0 0.0
        %4703 = vmatprep.subr.mxu0 0.0
        %4704 = vmatpush1.msra.mxu0 0.0
        %4705 = vmatprep.subr.mxu0 0.0
        %4706 = vmatpush1.msra.mxu0 0.0
        %4707 = vmatprep.subr.mxu0 0.0
        %4708 = vmatpush1.msra.mxu0 0.0
        %4709 = vmatprep.subr.mxu0 0.0
        %4710 = vmatpush1.msra.mxu0 0.0
        %4711 = vmatprep.subr.mxu0 0.0
        %4712 = vmatpush1.msra.mxu0 0.0
        %4713 = vmatprep.subr.mxu0 0.0
        %4714 = vmatpush1.msra.mxu0 0.0
        %4715 = vmatprep.subr.mxu0 0.0
        %4716 = vmatpush1.msra.mxu0 0.0
        %4717 = vmatprep.subr.mxu0 0.0
        %4718 = vmatpush1.msra.mxu0 0.0
        %4719 = vmatprep.subr.mxu0 0.0
        %4720 = vmatpush1.msra.mxu0 0.0
        %4721 = vmatprep.subr.mxu0 0.0
        %4722 = vmatpush1.msra.mxu0 0.0
        %4723 = vmatprep.subr.mxu0 0.0
        %4724 = vmatpush1.msra.mxu0 0.0
        %4725 = vmatprep.subr.mxu0 0.0
        %4726 = vmatpush1.msra.mxu0 0.0
        %4727 = vmatprep.subr.mxu0 0.0
        %4728 = vmatpush1.msra.mxu0 0.0
        %4729 = vmatprep.subr.mxu0 0.0
        %4730 = vmatpush1.msra.mxu0 0.0
        %4731 = vmatprep.subr.mxu0 0.0
        %4732 = vmatpush1.msra.mxu0 0.0
        %4733 = vmatprep.subr.mxu0 0.0
        %4734 = vmatpush1.msra.mxu0 0.0
        %4735 = vmatprep.subr.mxu0 0.0
        %4736 = vmatpush1.msra.mxu0 0.0
        %4737 = vmatprep.subr.mxu0 0.0
        %4738 = vmatpush1.msra.mxu0 0.0
        %4739 = vmatprep.subr.mxu0 0.0
        %4740 = vmatpush1.msra.mxu0 0.0
        %4741 = vmatprep.subr.mxu0 0.0
        %4742 = vmatpush1.msra.mxu0 0.0
        %4743 = vmatprep.subr.mxu0 0.0
        %4744 = vmatpush1.msra.mxu0 0.0
        %4745 = vmatprep.subr.mxu0 0.0
        %4746 = vmatpush1.msra.mxu0 0.0
        %4747 = vmatprep.mubr.f32.mxu0 0.0
        %4748 = vmatmul.mubr.f32.gmra.mrb[0].mxu0 %v4678
        %v4749 = vpop.f32.mrb[0].mxu0
        %v4750 = vadd.f32 0.0, %v4749
        %v4751 = vpop.f32.mrb[0].mxu0
        %4752 = vdwg.mxu0
        %v4753 = vadd.f32 %v4659, %v4750
        %s4754 = scalar_lea.vmem %s3, 192
        %v4755 = vld [vmem:[%s4754] sm:$0xff]
        %v4756 = vld [vmem:[%s4754 + $0x8] sm:$0xff]
        %v4757 = vld [vmem:[%s4754 + $0x10] sm:$0x7f]
        %v4766 = vrot.slane %v3968, 7
        %v4767 = vsel %vm4004, %v4766, %v3965
        %v4768 = vrot.slane %v3971, 6
        %v4769 = vsel %vm4007, %v4768, %v4767
        %v4770 = vrot.slane %v3974, 5
        %v4771 = vsel %vm4010, %v4770, %v4769
        %v4772 = vrot.slane %v3977, 4
        %v4773 = vsel %vm4013, %v4772, %v4771
        %v4774 = vrot.slane %v3980, 3
        %v4775 = vsel %vm4016, %v4774, %v4773
        %v4776 = vrot.slane %v3983, 2
        %v4777 = vsel %vm4019, %v4776, %v4775
        %v4778 = vrot.slane %v3986, 1
        %v4779 = vsel %vm4022, %v4778, %v4777
        %v4780 = vsel %vm4024, %v4779, 0
        %v4783 = vsel %vm4027, %v4757, 0
        %4785 = vmatprep.subr.mxu0 0.0
        %4786 = vmatpush1.msra.mxu0 %v4755
        %4787 = vmatprep.subr.mxu0 0.0
        %4788 = vmatpush1.msra.mxu0 %v4756
        %4789 = vmatprep.subr.mxu0 0.0
        %4790 = vmatpush1.msra.mxu0 %v4783
        %4791 = vmatprep.subr.mxu0 0.0
        %4792 = vmatpush1.msra.mxu0 0.0
        %4793 = vmatprep.subr.mxu0 0.0
        %4794 = vmatpush1.msra.mxu0 0.0
        %4795 = vmatprep.subr.mxu0 0.0
        %4796 = vmatpush1.msra.mxu0 0.0
        %4797 = vmatprep.subr.mxu0 0.0
        %4798 = vmatpush1.msra.mxu0 0.0
        %4799 = vmatprep.subr.mxu0 0.0
        %4800 = vmatpush1.msra.mxu0 0.0
        %4801 = vmatprep.subr.mxu0 0.0
        %4802 = vmatpush1.msra.mxu0 0.0
        %4803 = vmatprep.subr.mxu0 0.0
        %4804 = vmatpush1.msra.mxu0 0.0
        %4805 = vmatprep.subr.mxu0 0.0
        %4806 = vmatpush1.msra.mxu0 0.0
        %4807 = vmatprep.subr.mxu0 0.0
        %4808 = vmatpush1.msra.mxu0 0.0
        %4809 = vmatprep.subr.mxu0 0.0
        %4810 = vmatpush1.msra.mxu0 0.0
        %4811 = vmatprep.subr.mxu0 0.0
        %4812 = vmatpush1.msra.mxu0 0.0
        %4813 = vmatprep.subr.mxu0 0.0
        %4814 = vmatpush1.msra.mxu0 0.0
        %4815 = vmatprep.subr.mxu0 0.0
        %4816 = vmatpush1.msra.mxu0 0.0
        %4817 = vmatprep.subr.mxu0 0.0
        %4818 = vmatpush1.msra.mxu0 0.0
        %4819 = vmatprep.subr.mxu0 0.0
        %4820 = vmatpush1.msra.mxu0 0.0
        %4821 = vmatprep.subr.mxu0 0.0
        %4822 = vmatpush1.msra.mxu0 0.0
        %4823 = vmatprep.subr.mxu0 0.0
        %4824 = vmatpush1.msra.mxu0 0.0
        %4825 = vmatprep.subr.mxu0 0.0
        %4826 = vmatpush1.msra.mxu0 0.0
        %4827 = vmatprep.subr.mxu0 0.0
        %4828 = vmatpush1.msra.mxu0 0.0
        %4829 = vmatprep.subr.mxu0 0.0
        %4830 = vmatpush1.msra.mxu0 0.0
        %4831 = vmatprep.subr.mxu0 0.0
        %4832 = vmatpush1.msra.mxu0 0.0
        %4833 = vmatprep.subr.mxu0 0.0
        %4834 = vmatpush1.msra.mxu0 0.0
        %4835 = vmatprep.subr.mxu0 0.0
        %4836 = vmatpush1.msra.mxu0 0.0
        %4837 = vmatprep.subr.mxu0 0.0
        %4838 = vmatpush1.msra.mxu0 0.0
        %4839 = vmatprep.subr.mxu0 0.0
        %4840 = vmatpush1.msra.mxu0 0.0
        %4841 = vmatprep.subr.mxu0 0.0
        %4842 = vmatpush1.msra.mxu0 0.0
        %4843 = vmatprep.subr.mxu0 0.0
        %4844 = vmatpush1.msra.mxu0 0.0
        %4845 = vmatprep.subr.mxu0 0.0
        %4846 = vmatpush1.msra.mxu0 0.0
        %4847 = vmatprep.subr.mxu0 0.0
        %4848 = vmatpush1.msra.mxu0 0.0
        %4849 = vmatprep.mubr.f32.mxu0 0.0
        %4850 = vmatmul.mubr.f32.gmra.mrb[0].mxu0 %v4780
        %v4851 = vpop.f32.mrb[0].mxu0
        %v4852 = vadd.f32 0.0, %v4851
        %v4853 = vpop.f32.mrb[0].mxu0
        %4854 = vdwg.mxu0
        %v4855 = vadd.f32 %v4753, %v4852
        %s4856 = scalar_lea.vmem %s3, 216
        %v4857 = vld [vmem:[%s4856] sm:$0xff]
        %v4858 = vld [vmem:[%s4856 + $0x8] sm:$0xff]
        %v4859 = vld [vmem:[%s4856 + $0x10] sm:$0x7f]
        %v4860 = vrot.slane %v3965, 1
        %v4861 = vsel %vm4004, %v3968, %v4860
        %v4862 = vrot.slane %v3971, 7
        %v4863 = vsel %vm4007, %v4862, %v4861
        %v4864 = vrot.slane %v3974, 6
        %v4865 = vsel %vm4010, %v4864, %v4863
        %v4866 = vrot.slane %v3977, 5
        %v4867 = vsel %vm4013, %v4866, %v4865
        %v4868 = vrot.slane %v3980, 4
        %v4869 = vsel %vm4016, %v4868, %v4867
        %v4870 = vrot.slane %v3983, 3
        %v4871 = vsel %vm4019, %v4870, %v4869
        %v4872 = vrot.slane %v3986, 2
        %v4873 = vsel %vm4022, %v4872, %v4871
        %v4874 = vsel %vm4024, %v4873, 0
        %v4877 = vsel %vm4027, %v4859, 0
        %4879 = vmatprep.subr.mxu0 0.0
        %4880 = vmatpush1.msra.mxu0 %v4857
        %4881 = vmatprep.subr.mxu0 0.0
        %4882 = vmatpush1.msra.mxu0 %v4858
        %4883 = vmatprep.subr.mxu0 0.0
        %4884 = vmatpush1.msra.mxu0 %v4877
        %4885 = vmatprep.subr.mxu0 0.0
        %4886 = vmatpush1.msra.mxu0 0.0
        %4887 = vmatprep.subr.mxu0 0.0
        %4888 = vmatpush1.msra.mxu0 0.0
        %4889 = vmatprep.subr.mxu0 0.0
        %4890 = vmatpush1.msra.mxu0 0.0
        %4891 = vmatprep.subr.mxu0 0.0
        %4892 = vmatpush1.msra.mxu0 0.0
        %4893 = vmatprep.subr.mxu0 0.0
        %4894 = vmatpush1.msra.mxu0 0.0
        %4895 = vmatprep.subr.mxu0 0.0
        %4896 = vmatpush1.msra.mxu0 0.0
        %4897 = vmatprep.subr.mxu0 0.0
        %4898 = vmatpush1.msra.mxu0 0.0
        %4899 = vmatprep.subr.mxu0 0.0
        %4900 = vmatpush1.msra.mxu0 0.0
        %4901 = vmatprep.subr.mxu0 0.0
        %4902 = vmatpush1.msra.mxu0 0.0
        %4903 = vmatprep.subr.mxu0 0.0
        %4904 = vmatpush1.msra.mxu0 0.0
        %4905 = vmatprep.subr.mxu0 0.0
        %4906 = vmatpush1.msra.mxu0 0.0
        %4907 = vmatprep.subr.mxu0 0.0
        %4908 = vmatpush1.msra.mxu0 0.0
        %4909 = vmatprep.subr.mxu0 0.0
        %4910 = vmatpush1.msra.mxu0 0.0
        %4911 = vmatprep.subr.mxu0 0.0
        %4912 = vmatpush1.msra.mxu0 0.0
        %4913 = vmatprep.subr.mxu0 0.0
        %4914 = vmatpush1.msra.mxu0 0.0
        %4915 = vmatprep.subr.mxu0 0.0
        %4916 = vmatpush1.msra.mxu0 0.0
        %4917 = vmatprep.subr.mxu0 0.0
        %4918 = vmatpush1.msra.mxu0 0.0
        %4919 = vmatprep.subr.mxu0 0.0
        %4920 = vmatpush1.msra.mxu0 0.0
        %4921 = vmatprep.subr.mxu0 0.0
        %4922 = vmatpush1.msra.mxu0 0.0
        %4923 = vmatprep.subr.mxu0 0.0
        %4924 = vmatpush1.msra.mxu0 0.0
        %4925 = vmatprep.subr.mxu0 0.0
        %4926 = vmatpush1.msra.mxu0 0.0
        %4927 = vmatprep.subr.mxu0 0.0
        %4928 = vmatpush1.msra.mxu0 0.0
        %4929 = vmatprep.subr.mxu0 0.0
        %4930 = vmatpush1.msra.mxu0 0.0
        %4931 = vmatprep.subr.mxu0 0.0
        %4932 = vmatpush1.msra.mxu0 0.0
        %4933 = vmatprep.subr.mxu0 0.0
        %4934 = vmatpush1.msra.mxu0 0.0
        %4935 = vmatprep.subr.mxu0 0.0
        %4936 = vmatpush1.msra.mxu0 0.0
        %4937 = vmatprep.subr.mxu0 0.0
        %4938 = vmatpush1.msra.mxu0 0.0
        %4939 = vmatprep.subr.mxu0 0.0
        %4940 = vmatpush1.msra.mxu0 0.0
        %4941 = vmatprep.subr.mxu0 0.0
        %4942 = vmatpush1.msra.mxu0 0.0
        %4943 = vmatprep.mubr.f32.mxu0 0.0
        %4944 = vmatmul.mubr.f32.gmra.mrb[0].mxu0 %v4874
        %v4945 = vpop.f32.mrb[0].mxu0
        %v4946 = vadd.f32 0.0, %v4945
        %v4947 = vpop.f32.mrb[0].mxu0
        %4948 = vdwg.mxu0
        %v4949 = vadd.f32 %v4855, %v4946
        %s4950 = scalar_lea.vmem %s3, 240
        %v4951 = vld [vmem:[%s4950] sm:$0xff]
        %v4952 = vld [vmem:[%s4950 + $0x8] sm:$0xff]
        %v4953 = vld [vmem:[%s4950 + $0x10] sm:$0x7f]
        %v4954 = vrot.slane %v3965, 2
        %v4955 = vrot.slane %v3968, 1
        %v4956 = vsel %vm4004, %v4955, %v4954
        %v4957 = vsel %vm4007, %v3971, %v4956
        %v4958 = vrot.slane %v3974, 7
        %v4959 = vsel %vm4010, %v4958, %v4957
        %v4960 = vrot.slane %v3977, 6
        %v4961 = vsel %vm4013, %v4960, %v4959
        %v4962 = vrot.slane %v3980, 5
        %v4963 = vsel %vm4016, %v4962, %v4961
        %v4964 = vrot.slane %v3983, 4
        %v4965 = vsel %vm4019, %v4964, %v4963
        %v4966 = vrot.slane %v3986, 3
        %v4967 = vsel %vm4022, %v4966, %v4965
        %v4968 = vsel %vm4024, %v4967, 0
        %v4971 = vsel %vm4027, %v4953, 0
        %4973 = vmatprep.subr.mxu0 0.0
        %4974 = vmatpush1.msra.mxu0 %v4951
        %4975 = vmatprep.subr.mxu0 0.0
        %4976 = vmatpush1.msra.mxu0 %v4952
        %4977 = vmatprep.subr.mxu0 0.0
        %4978 = vmatpush1.msra.mxu0 %v4971
        %4979 = vmatprep.subr.mxu0 0.0
        %4980 = vmatpush1.msra.mxu0 0.0
        %4981 = vmatprep.subr.mxu0 0.0
        %4982 = vmatpush1.msra.mxu0 0.0
        %4983 = vmatprep.subr.mxu0 0.0
        %4984 = vmatpush1.msra.mxu0 0.0
        %4985 = vmatprep.subr.mxu0 0.0
        %4986 = vmatpush1.msra.mxu0 0.0
        %4987 = vmatprep.subr.mxu0 0.0
        %4988 = vmatpush1.msra.mxu0 0.0
        %4989 = vmatprep.subr.mxu0 0.0
        %4990 = vmatpush1.msra.mxu0 0.0
        %4991 = vmatprep.subr.mxu0 0.0
        %4992 = vmatpush1.msra.mxu0 0.0
        %4993 = vmatprep.subr.mxu0 0.0
        %4994 = vmatpush1.msra.mxu0 0.0
        %4995 = vmatprep.subr.mxu0 0.0
        %4996 = vmatpush1.msra.mxu0 0.0
        %4997 = vmatprep.subr.mxu0 0.0
        %4998 = vmatpush1.msra.mxu0 0.0
        %4999 = vmatprep.subr.mxu0 0.0
        %5000 = vmatpush1.msra.mxu0 0.0
        %5001 = vmatprep.subr.mxu0 0.0
        %5002 = vmatpush1.msra.mxu0 0.0
        %5003 = vmatprep.subr.mxu0 0.0
        %5004 = vmatpush1.msra.mxu0 0.0
        %5005 = vmatprep.subr.mxu0 0.0
        %5006 = vmatpush1.msra.mxu0 0.0
        %5007 = vmatprep.subr.mxu0 0.0
        %5008 = vmatpush1.msra.mxu0 0.0
        %5009 = vmatprep.subr.mxu0 0.0
        %5010 = vmatpush1.msra.mxu0 0.0
        %5011 = vmatprep.subr.mxu0 0.0
        %5012 = vmatpush1.msra.mxu0 0.0
        %5013 = vmatprep.subr.mxu0 0.0
        %5014 = vmatpush1.msra.mxu0 0.0
        %5015 = vmatprep.subr.mxu0 0.0
        %5016 = vmatpush1.msra.mxu0 0.0
        %5017 = vmatprep.subr.mxu0 0.0
        %5018 = vmatpush1.msra.mxu0 0.0
        %5019 = vmatprep.subr.mxu0 0.0
        %5020 = vmatpush1.msra.mxu0 0.0
        %5021 = vmatprep.subr.mxu0 0.0
        %5022 = vmatpush1.msra.mxu0 0.0
        %5023 = vmatprep.subr.mxu0 0.0
        %5024 = vmatpush1.msra.mxu0 0.0
        %5025 = vmatprep.subr.mxu0 0.0
        %5026 = vmatpush1.msra.mxu0 0.0
        %5027 = vmatprep.subr.mxu0 0.0
        %5028 = vmatpush1.msra.mxu0 0.0
        %5029 = vmatprep.subr.mxu0 0.0
        %5030 = vmatpush1.msra.mxu0 0.0
        %5031 = vmatprep.subr.mxu0 0.0
        %5032 = vmatpush1.msra.mxu0 0.0
        %5033 = vmatprep.subr.mxu0 0.0
        %5034 = vmatpush1.msra.mxu0 0.0
        %5035 = vmatprep.subr.mxu0 0.0
        %5036 = vmatpush1.msra.mxu0 0.0
        %5037 = vmatprep.mubr.f32.mxu0 0.0
        %5038 = vmatmul.mubr.f32.gmra.mrb[0].mxu0 %v4968
        %v5039 = vpop.f32.mrb[0].mxu0
        %v5040 = vadd.f32 0.0, %v5039
        %v5041 = vpop.f32.mrb[0].mxu0
        %5042 = vdwg.mxu0
        %v5043 = vadd.f32 %v4949, %v5040
        %s5044 = scalar_lea.vmem %s3, 264
        %v5045 = vld [vmem:[%s5044] sm:$0xff]
        %v5046 = vld [vmem:[%s5044 + $0x8] sm:$0xff]
        %v5047 = vld [vmem:[%s5044 + $0x10] sm:$0x7f]
        %v5048 = vrot.slane %v3965, 3
        %v5049 = vrot.slane %v3968, 2
        %v5050 = vsel %vm4004, %v5049, %v5048
        %v5051 = vrot.slane %v3971, 1
        %v5052 = vsel %vm4007, %v5051, %v5050
        %v5053 = vsel %vm4010, %v3974, %v5052
        %v5054 = vrot.slane %v3977, 7
        %v5055 = vsel %vm4013, %v5054, %v5053
        %v5056 = vrot.slane %v3980, 6
        %v5057 = vsel %vm4016, %v5056, %v5055
        %v5058 = vrot.slane %v3983, 5
        %v5059 = vsel %vm4019, %v5058, %v5057
        %v5060 = vrot.slane %v3986, 4
        %v5061 = vsel %vm4022, %v5060, %v5059
        %v5062 = vsel %vm4024, %v5061, 0
        %v5065 = vsel %vm4027, %v5047, 0
        %5067 = vmatprep.subr.mxu0 0.0
        %5068 = vmatpush1.msra.mxu0 %v5045
        %5069 = vmatprep.subr.mxu0 0.0
        %5070 = vmatpush1.msra.mxu0 %v5046
        %5071 = vmatprep.subr.mxu0 0.0
        %5072 = vmatpush1.msra.mxu0 %v5065
        %5073 = vmatprep.subr.mxu0 0.0
        %5074 = vmatpush1.msra.mxu0 0.0
        %5075 = vmatprep.subr.mxu0 0.0
        %5076 = vmatpush1.msra.mxu0 0.0
        %5077 = vmatprep.subr.mxu0 0.0
        %5078 = vmatpush1.msra.mxu0 0.0
        %5079 = vmatprep.subr.mxu0 0.0
        %5080 = vmatpush1.msra.mxu0 0.0
        %5081 = vmatprep.subr.mxu0 0.0
        %5082 = vmatpush1.msra.mxu0 0.0
        %5083 = vmatprep.subr.mxu0 0.0
        %5084 = vmatpush1.msra.mxu0 0.0
        %5085 = vmatprep.subr.mxu0 0.0
        %5086 = vmatpush1.msra.mxu0 0.0
        %5087 = vmatprep.subr.mxu0 0.0
        %5088 = vmatpush1.msra.mxu0 0.0
        %5089 = vmatprep.subr.mxu0 0.0
        %5090 = vmatpush1.msra.mxu0 0.0
        %5091 = vmatprep.subr.mxu0 0.0
        %5092 = vmatpush1.msra.mxu0 0.0
        %5093 = vmatprep.subr.mxu0 0.0
        %5094 = vmatpush1.msra.mxu0 0.0
        %5095 = vmatprep.subr.mxu0 0.0
        %5096 = vmatpush1.msra.mxu0 0.0
        %5097 = vmatprep.subr.mxu0 0.0
        %5098 = vmatpush1.msra.mxu0 0.0
        %5099 = vmatprep.subr.mxu0 0.0
        %5100 = vmatpush1.msra.mxu0 0.0
        %5101 = vmatprep.subr.mxu0 0.0
        %5102 = vmatpush1.msra.mxu0 0.0
        %5103 = vmatprep.subr.mxu0 0.0
        %5104 = vmatpush1.msra.mxu0 0.0
        %5105 = vmatprep.subr.mxu0 0.0
        %5106 = vmatpush1.msra.mxu0 0.0
        %5107 = vmatprep.subr.mxu0 0.0
        %5108 = vmatpush1.msra.mxu0 0.0
        %5109 = vmatprep.subr.mxu0 0.0
        %5110 = vmatpush1.msra.mxu0 0.0
        %5111 = vmatprep.subr.mxu0 0.0
        %5112 = vmatpush1.msra.mxu0 0.0
        %5113 = vmatprep.subr.mxu0 0.0
        %5114 = vmatpush1.msra.mxu0 0.0
        %5115 = vmatprep.subr.mxu0 0.0
        %5116 = vmatpush1.msra.mxu0 0.0
        %5117 = vmatprep.subr.mxu0 0.0
        %5118 = vmatpush1.msra.mxu0 0.0
        %5119 = vmatprep.subr.mxu0 0.0
        %5120 = vmatpush1.msra.mxu0 0.0
        %5121 = vmatprep.subr.mxu0 0.0
        %5122 = vmatpush1.msra.mxu0 0.0
        %5123 = vmatprep.subr.mxu0 0.0
        %5124 = vmatpush1.msra.mxu0 0.0
        %5125 = vmatprep.subr.mxu0 0.0
        %5126 = vmatpush1.msra.mxu0 0.0
        %5127 = vmatprep.subr.mxu0 0.0
        %5128 = vmatpush1.msra.mxu0 0.0
        %5129 = vmatprep.subr.mxu0 0.0
        %5130 = vmatpush1.msra.mxu0 0.0
        %5131 = vmatprep.mubr.f32.mxu0 0.0
        %5132 = vmatmul.mubr.f32.gmra.mrb[0].mxu0 %v5062
        %v5133 = vpop.f32.mrb[0].mxu0
        %v5134 = vadd.f32 0.0, %v5133
        %v5135 = vpop.f32.mrb[0].mxu0
        %5136 = vdwg.mxu0
        %v5137 = vadd.f32 %v5043, %v5134
        %s5138 = scalar_lea.vmem %s3, 288
        %v5139 = vld [vmem:[%s5138] sm:$0xff]
        %v5140 = vld [vmem:[%s5138 + $0x8] sm:$0xff]
        %v5141 = vld [vmem:[%s5138 + $0x10] sm:$0x7f]
        %v5142 = vrot.slane %v3965, 4
        %v5143 = vrot.slane %v3968, 3
        %v5144 = vsel %vm4004, %v5143, %v5142
        %v5145 = vrot.slane %v3971, 2
        %v5146 = vsel %vm4007, %v5145, %v5144
        %v5147 = vrot.slane %v3974, 1
        %v5148 = vsel %vm4010, %v5147, %v5146
        %v5149 = vsel %vm4013, %v3977, %v5148
        %v5150 = vrot.slane %v3980, 7
        %v5151 = vsel %vm4016, %v5150, %v5149
        %v5152 = vrot.slane %v3983, 6
        %v5153 = vsel %vm4019, %v5152, %v5151
        %v5154 = vrot.slane %v3986, 5
        %v5155 = vsel %vm4022, %v5154, %v5153
        %v5156 = vsel %vm4024, %v5155, 0
        %v5159 = vsel %vm4027, %v5141, 0
        %5161 = vmatprep.subr.mxu0 0.0
        %5162 = vmatpush1.msra.mxu0 %v5139
        %5163 = vmatprep.subr.mxu0 0.0
        %5164 = vmatpush1.msra.mxu0 %v5140
        %5165 = vmatprep.subr.mxu0 0.0
        %5166 = vmatpush1.msra.mxu0 %v5159
        %5167 = vmatprep.subr.mxu0 0.0
        %5168 = vmatpush1.msra.mxu0 0.0
        %5169 = vmatprep.subr.mxu0 0.0
        %5170 = vmatpush1.msra.mxu0 0.0
        %5171 = vmatprep.subr.mxu0 0.0
        %5172 = vmatpush1.msra.mxu0 0.0
        %5173 = vmatprep.subr.mxu0 0.0
        %5174 = vmatpush1.msra.mxu0 0.0
        %5175 = vmatprep.subr.mxu0 0.0
        %5176 = vmatpush1.msra.mxu0 0.0
        %5177 = vmatprep.subr.mxu0 0.0
        %5178 = vmatpush1.msra.mxu0 0.0
        %5179 = vmatprep.subr.mxu0 0.0
        %5180 = vmatpush1.msra.mxu0 0.0
        %5181 = vmatprep.subr.mxu0 0.0
        %5182 = vmatpush1.msra.mxu0 0.0
        %5183 = vmatprep.subr.mxu0 0.0
        %5184 = vmatpush1.msra.mxu0 0.0
        %5185 = vmatprep.subr.mxu0 0.0
        %5186 = vmatpush1.msra.mxu0 0.0
        %5187 = vmatprep.subr.mxu0 0.0
        %5188 = vmatpush1.msra.mxu0 0.0
        %5189 = vmatprep.subr.mxu0 0.0
        %5190 = vmatpush1.msra.mxu0 0.0
        %5191 = vmatprep.subr.mxu0 0.0
        %5192 = vmatpush1.msra.mxu0 0.0
        %5193 = vmatprep.subr.mxu0 0.0
        %5194 = vmatpush1.msra.mxu0 0.0
        %5195 = vmatprep.subr.mxu0 0.0
        %5196 = vmatpush1.msra.mxu0 0.0
        %5197 = vmatprep.subr.mxu0 0.0
        %5198 = vmatpush1.msra.mxu0 0.0
        %5199 = vmatprep.subr.mxu0 0.0
        %5200 = vmatpush1.msra.mxu0 0.0
        %5201 = vmatprep.subr.mxu0 0.0
        %5202 = vmatpush1.msra.mxu0 0.0
        %5203 = vmatprep.subr.mxu0 0.0
        %5204 = vmatpush1.msra.mxu0 0.0
        %5205 = vmatprep.subr.mxu0 0.0
        %5206 = vmatpush1.msra.mxu0 0.0
        %5207 = vmatprep.subr.mxu0 0.0
        %5208 = vmatpush1.msra.mxu0 0.0
        %5209 = vmatprep.subr.mxu0 0.0
        %5210 = vmatpush1.msra.mxu0 0.0
        %5211 = vmatprep.subr.mxu0 0.0
        %5212 = vmatpush1.msra.mxu0 0.0
        %5213 = vmatprep.subr.mxu0 0.0
        %5214 = vmatpush1.msra.mxu0 0.0
        %5215 = vmatprep.subr.mxu0 0.0
        %5216 = vmatpush1.msra.mxu0 0.0
        %5217 = vmatprep.subr.mxu0 0.0
        %5218 = vmatpush1.msra.mxu0 0.0
        %5219 = vmatprep.subr.mxu0 0.0
        %5220 = vmatpush1.msra.mxu0 0.0
        %5221 = vmatprep.subr.mxu0 0.0
        %5222 = vmatpush1.msra.mxu0 0.0
        %5223 = vmatprep.subr.mxu0 0.0
        %5224 = vmatpush1.msra.mxu0 0.0
        %5225 = vmatprep.mubr.f32.mxu0 0.0
        %5226 = vmatmul.mubr.f32.gmra.mrb[0].mxu0 %v5156
        %v5227 = vpop.f32.mrb[0].mxu0
        %v5228 = vadd.f32 0.0, %v5227
        %v5229 = vpop.f32.mrb[0].mxu0
        %5230 = vdwg.mxu0
        %v5231 = vadd.f32 %v5137, %v5228
        %s5232 = scalar_lea.vmem %s3, 312
        %v5233 = vld [vmem:[%s5232] sm:$0xff]
        %v5234 = vld [vmem:[%s5232 + $0x8] sm:$0xff]
        %v5235 = vld [vmem:[%s5232 + $0x10] sm:$0x7f]
        %v5236 = vrot.slane %v3965, 5
        %v5237 = vrot.slane %v3968, 4
        %v5238 = vsel %vm4004, %v5237, %v5236
        %v5239 = vrot.slane %v3971, 3
        %v5240 = vsel %vm4007, %v5239, %v5238
        %v5241 = vrot.slane %v3974, 2
        %v5242 = vsel %vm4010, %v5241, %v5240
        %v5243 = vrot.slane %v3977, 1
        %v5244 = vsel %vm4013, %v5243, %v5242
        %v5245 = vsel %vm4016, %v3980, %v5244
        %v5246 = vrot.slane %v3983, 7
        %v5247 = vsel %vm4019, %v5246, %v5245
        %v5248 = vrot.slane %v3986, 6
        %v5249 = vsel %vm4022, %v5248, %v5247
        %v5250 = vsel %vm4024, %v5249, 0
        %v5253 = vsel %vm4027, %v5235, 0
        %5255 = vmatprep.subr.mxu0 0.0
        %5256 = vmatpush1.msra.mxu0 %v5233
        %5257 = vmatprep.subr.mxu0 0.0
        %5258 = vmatpush1.msra.mxu0 %v5234
        %5259 = vmatprep.subr.mxu0 0.0
        %5260 = vmatpush1.msra.mxu0 %v5253
        %5261 = vmatprep.subr.mxu0 0.0
        %5262 = vmatpush1.msra.mxu0 0.0
        %5263 = vmatprep.subr.mxu0 0.0
        %5264 = vmatpush1.msra.mxu0 0.0
        %5265 = vmatprep.subr.mxu0 0.0
        %5266 = vmatpush1.msra.mxu0 0.0
        %5267 = vmatprep.subr.mxu0 0.0
        %5268 = vmatpush1.msra.mxu0 0.0
        %5269 = vmatprep.subr.mxu0 0.0
        %5270 = vmatpush1.msra.mxu0 0.0
        %5271 = vmatprep.subr.mxu0 0.0
        %5272 = vmatpush1.msra.mxu0 0.0
        %5273 = vmatprep.subr.mxu0 0.0
        %5274 = vmatpush1.msra.mxu0 0.0
        %5275 = vmatprep.subr.mxu0 0.0
        %5276 = vmatpush1.msra.mxu0 0.0
        %5277 = vmatprep.subr.mxu0 0.0
        %5278 = vmatpush1.msra.mxu0 0.0
        %5279 = vmatprep.subr.mxu0 0.0
        %5280 = vmatpush1.msra.mxu0 0.0
        %5281 = vmatprep.subr.mxu0 0.0
        %5282 = vmatpush1.msra.mxu0 0.0
        %5283 = vmatprep.subr.mxu0 0.0
        %5284 = vmatpush1.msra.mxu0 0.0
        %5285 = vmatprep.subr.mxu0 0.0
        %5286 = vmatpush1.msra.mxu0 0.0
        %5287 = vmatprep.subr.mxu0 0.0
        %5288 = vmatpush1.msra.mxu0 0.0
        %5289 = vmatprep.subr.mxu0 0.0
        %5290 = vmatpush1.msra.mxu0 0.0
        %5291 = vmatprep.subr.mxu0 0.0
        %5292 = vmatpush1.msra.mxu0 0.0
        %5293 = vmatprep.subr.mxu0 0.0
        %5294 = vmatpush1.msra.mxu0 0.0
        %5295 = vmatprep.subr.mxu0 0.0
        %5296 = vmatpush1.msra.mxu0 0.0
        %5297 = vmatprep.subr.mxu0 0.0
        %5298 = vmatpush1.msra.mxu0 0.0
        %5299 = vmatprep.subr.mxu0 0.0
        %5300 = vmatpush1.msra.mxu0 0.0
        %5301 = vmatprep.subr.mxu0 0.0
        %5302 = vmatpush1.msra.mxu0 0.0
        %5303 = vmatprep.subr.mxu0 0.0
        %5304 = vmatpush1.msra.mxu0 0.0
        %5305 = vmatprep.subr.mxu0 0.0
        %5306 = vmatpush1.msra.mxu0 0.0
        %5307 = vmatprep.subr.mxu0 0.0
        %5308 = vmatpush1.msra.mxu0 0.0
        %5309 = vmatprep.subr.mxu0 0.0
        %5310 = vmatpush1.msra.mxu0 0.0
        %5311 = vmatprep.subr.mxu0 0.0
        %5312 = vmatpush1.msra.mxu0 0.0
        %5313 = vmatprep.subr.mxu0 0.0
        %5314 = vmatpush1.msra.mxu0 0.0
        %5315 = vmatprep.subr.mxu0 0.0
        %5316 = vmatpush1.msra.mxu0 0.0
        %5317 = vmatprep.subr.mxu0 0.0
        %5318 = vmatpush1.msra.mxu0 0.0
        %5319 = vmatprep.mubr.f32.mxu0 0.0
        %5320 = vmatmul.mubr.f32.gmra.mrb[0].mxu0 %v5250
        %v5321 = vpop.f32.mrb[0].mxu0
        %v5322 = vadd.f32 0.0, %v5321
        %v5323 = vpop.f32.mrb[0].mxu0
        %5324 = vdwg.mxu0
        %v5325 = vadd.f32 %v5231, %v5322
        %s5326 = scalar_lea.vmem %s3, 336
        %v5327 = vld [vmem:[%s5326] sm:$0xff]
        %v5328 = vld [vmem:[%s5326 + $0x8] sm:$0xff]
        %v5329 = vld [vmem:[%s5326 + $0x10] sm:$0x7f]
        %v5330 = vrot.slane %v3965, 6
        %v5331 = vrot.slane %v3968, 5
        %v5332 = vsel %vm4004, %v5331, %v5330
        %v5333 = vrot.slane %v3971, 4
        %v5334 = vsel %vm4007, %v5333, %v5332
        %v5335 = vrot.slane %v3974, 3
        %v5336 = vsel %vm4010, %v5335, %v5334
        %v5337 = vrot.slane %v3977, 2
        %v5338 = vsel %vm4013, %v5337, %v5336
        %v5339 = vrot.slane %v3980, 1
        %v5340 = vsel %vm4016, %v5339, %v5338
        %v5341 = vsel %vm4019, %v3983, %v5340
        %v5342 = vrot.slane %v3986, 7
        %v5343 = vsel %vm4022, %v5342, %v5341
        %v5344 = vsel %vm4024, %v5343, 0
        %v5347 = vsel %vm4027, %v5329, 0
        %5349 = vmatprep.subr.mxu0 0.0
        %5350 = vmatpush1.msra.mxu0 %v5327
        %5351 = vmatprep.subr.mxu0 0.0
        %5352 = vmatpush1.msra.mxu0 %v5328
        %5353 = vmatprep.subr.mxu0 0.0
        %5354 = vmatpush1.msra.mxu0 %v5347
        %5355 = vmatprep.subr.mxu0 0.0
        %5356 = vmatpush1.msra.mxu0 0.0
        %5357 = vmatprep.subr.mxu0 0.0
        %5358 = vmatpush1.msra.mxu0 0.0
        %5359 = vmatprep.subr.mxu0 0.0
        %5360 = vmatpush1.msra.mxu0 0.0
        %5361 = vmatprep.subr.mxu0 0.0
        %5362 = vmatpush1.msra.mxu0 0.0
        %5363 = vmatprep.subr.mxu0 0.0
        %5364 = vmatpush1.msra.mxu0 0.0
        %5365 = vmatprep.subr.mxu0 0.0
        %5366 = vmatpush1.msra.mxu0 0.0
        %5367 = vmatprep.subr.mxu0 0.0
        %5368 = vmatpush1.msra.mxu0 0.0
        %5369 = vmatprep.subr.mxu0 0.0
        %5370 = vmatpush1.msra.mxu0 0.0
        %5371 = vmatprep.subr.mxu0 0.0
        %5372 = vmatpush1.msra.mxu0 0.0
        %5373 = vmatprep.subr.mxu0 0.0
        %5374 = vmatpush1.msra.mxu0 0.0
        %5375 = vmatprep.subr.mxu0 0.0
        %5376 = vmatpush1.msra.mxu0 0.0
        %5377 = vmatprep.subr.mxu0 0.0
        %5378 = vmatpush1.msra.mxu0 0.0
        %5379 = vmatprep.subr.mxu0 0.0
        %5380 = vmatpush1.msra.mxu0 0.0
        %5381 = vmatprep.subr.mxu0 0.0
        %5382 = vmatpush1.msra.mxu0 0.0
        %5383 = vmatprep.subr.mxu0 0.0
        %5384 = vmatpush1.msra.mxu0 0.0
        %5385 = vmatprep.subr.mxu0 0.0
        %5386 = vmatpush1.msra.mxu0 0.0
        %5387 = vmatprep.subr.mxu0 0.0
        %5388 = vmatpush1.msra.mxu0 0.0
        %5389 = vmatprep.subr.mxu0 0.0
        %5390 = vmatpush1.msra.mxu0 0.0
        %5391 = vmatprep.subr.mxu0 0.0
        %5392 = vmatpush1.msra.mxu0 0.0
        %5393 = vmatprep.subr.mxu0 0.0
        %5394 = vmatpush1.msra.mxu0 0.0
        %5395 = vmatprep.subr.mxu0 0.0
        %5396 = vmatpush1.msra.mxu0 0.0
        %5397 = vmatprep.subr.mxu0 0.0
        %5398 = vmatpush1.msra.mxu0 0.0
        %5399 = vmatprep.subr.mxu0 0.0
        %5400 = vmatpush1.msra.mxu0 0.0
        %5401 = vmatprep.subr.mxu0 0.0
        %5402 = vmatpush1.msra.mxu0 0.0
        %5403 = vmatprep.subr.mxu0 0.0
        %5404 = vmatpush1.msra.mxu0 0.0
        %5405 = vmatprep.subr.mxu0 0.0
        %5406 = vmatpush1.msra.mxu0 0.0
        %5407 = vmatprep.subr.mxu0 0.0
        %5408 = vmatpush1.msra.mxu0 0.0
        %5409 = vmatprep.subr.mxu0 0.0
        %5410 = vmatpush1.msra.mxu0 0.0
        %5411 = vmatprep.subr.mxu0 0.0
        %5412 = vmatpush1.msra.mxu0 0.0
        %5413 = vmatprep.mubr.f32.mxu0 0.0
        %5414 = vmatmul.mubr.f32.gmra.mrb[0].mxu0 %v5344
        %v5415 = vpop.f32.mrb[0].mxu0
        %v5416 = vadd.f32 0.0, %v5415
        %v5417 = vpop.f32.mrb[0].mxu0
        %5418 = vdwg.mxu0
        %v5419 = vadd.f32 %v5325, %v5416
        %s5420 = scalar_lea.vmem %s3, 360
        %v5421 = vld [vmem:[%s5420] sm:$0xff]
        %v5422 = vld [vmem:[%s5420 + $0x8] sm:$0xff]
        %v5423 = vld [vmem:[%s5420 + $0x10] sm:$0x7f]
        %v5424 = vrot.slane %v3965, 7
        %v5425 = vrot.slane %v3968, 6
        %v5426 = vsel %vm4004, %v5425, %v5424
        %v5427 = vrot.slane %v3971, 5
        %v5428 = vsel %vm4007, %v5427, %v5426
        %v5429 = vrot.slane %v3974, 4
        %v5430 = vsel %vm4010, %v5429, %v5428
        %v5431 = vrot.slane %v3977, 3
        %v5432 = vsel %vm4013, %v5431, %v5430
        %v5433 = vrot.slane %v3980, 2
        %v5434 = vsel %vm4016, %v5433, %v5432
        %v5435 = vrot.slane %v3983, 1
        %v5436 = vsel %vm4019, %v5435, %v5434
        %v5437 = vsel %vm4022, %v3986, %v5436
        %v5438 = vsel %vm4024, %v5437, 0
        %v5441 = vsel %vm4027, %v5423, 0
        %5443 = vmatprep.subr.mxu0 0.0
        %5444 = vmatpush1.msra.mxu0 %v5421
        %5445 = vmatprep.subr.mxu0 0.0
        %5446 = vmatpush1.msra.mxu0 %v5422
        %5447 = vmatprep.subr.mxu0 0.0
        %5448 = vmatpush1.msra.mxu0 %v5441
        %5449 = vmatprep.subr.mxu0 0.0
        %5450 = vmatpush1.msra.mxu0 0.0
        %5451 = vmatprep.subr.mxu0 0.0
        %5452 = vmatpush1.msra.mxu0 0.0
        %5453 = vmatprep.subr.mxu0 0.0
        %5454 = vmatpush1.msra.mxu0 0.0
        %5455 = vmatprep.subr.mxu0 0.0
        %5456 = vmatpush1.msra.mxu0 0.0
        %5457 = vmatprep.subr.mxu0 0.0
        %5458 = vmatpush1.msra.mxu0 0.0
        %5459 = vmatprep.subr.mxu0 0.0
        %5460 = vmatpush1.msra.mxu0 0.0
        %5461 = vmatprep.subr.mxu0 0.0
        %5462 = vmatpush1.msra.mxu0 0.0
        %5463 = vmatprep.subr.mxu0 0.0
        %5464 = vmatpush1.msra.mxu0 0.0
        %5465 = vmatprep.subr.mxu0 0.0
        %5466 = vmatpush1.msra.mxu0 0.0
        %5467 = vmatprep.subr.mxu0 0.0
        %5468 = vmatpush1.msra.mxu0 0.0
        %5469 = vmatprep.subr.mxu0 0.0
        %5470 = vmatpush1.msra.mxu0 0.0
        %5471 = vmatprep.subr.mxu0 0.0
        %5472 = vmatpush1.msra.mxu0 0.0
        %5473 = vmatprep.subr.mxu0 0.0
        %5474 = vmatpush1.msra.mxu0 0.0
        %5475 = vmatprep.subr.mxu0 0.0
        %5476 = vmatpush1.msra.mxu0 0.0
        %5477 = vmatprep.subr.mxu0 0.0
        %5478 = vmatpush1.msra.mxu0 0.0
        %5479 = vmatprep.subr.mxu0 0.0
        %5480 = vmatpush1.msra.mxu0 0.0
        %5481 = vmatprep.subr.mxu0 0.0
        %5482 = vmatpush1.msra.mxu0 0.0
        %5483 = vmatprep.subr.mxu0 0.0
        %5484 = vmatpush1.msra.mxu0 0.0
        %5485 = vmatprep.subr.mxu0 0.0
        %5486 = vmatpush1.msra.mxu0 0.0
        %5487 = vmatprep.subr.mxu0 0.0
        %5488 = vmatpush1.msra.mxu0 0.0
        %5489 = vmatprep.subr.mxu0 0.0
        %5490 = vmatpush1.msra.mxu0 0.0
        %5491 = vmatprep.subr.mxu0 0.0
        %5492 = vmatpush1.msra.mxu0 0.0
        %5493 = vmatprep.subr.mxu0 0.0
        %5494 = vmatpush1.msra.mxu0 0.0
        %5495 = vmatprep.subr.mxu0 0.0
        %5496 = vmatpush1.msra.mxu0 0.0
        %5497 = vmatprep.subr.mxu0 0.0
        %5498 = vmatpush1.msra.mxu0 0.0
        %5499 = vmatprep.subr.mxu0 0.0
        %5500 = vmatpush1.msra.mxu0 0.0
        %5501 = vmatprep.subr.mxu0 0.0
        %5502 = vmatpush1.msra.mxu0 0.0
        %5503 = vmatprep.subr.mxu0 0.0
        %5504 = vmatpush1.msra.mxu0 0.0
        %5505 = vmatprep.subr.mxu0 0.0
        %5506 = vmatpush1.msra.mxu0 0.0
        %5507 = vmatprep.mubr.f32.mxu0 0.0
        %5508 = vmatmul.mubr.f32.gmra.mrb[0].mxu0 %v5438
        %v5509 = vpop.f32.mrb[0].mxu0
        %v5510 = vadd.f32 0.0, %v5509
        %v5511 = vpop.f32.mrb[0].mxu0
        %5512 = vdwg.mxu0
        %v5513 = vadd.f32 %v5419, %v5510
        %s5514 = scalar_lea.vmem %s3, 384
        %v5515 = vld [vmem:[%s5514] sm:$0xff]
        %v5516 = vld [vmem:[%s5514 + $0x8] sm:$0xff]
        %v5517 = vld [vmem:[%s5514 + $0x10] sm:$0x7f]
        %v5526 = vrot.slane %v3969, 7
        %v5527 = vsel %vm4004, %v5526, %v3966
        %v5528 = vrot.slane %v3972, 6
        %v5529 = vsel %vm4007, %v5528, %v5527
        %v5530 = vrot.slane %v3975, 5
        %v5531 = vsel %vm4010, %v5530, %v5529
        %v5532 = vrot.slane %v3978, 4
        %v5533 = vsel %vm4013, %v5532, %v5531
        %v5534 = vrot.slane %v3981, 3
        %v5535 = vsel %vm4016, %v5534, %v5533
        %v5536 = vrot.slane %v3984, 2
        %v5537 = vsel %vm4019, %v5536, %v5535
        %v5538 = vrot.slane %v3987, 1
        %v5539 = vsel %vm4022, %v5538, %v5537
        %v5540 = vsel %vm4024, %v5539, 0
        %v5543 = vsel %vm4027, %v5517, 0
        %5545 = vmatprep.subr.mxu0 0.0
        %5546 = vmatpush1.msra.mxu0 %v5515
        %5547 = vmatprep.subr.mxu0 0.0
        %5548 = vmatpush1.msra.mxu0 %v5516
        %5549 = vmatprep.subr.mxu0 0.0
        %5550 = vmatpush1.msra.mxu0 %v5543
        %5551 = vmatprep.subr.mxu0 0.0
        %5552 = vmatpush1.msra.mxu0 0.0
        %5553 = vmatprep.subr.mxu0 0.0
        %5554 = vmatpush1.msra.mxu0 0.0
        %5555 = vmatprep.subr.mxu0 0.0
        %5556 = vmatpush1.msra.mxu0 0.0
        %5557 = vmatprep.subr.mxu0 0.0
        %5558 = vmatpush1.msra.mxu0 0.0
        %5559 = vmatprep.subr.mxu0 0.0
        %5560 = vmatpush1.msra.mxu0 0.0
        %5561 = vmatprep.subr.mxu0 0.0
        %5562 = vmatpush1.msra.mxu0 0.0
        %5563 = vmatprep.subr.mxu0 0.0
        %5564 = vmatpush1.msra.mxu0 0.0
        %5565 = vmatprep.subr.mxu0 0.0
        %5566 = vmatpush1.msra.mxu0 0.0
        %5567 = vmatprep.subr.mxu0 0.0
        %5568 = vmatpush1.msra.mxu0 0.0
        %5569 = vmatprep.subr.mxu0 0.0
        %5570 = vmatpush1.msra.mxu0 0.0
        %5571 = vmatprep.subr.mxu0 0.0
        %5572 = vmatpush1.msra.mxu0 0.0
        %5573 = vmatprep.subr.mxu0 0.0
        %5574 = vmatpush1.msra.mxu0 0.0
        %5575 = vmatprep.subr.mxu0 0.0
        %5576 = vmatpush1.msra.mxu0 0.0
        %5577 = vmatprep.subr.mxu0 0.0
        %5578 = vmatpush1.msra.mxu0 0.0
        %5579 = vmatprep.subr.mxu0 0.0
        %5580 = vmatpush1.msra.mxu0 0.0
        %5581 = vmatprep.subr.mxu0 0.0
        %5582 = vmatpush1.msra.mxu0 0.0
        %5583 = vmatprep.subr.mxu0 0.0
        %5584 = vmatpush1.msra.mxu0 0.0
        %5585 = vmatprep.subr.mxu0 0.0
        %5586 = vmatpush1.msra.mxu0 0.0
        %5587 = vmatprep.subr.mxu0 0.0
        %5588 = vmatpush1.msra.mxu0 0.0
        %5589 = vmatprep.subr.mxu0 0.0
        %5590 = vmatpush1.msra.mxu0 0.0
        %5591 = vmatprep.subr.mxu0 0.0
        %5592 = vmatpush1.msra.mxu0 0.0
        %5593 = vmatprep.subr.mxu0 0.0
        %5594 = vmatpush1.msra.mxu0 0.0
        %5595 = vmatprep.subr.mxu0 0.0
        %5596 = vmatpush1.msra.mxu0 0.0
        %5597 = vmatprep.subr.mxu0 0.0
        %5598 = vmatpush1.msra.mxu0 0.0
        %5599 = vmatprep.subr.mxu0 0.0
        %5600 = vmatpush1.msra.mxu0 0.0
        %5601 = vmatprep.subr.mxu0 0.0
        %5602 = vmatpush1.msra.mxu0 0.0
        %5603 = vmatprep.subr.mxu0 0.0
        %5604 = vmatpush1.msra.mxu0 0.0
        %5605 = vmatprep.subr.mxu0 0.0
        %5606 = vmatpush1.msra.mxu0 0.0
        %5607 = vmatprep.subr.mxu0 0.0
        %5608 = vmatpush1.msra.mxu0 0.0
        %5609 = vmatprep.mubr.f32.mxu0 0.0
        %5610 = vmatmul.mubr.f32.gmra.mrb[0].mxu0 %v5540
        %v5611 = vpop.f32.mrb[0].mxu0
        %v5612 = vadd.f32 0.0, %v5611
        %v5613 = vpop.f32.mrb[0].mxu0
        %5614 = vdwg.mxu0
        %v5615 = vadd.f32 %v5513, %v5612
        %s5616 = scalar_lea.vmem %s3, 408
        %v5617 = vld [vmem:[%s5616] sm:$0xff]
        %v5618 = vld [vmem:[%s5616 + $0x8] sm:$0xff]
        %v5619 = vld [vmem:[%s5616 + $0x10] sm:$0x7f]
        %v5620 = vrot.slane %v3966, 1
        %v5621 = vsel %vm4004, %v3969, %v5620
        %v5622 = vrot.slane %v3972, 7
        %v5623 = vsel %vm4007, %v5622, %v5621
        %v5624 = vrot.slane %v3975, 6
        %v5625 = vsel %vm4010, %v5624, %v5623
        %v5626 = vrot.slane %v3978, 5
        %v5627 = vsel %vm4013, %v5626, %v5625
        %v5628 = vrot.slane %v3981, 4
        %v5629 = vsel %vm4016, %v5628, %v5627
        %v5630 = vrot.slane %v3984, 3
        %v5631 = vsel %vm4019, %v5630, %v5629
        %v5632 = vrot.slane %v3987, 2
        %v5633 = vsel %vm4022, %v5632, %v5631
        %v5634 = vsel %vm4024, %v5633, 0
        %v5637 = vsel %vm4027, %v5619, 0
        %5639 = vmatprep.subr.mxu0 0.0
        %5640 = vmatpush1.msra.mxu0 %v5617
        %5641 = vmatprep.subr.mxu0 0.0
        %5642 = vmatpush1.msra.mxu0 %v5618
        %5643 = vmatprep.subr.mxu0 0.0
        %5644 = vmatpush1.msra.mxu0 %v5637
        %5645 = vmatprep.subr.mxu0 0.0
        %5646 = vmatpush1.msra.mxu0 0.0
        %5647 = vmatprep.subr.mxu0 0.0
        %5648 = vmatpush1.msra.mxu0 0.0
        %5649 = vmatprep.subr.mxu0 0.0
        %5650 = vmatpush1.msra.mxu0 0.0
        %5651 = vmatprep.subr.mxu0 0.0
        %5652 = vmatpush1.msra.mxu0 0.0
        %5653 = vmatprep.subr.mxu0 0.0
        %5654 = vmatpush1.msra.mxu0 0.0
        %5655 = vmatprep.subr.mxu0 0.0
        %5656 = vmatpush1.msra.mxu0 0.0
        %5657 = vmatprep.subr.mxu0 0.0
        %5658 = vmatpush1.msra.mxu0 0.0
        %5659 = vmatprep.subr.mxu0 0.0
        %5660 = vmatpush1.msra.mxu0 0.0
        %5661 = vmatprep.subr.mxu0 0.0
        %5662 = vmatpush1.msra.mxu0 0.0
        %5663 = vmatprep.subr.mxu0 0.0
        %5664 = vmatpush1.msra.mxu0 0.0
        %5665 = vmatprep.subr.mxu0 0.0
        %5666 = vmatpush1.msra.mxu0 0.0
        %5667 = vmatprep.subr.mxu0 0.0
        %5668 = vmatpush1.msra.mxu0 0.0
        %5669 = vmatprep.subr.mxu0 0.0
        %5670 = vmatpush1.msra.mxu0 0.0
        %5671 = vmatprep.subr.mxu0 0.0
        %5672 = vmatpush1.msra.mxu0 0.0
        %5673 = vmatprep.subr.mxu0 0.0
        %5674 = vmatpush1.msra.mxu0 0.0
        %5675 = vmatprep.subr.mxu0 0.0
        %5676 = vmatpush1.msra.mxu0 0.0
        %5677 = vmatprep.subr.mxu0 0.0
        %5678 = vmatpush1.msra.mxu0 0.0
        %5679 = vmatprep.subr.mxu0 0.0
        %5680 = vmatpush1.msra.mxu0 0.0
        %5681 = vmatprep.subr.mxu0 0.0
        %5682 = vmatpush1.msra.mxu0 0.0
        %5683 = vmatprep.subr.mxu0 0.0
        %5684 = vmatpush1.msra.mxu0 0.0
        %5685 = vmatprep.subr.mxu0 0.0
        %5686 = vmatpush1.msra.mxu0 0.0
        %5687 = vmatprep.subr.mxu0 0.0
        %5688 = vmatpush1.msra.mxu0 0.0
        %5689 = vmatprep.subr.mxu0 0.0
        %5690 = vmatpush1.msra.mxu0 0.0
        %5691 = vmatprep.subr.mxu0 0.0
        %5692 = vmatpush1.msra.mxu0 0.0
        %5693 = vmatprep.subr.mxu0 0.0
        %5694 = vmatpush1.msra.mxu0 0.0
        %5695 = vmatprep.subr.mxu0 0.0
        %5696 = vmatpush1.msra.mxu0 0.0
        %5697 = vmatprep.subr.mxu0 0.0
        %5698 = vmatpush1.msra.mxu0 0.0
        %5699 = vmatprep.subr.mxu0 0.0
        %5700 = vmatpush1.msra.mxu0 0.0
        %5701 = vmatprep.subr.mxu0 0.0
        %5702 = vmatpush1.msra.mxu0 0.0
        %5703 = vmatprep.mubr.f32.mxu0 0.0
        %5704 = vmatmul.mubr.f32.gmra.mrb[0].mxu0 %v5634
        %v5705 = vpop.f32.mrb[0].mxu0
        %v5706 = vadd.f32 0.0, %v5705
        %v5707 = vpop.f32.mrb[0].mxu0
        %5708 = vdwg.mxu0
        %v5709 = vadd.f32 %v5615, %v5706
        %s5710 = scalar_lea.vmem %s3, 432
        %v5711 = vld [vmem:[%s5710] sm:$0xff]
        %v5712 = vld [vmem:[%s5710 + $0x8] sm:$0xff]
        %v5713 = vld [vmem:[%s5710 + $0x10] sm:$0x7f]
        %v5714 = vrot.slane %v3966, 2
        %v5715 = vrot.slane %v3969, 1
        %v5716 = vsel %vm4004, %v5715, %v5714
        %v5717 = vsel %vm4007, %v3972, %v5716
        %v5718 = vrot.slane %v3975, 7
        %v5719 = vsel %vm4010, %v5718, %v5717
        %v5720 = vrot.slane %v3978, 6
        %v5721 = vsel %vm4013, %v5720, %v5719
        %v5722 = vrot.slane %v3981, 5
        %v5723 = vsel %vm4016, %v5722, %v5721
        %v5724 = vrot.slane %v3984, 4
        %v5725 = vsel %vm4019, %v5724, %v5723
        %v5726 = vrot.slane %v3987, 3
        %v5727 = vsel %vm4022, %v5726, %v5725
        %v5728 = vsel %vm4024, %v5727, 0
        %v5731 = vsel %vm4027, %v5713, 0
        %5733 = vmatprep.subr.mxu0 0.0
        %5734 = vmatpush1.msra.mxu0 %v5711
        %5735 = vmatprep.subr.mxu0 0.0
        %5736 = vmatpush1.msra.mxu0 %v5712
        %5737 = vmatprep.subr.mxu0 0.0
        %5738 = vmatpush1.msra.mxu0 %v5731
        %5739 = vmatprep.subr.mxu0 0.0
        %5740 = vmatpush1.msra.mxu0 0.0
        %5741 = vmatprep.subr.mxu0 0.0
        %5742 = vmatpush1.msra.mxu0 0.0
        %5743 = vmatprep.subr.mxu0 0.0
        %5744 = vmatpush1.msra.mxu0 0.0
        %5745 = vmatprep.subr.mxu0 0.0
        %5746 = vmatpush1.msra.mxu0 0.0
        %5747 = vmatprep.subr.mxu0 0.0
        %5748 = vmatpush1.msra.mxu0 0.0
        %5749 = vmatprep.subr.mxu0 0.0
        %5750 = vmatpush1.msra.mxu0 0.0
        %5751 = vmatprep.subr.mxu0 0.0
        %5752 = vmatpush1.msra.mxu0 0.0
        %5753 = vmatprep.subr.mxu0 0.0
        %5754 = vmatpush1.msra.mxu0 0.0
        %5755 = vmatprep.subr.mxu0 0.0
        %5756 = vmatpush1.msra.mxu0 0.0
        %5757 = vmatprep.subr.mxu0 0.0
        %5758 = vmatpush1.msra.mxu0 0.0
        %5759 = vmatprep.subr.mxu0 0.0
        %5760 = vmatpush1.msra.mxu0 0.0
        %5761 = vmatprep.subr.mxu0 0.0
        %5762 = vmatpush1.msra.mxu0 0.0
        %5763 = vmatprep.subr.mxu0 0.0
        %5764 = vmatpush1.msra.mxu0 0.0
        %5765 = vmatprep.subr.mxu0 0.0
        %5766 = vmatpush1.msra.mxu0 0.0
        %5767 = vmatprep.subr.mxu0 0.0
        %5768 = vmatpush1.msra.mxu0 0.0
        %5769 = vmatprep.subr.mxu0 0.0
        %5770 = vmatpush1.msra.mxu0 0.0
        %5771 = vmatprep.subr.mxu0 0.0
        %5772 = vmatpush1.msra.mxu0 0.0
        %5773 = vmatprep.subr.mxu0 0.0
        %5774 = vmatpush1.msra.mxu0 0.0
        %5775 = vmatprep.subr.mxu0 0.0
        %5776 = vmatpush1.msra.mxu0 0.0
        %5777 = vmatprep.subr.mxu0 0.0
        %5778 = vmatpush1.msra.mxu0 0.0
        %5779 = vmatprep.subr.mxu0 0.0
        %5780 = vmatpush1.msra.mxu0 0.0
        %5781 = vmatprep.subr.mxu0 0.0
        %5782 = vmatpush1.msra.mxu0 0.0
        %5783 = vmatprep.subr.mxu0 0.0
        %5784 = vmatpush1.msra.mxu0 0.0
        %5785 = vmatprep.subr.mxu0 0.0
        %5786 = vmatpush1.msra.mxu0 0.0
        %5787 = vmatprep.subr.mxu0 0.0
        %5788 = vmatpush1.msra.mxu0 0.0
        %5789 = vmatprep.subr.mxu0 0.0
        %5790 = vmatpush1.msra.mxu0 0.0
        %5791 = vmatprep.subr.mxu0 0.0
        %5792 = vmatpush1.msra.mxu0 0.0
        %5793 = vmatprep.subr.mxu0 0.0
        %5794 = vmatpush1.msra.mxu0 0.0
        %5795 = vmatprep.subr.mxu0 0.0
        %5796 = vmatpush1.msra.mxu0 0.0
        %5797 = vmatprep.mubr.f32.mxu0 0.0
        %5798 = vmatmul.mubr.f32.gmra.mrb[0].mxu0 %v5728
        %v5799 = vpop.f32.mrb[0].mxu0
        %v5800 = vadd.f32 0.0, %v5799
        %v5801 = vpop.f32.mrb[0].mxu0
        %5802 = vdwg.mxu0
        %v5803 = vadd.f32 %v5709, %v5800
        %s5804 = scalar_lea.vmem %s3, 456
        %v5805 = vld [vmem:[%s5804] sm:$0xff]
        %v5806 = vld [vmem:[%s5804 + $0x8] sm:$0xff]
        %v5807 = vld [vmem:[%s5804 + $0x10] sm:$0x7f]
        %v5808 = vrot.slane %v3966, 3
        %v5809 = vrot.slane %v3969, 2
        %v5810 = vsel %vm4004, %v5809, %v5808
        %v5811 = vrot.slane %v3972, 1
        %v5812 = vsel %vm4007, %v5811, %v5810
        %v5813 = vsel %vm4010, %v3975, %v5812
        %v5814 = vrot.slane %v3978, 7
        %v5815 = vsel %vm4013, %v5814, %v5813
        %v5816 = vrot.slane %v3981, 6
        %v5817 = vsel %vm4016, %v5816, %v5815
        %v5818 = vrot.slane %v3984, 5
        %v5819 = vsel %vm4019, %v5818, %v5817
        %v5820 = vrot.slane %v3987, 4
        %v5821 = vsel %vm4022, %v5820, %v5819
        %v5822 = vsel %vm4024, %v5821, 0
        %v5825 = vsel %vm4027, %v5807, 0
        %5827 = vmatprep.subr.mxu0 0.0
        %5828 = vmatpush1.msra.mxu0 %v5805
        %5829 = vmatprep.subr.mxu0 0.0
        %5830 = vmatpush1.msra.mxu0 %v5806
        %5831 = vmatprep.subr.mxu0 0.0
        %5832 = vmatpush1.msra.mxu0 %v5825
        %5833 = vmatprep.subr.mxu0 0.0
        %5834 = vmatpush1.msra.mxu0 0.0
        %5835 = vmatprep.subr.mxu0 0.0
        %5836 = vmatpush1.msra.mxu0 0.0
        %5837 = vmatprep.subr.mxu0 0.0
        %5838 = vmatpush1.msra.mxu0 0.0
        %5839 = vmatprep.subr.mxu0 0.0
        %5840 = vmatpush1.msra.mxu0 0.0
        %5841 = vmatprep.subr.mxu0 0.0
        %5842 = vmatpush1.msra.mxu0 0.0
        %5843 = vmatprep.subr.mxu0 0.0
        %5844 = vmatpush1.msra.mxu0 0.0
        %5845 = vmatprep.subr.mxu0 0.0
        %5846 = vmatpush1.msra.mxu0 0.0
        %5847 = vmatprep.subr.mxu0 0.0
        %5848 = vmatpush1.msra.mxu0 0.0
        %5849 = vmatprep.subr.mxu0 0.0
        %5850 = vmatpush1.msra.mxu0 0.0
        %5851 = vmatprep.subr.mxu0 0.0
        %5852 = vmatpush1.msra.mxu0 0.0
        %5853 = vmatprep.subr.mxu0 0.0
        %5854 = vmatpush1.msra.mxu0 0.0
        %5855 = vmatprep.subr.mxu0 0.0
        %5856 = vmatpush1.msra.mxu0 0.0
        %5857 = vmatprep.subr.mxu0 0.0
        %5858 = vmatpush1.msra.mxu0 0.0
        %5859 = vmatprep.subr.mxu0 0.0
        %5860 = vmatpush1.msra.mxu0 0.0
        %5861 = vmatprep.subr.mxu0 0.0
        %5862 = vmatpush1.msra.mxu0 0.0
        %5863 = vmatprep.subr.mxu0 0.0
        %5864 = vmatpush1.msra.mxu0 0.0
        %5865 = vmatprep.subr.mxu0 0.0
        %5866 = vmatpush1.msra.mxu0 0.0
        %5867 = vmatprep.subr.mxu0 0.0
        %5868 = vmatpush1.msra.mxu0 0.0
        %5869 = vmatprep.subr.mxu0 0.0
        %5870 = vmatpush1.msra.mxu0 0.0
        %5871 = vmatprep.subr.mxu0 0.0
        %5872 = vmatpush1.msra.mxu0 0.0
        %5873 = vmatprep.subr.mxu0 0.0
        %5874 = vmatpush1.msra.mxu0 0.0
        %5875 = vmatprep.subr.mxu0 0.0
        %5876 = vmatpush1.msra.mxu0 0.0
        %5877 = vmatprep.subr.mxu0 0.0
        %5878 = vmatpush1.msra.mxu0 0.0
        %5879 = vmatprep.subr.mxu0 0.0
        %5880 = vmatpush1.msra.mxu0 0.0
        %5881 = vmatprep.subr.mxu0 0.0
        %5882 = vmatpush1.msra.mxu0 0.0
        %5883 = vmatprep.subr.mxu0 0.0
        %5884 = vmatpush1.msra.mxu0 0.0
        %5885 = vmatprep.subr.mxu0 0.0
        %5886 = vmatpush1.msra.mxu0 0.0
        %5887 = vmatprep.subr.mxu0 0.0
        %5888 = vmatpush1.msra.mxu0 0.0
        %5889 = vmatprep.subr.mxu0 0.0
        %5890 = vmatpush1.msra.mxu0 0.0
        %5891 = vmatprep.mubr.f32.mxu0 0.0
        %5892 = vmatmul.mubr.f32.gmra.mrb[0].mxu0 %v5822
        %v5893 = vpop.f32.mrb[0].mxu0
        %v5894 = vadd.f32 0.0, %v5893
        %v5895 = vpop.f32.mrb[0].mxu0
        %5896 = vdwg.mxu0
        %v5897 = vadd.f32 %v5803, %v5894
        %s5898 = scalar_lea.vmem %s3, 480
        %v5899 = vld [vmem:[%s5898] sm:$0xff]
        %v5900 = vld [vmem:[%s5898 + $0x8] sm:$0xff]
        %v5901 = vld [vmem:[%s5898 + $0x10] sm:$0x7f]
        %v5902 = vrot.slane %v3966, 4
        %v5903 = vrot.slane %v3969, 3
        %v5904 = vsel %vm4004, %v5903, %v5902
        %v5905 = vrot.slane %v3972, 2
        %v5906 = vsel %vm4007, %v5905, %v5904
        %v5907 = vrot.slane %v3975, 1
        %v5908 = vsel %vm4010, %v5907, %v5906
        %v5909 = vsel %vm4013, %v3978, %v5908
        %v5910 = vrot.slane %v3981, 7
        %v5911 = vsel %vm4016, %v5910, %v5909
        %v5912 = vrot.slane %v3984, 6
        %v5913 = vsel %vm4019, %v5912, %v5911
        %v5914 = vrot.slane %v3987, 5
        %v5915 = vsel %vm4022, %v5914, %v5913
        %v5916 = vsel %vm4024, %v5915, 0
        %v5919 = vsel %vm4027, %v5901, 0
        %5921 = vmatprep.subr.mxu0 0.0
        %5922 = vmatpush1.msra.mxu0 %v5899
        %5923 = vmatprep.subr.mxu0 0.0
        %5924 = vmatpush1.msra.mxu0 %v5900
        %5925 = vmatprep.subr.mxu0 0.0
        %5926 = vmatpush1.msra.mxu0 %v5919
        %5927 = vmatprep.subr.mxu0 0.0
        %5928 = vmatpush1.msra.mxu0 0.0
        %5929 = vmatprep.subr.mxu0 0.0
        %5930 = vmatpush1.msra.mxu0 0.0
        %5931 = vmatprep.subr.mxu0 0.0
        %5932 = vmatpush1.msra.mxu0 0.0
        %5933 = vmatprep.subr.mxu0 0.0
        %5934 = vmatpush1.msra.mxu0 0.0
        %5935 = vmatprep.subr.mxu0 0.0
        %5936 = vmatpush1.msra.mxu0 0.0
        %5937 = vmatprep.subr.mxu0 0.0
        %5938 = vmatpush1.msra.mxu0 0.0
        %5939 = vmatprep.subr.mxu0 0.0
        %5940 = vmatpush1.msra.mxu0 0.0
        %5941 = vmatprep.subr.mxu0 0.0
        %5942 = vmatpush1.msra.mxu0 0.0
        %5943 = vmatprep.subr.mxu0 0.0
        %5944 = vmatpush1.msra.mxu0 0.0
        %5945 = vmatprep.subr.mxu0 0.0
        %5946 = vmatpush1.msra.mxu0 0.0
        %5947 = vmatprep.subr.mxu0 0.0
        %5948 = vmatpush1.msra.mxu0 0.0
        %5949 = vmatprep.subr.mxu0 0.0
        %5950 = vmatpush1.msra.mxu0 0.0
        %5951 = vmatprep.subr.mxu0 0.0
        %5952 = vmatpush1.msra.mxu0 0.0
        %5953 = vmatprep.subr.mxu0 0.0
        %5954 = vmatpush1.msra.mxu0 0.0
        %5955 = vmatprep.subr.mxu0 0.0
        %5956 = vmatpush1.msra.mxu0 0.0
        %5957 = vmatprep.subr.mxu0 0.0
        %5958 = vmatpush1.msra.mxu0 0.0
        %5959 = vmatprep.subr.mxu0 0.0
        %5960 = vmatpush1.msra.mxu0 0.0
        %5961 = vmatprep.subr.mxu0 0.0
        %5962 = vmatpush1.msra.mxu0 0.0
        %5963 = vmatprep.subr.mxu0 0.0
        %5964 = vmatpush1.msra.mxu0 0.0
        %5965 = vmatprep.subr.mxu0 0.0
        %5966 = vmatpush1.msra.mxu0 0.0
        %5967 = vmatprep.subr.mxu0 0.0
        %5968 = vmatpush1.msra.mxu0 0.0
        %5969 = vmatprep.subr.mxu0 0.0
        %5970 = vmatpush1.msra.mxu0 0.0
        %5971 = vmatprep.subr.mxu0 0.0
        %5972 = vmatpush1.msra.mxu0 0.0
        %5973 = vmatprep.subr.mxu0 0.0
        %5974 = vmatpush1.msra.mxu0 0.0
        %5975 = vmatprep.subr.mxu0 0.0
        %5976 = vmatpush1.msra.mxu0 0.0
        %5977 = vmatprep.subr.mxu0 0.0
        %5978 = vmatpush1.msra.mxu0 0.0
        %5979 = vmatprep.subr.mxu0 0.0
        %5980 = vmatpush1.msra.mxu0 0.0
        %5981 = vmatprep.subr.mxu0 0.0
        %5982 = vmatpush1.msra.mxu0 0.0
        %5983 = vmatprep.subr.mxu0 0.0
        %5984 = vmatpush1.msra.mxu0 0.0
        %5985 = vmatprep.mubr.f32.mxu0 0.0
        %5986 = vmatmul.mubr.f32.gmra.mrb[0].mxu0 %v5916
        %v5987 = vpop.f32.mrb[0].mxu0
        %v5988 = vadd.f32 0.0, %v5987
        %v5989 = vpop.f32.mrb[0].mxu0
        %5990 = vdwg.mxu0
        %v5991 = vadd.f32 %v5897, %v5988
        %s5992 = scalar_lea.vmem %s3, 504
        %v5993 = vld [vmem:[%s5992] sm:$0xff]
        %v5994 = vld [vmem:[%s5992 + $0x8] sm:$0xff]
        %v5995 = vld [vmem:[%s5992 + $0x10] sm:$0x7f]
        %v5996 = vrot.slane %v3966, 5
        %v5997 = vrot.slane %v3969, 4
        %v5998 = vsel %vm4004, %v5997, %v5996
        %v5999 = vrot.slane %v3972, 3
        %v6000 = vsel %vm4007, %v5999, %v5998
        %v6001 = vrot.slane %v3975, 2
        %v6002 = vsel %vm4010, %v6001, %v6000
        %v6003 = vrot.slane %v3978, 1
        %v6004 = vsel %vm4013, %v6003, %v6002
        %v6005 = vsel %vm4016, %v3981, %v6004
        %v6006 = vrot.slane %v3984, 7
        %v6007 = vsel %vm4019, %v6006, %v6005
        %v6008 = vrot.slane %v3987, 6
        %v6009 = vsel %vm4022, %v6008, %v6007
        %v6010 = vsel %vm4024, %v6009, 0
        %v6013 = vsel %vm4027, %v5995, 0
        %6015 = vmatprep.subr.mxu0 0.0
        %6016 = vmatpush1.msra.mxu0 %v5993
        %6017 = vmatprep.subr.mxu0 0.0
        %6018 = vmatpush1.msra.mxu0 %v5994
        %6019 = vmatprep.subr.mxu0 0.0
        %6020 = vmatpush1.msra.mxu0 %v6013
        %6021 = vmatprep.subr.mxu0 0.0
        %6022 = vmatpush1.msra.mxu0 0.0
        %6023 = vmatprep.subr.mxu0 0.0
        %6024 = vmatpush1.msra.mxu0 0.0
        %6025 = vmatprep.subr.mxu0 0.0
        %6026 = vmatpush1.msra.mxu0 0.0
        %6027 = vmatprep.subr.mxu0 0.0
        %6028 = vmatpush1.msra.mxu0 0.0
        %6029 = vmatprep.subr.mxu0 0.0
        %6030 = vmatpush1.msra.mxu0 0.0
        %6031 = vmatprep.subr.mxu0 0.0
        %6032 = vmatpush1.msra.mxu0 0.0
        %6033 = vmatprep.subr.mxu0 0.0
        %6034 = vmatpush1.msra.mxu0 0.0
        %6035 = vmatprep.subr.mxu0 0.0
        %6036 = vmatpush1.msra.mxu0 0.0
        %6037 = vmatprep.subr.mxu0 0.0
        %6038 = vmatpush1.msra.mxu0 0.0
        %6039 = vmatprep.subr.mxu0 0.0
        %6040 = vmatpush1.msra.mxu0 0.0
        %6041 = vmatprep.subr.mxu0 0.0
        %6042 = vmatpush1.msra.mxu0 0.0
        %6043 = vmatprep.subr.mxu0 0.0
        %6044 = vmatpush1.msra.mxu0 0.0
        %6045 = vmatprep.subr.mxu0 0.0
        %6046 = vmatpush1.msra.mxu0 0.0
        %6047 = vmatprep.subr.mxu0 0.0
        %6048 = vmatpush1.msra.mxu0 0.0
        %6049 = vmatprep.subr.mxu0 0.0
        %6050 = vmatpush1.msra.mxu0 0.0
        %6051 = vmatprep.subr.mxu0 0.0
        %6052 = vmatpush1.msra.mxu0 0.0
        %6053 = vmatprep.subr.mxu0 0.0
        %6054 = vmatpush1.msra.mxu0 0.0
        %6055 = vmatprep.subr.mxu0 0.0
        %6056 = vmatpush1.msra.mxu0 0.0
        %6057 = vmatprep.subr.mxu0 0.0
        %6058 = vmatpush1.msra.mxu0 0.0
        %6059 = vmatprep.subr.mxu0 0.0
        %6060 = vmatpush1.msra.mxu0 0.0
        %6061 = vmatprep.subr.mxu0 0.0
        %6062 = vmatpush1.msra.mxu0 0.0
        %6063 = vmatprep.subr.mxu0 0.0
        %6064 = vmatpush1.msra.mxu0 0.0
        %6065 = vmatprep.subr.mxu0 0.0
        %6066 = vmatpush1.msra.mxu0 0.0
        %6067 = vmatprep.subr.mxu0 0.0
        %6068 = vmatpush1.msra.mxu0 0.0
        %6069 = vmatprep.subr.mxu0 0.0
        %6070 = vmatpush1.msra.mxu0 0.0
        %6071 = vmatprep.subr.mxu0 0.0
        %6072 = vmatpush1.msra.mxu0 0.0
        %6073 = vmatprep.subr.mxu0 0.0
        %6074 = vmatpush1.msra.mxu0 0.0
        %6075 = vmatprep.subr.mxu0 0.0
        %6076 = vmatpush1.msra.mxu0 0.0
        %6077 = vmatprep.subr.mxu0 0.0
        %6078 = vmatpush1.msra.mxu0 0.0
        %6079 = vmatprep.mubr.f32.mxu0 0.0
        %6080 = vmatmul.mubr.f32.gmra.mrb[0].mxu0 %v6010
        %v6081 = vpop.f32.mrb[0].mxu0
        %v6082 = vadd.f32 0.0, %v6081
        %v6083 = vpop.f32.mrb[0].mxu0
        %6084 = vdwg.mxu0
        %v6085 = vadd.f32 %v5991, %v6082
        %s6086 = scalar_lea.vmem %s3, 528
        %v6087 = vld [vmem:[%s6086] sm:$0xff]
        %v6088 = vld [vmem:[%s6086 + $0x8] sm:$0xff]
        %v6089 = vld [vmem:[%s6086 + $0x10] sm:$0x7f]
        %v6090 = vrot.slane %v3966, 6
        %v6091 = vrot.slane %v3969, 5
        %v6092 = vsel %vm4004, %v6091, %v6090
        %v6093 = vrot.slane %v3972, 4
        %v6094 = vsel %vm4007, %v6093, %v6092
        %v6095 = vrot.slane %v3975, 3
        %v6096 = vsel %vm4010, %v6095, %v6094
        %v6097 = vrot.slane %v3978, 2
        %v6098 = vsel %vm4013, %v6097, %v6096
        %v6099 = vrot.slane %v3981, 1
        %v6100 = vsel %vm4016, %v6099, %v6098
        %v6101 = vsel %vm4019, %v3984, %v6100
        %v6102 = vrot.slane %v3987, 7
        %v6103 = vsel %vm4022, %v6102, %v6101
        %v6104 = vsel %vm4024, %v6103, 0
        %v6107 = vsel %vm4027, %v6089, 0
        %6109 = vmatprep.subr.mxu0 0.0
        %6110 = vmatpush1.msra.mxu0 %v6087
        %6111 = vmatprep.subr.mxu0 0.0
        %6112 = vmatpush1.msra.mxu0 %v6088
        %6113 = vmatprep.subr.mxu0 0.0
        %6114 = vmatpush1.msra.mxu0 %v6107
        %6115 = vmatprep.subr.mxu0 0.0
        %6116 = vmatpush1.msra.mxu0 0.0
        %6117 = vmatprep.subr.mxu0 0.0
        %6118 = vmatpush1.msra.mxu0 0.0
        %6119 = vmatprep.subr.mxu0 0.0
        %6120 = vmatpush1.msra.mxu0 0.0
        %6121 = vmatprep.subr.mxu0 0.0
        %6122 = vmatpush1.msra.mxu0 0.0
        %6123 = vmatprep.subr.mxu0 0.0
        %6124 = vmatpush1.msra.mxu0 0.0
        %6125 = vmatprep.subr.mxu0 0.0
        %6126 = vmatpush1.msra.mxu0 0.0
        %6127 = vmatprep.subr.mxu0 0.0
        %6128 = vmatpush1.msra.mxu0 0.0
        %6129 = vmatprep.subr.mxu0 0.0
        %6130 = vmatpush1.msra.mxu0 0.0
        %6131 = vmatprep.subr.mxu0 0.0
        %6132 = vmatpush1.msra.mxu0 0.0
        %6133 = vmatprep.subr.mxu0 0.0
        %6134 = vmatpush1.msra.mxu0 0.0
        %6135 = vmatprep.subr.mxu0 0.0
        %6136 = vmatpush1.msra.mxu0 0.0
        %6137 = vmatprep.subr.mxu0 0.0
        %6138 = vmatpush1.msra.mxu0 0.0
        %6139 = vmatprep.subr.mxu0 0.0
        %6140 = vmatpush1.msra.mxu0 0.0
        %6141 = vmatprep.subr.mxu0 0.0
        %6142 = vmatpush1.msra.mxu0 0.0
        %6143 = vmatprep.subr.mxu0 0.0
        %6144 = vmatpush1.msra.mxu0 0.0
        %6145 = vmatprep.subr.mxu0 0.0
        %6146 = vmatpush1.msra.mxu0 0.0
        %6147 = vmatprep.subr.mxu0 0.0
        %6148 = vmatpush1.msra.mxu0 0.0
        %6149 = vmatprep.subr.mxu0 0.0
        %6150 = vmatpush1.msra.mxu0 0.0
        %6151 = vmatprep.subr.mxu0 0.0
        %6152 = vmatpush1.msra.mxu0 0.0
        %6153 = vmatprep.subr.mxu0 0.0
        %6154 = vmatpush1.msra.mxu0 0.0
        %6155 = vmatprep.subr.mxu0 0.0
        %6156 = vmatpush1.msra.mxu0 0.0
        %6157 = vmatprep.subr.mxu0 0.0
        %6158 = vmatpush1.msra.mxu0 0.0
        %6159 = vmatprep.subr.mxu0 0.0
        %6160 = vmatpush1.msra.mxu0 0.0
        %6161 = vmatprep.subr.mxu0 0.0
        %6162 = vmatpush1.msra.mxu0 0.0
        %6163 = vmatprep.subr.mxu0 0.0
        %6164 = vmatpush1.msra.mxu0 0.0
        %6165 = vmatprep.subr.mxu0 0.0
        %6166 = vmatpush1.msra.mxu0 0.0
        %6167 = vmatprep.subr.mxu0 0.0
        %6168 = vmatpush1.msra.mxu0 0.0
        %6169 = vmatprep.subr.mxu0 0.0
        %6170 = vmatpush1.msra.mxu0 0.0
        %6171 = vmatprep.subr.mxu0 0.0
        %6172 = vmatpush1.msra.mxu0 0.0
        %6173 = vmatprep.mubr.f32.mxu0 0.0
        %6174 = vmatmul.mubr.f32.gmra.mrb[0].mxu0 %v6104
        %v6175 = vpop.f32.mrb[0].mxu0
        %v6176 = vadd.f32 0.0, %v6175
        %v6177 = vpop.f32.mrb[0].mxu0
        %6178 = vdwg.mxu0
        %v6179 = vadd.f32 %v6085, %v6176
        %v6180 = vld [vmem:[%s4] sm:$0x1]
        %v6182 = vlaneseq
        %v6183 = vshrl.u32 %v6182, 7
        %v6184 = vsub.s32 0, %v6183
        %v6185 = vrot.slane %v6180, %v6184
        %v6187 = vadd.f32 %v6179, %v6185
        %vm6188 = vcmask 80896
        %6189 = vst.msk [vmem:[%s220] sm:$0xff] %vm6188, %v6187
        %s6190 = sand.u32 %s137, 1
        %s6191 = scalar_lea.sflag [#allocation4], %s6190
        %s6192 = sand.u32 %s137, 1
        %s6193 = smul.addr %s6192, 8
        %s6194 = scalar_lea.vmem [#allocation3], %s6193
        // Predicated region
        $region41: #{baseline_forward.1} parent=39 // pred_check
          %p6195 = pneg %p147
        $region42: #{baseline_forward.1} parent=39 // pred_check_branch
          %6197 = sbr.rel (%p6195) target = $region44
        $region43: #{baseline_forward.1} parent=39 // pred_region
          %s6199 = ssub.s32 128, 128
          %6200 = vsyncadd %s6191, %s6199
          %s6201 = smul.addr %s19, 128
          %s6202 = scalar_lea.hbm %s5, %s6201
          %s6204 = sshll.u32 %s6194, 4
          %s6205 = int_to_ptr.vmem [resolvable:$true] %s6204
          %6207 = dma.vmem_to_hbm [thread:$0]  %s6205, 128, %s6202, %s6191
        $region44: #{baseline_forward.1} parent=39 // pred_fallthru
          _
      $region40: #{baseline_forward.1} parent=5 // pred_fallthru
        _
      %p6208 = scmp.le.s32.totalorder 2, %s14
      // Predicated region
      $region45: #{baseline_forward.1} parent=5 // pred_check
        %p6209 = pneg %p6208
      $region46: #{baseline_forward.1} parent=5 // pred_check_branch
        %6211 = sbr.rel (%p6209) target = $region48
      $region47: #{baseline_forward.1} parent=5 // pred_region
        %s6212 = ssub.s32 %s14, 2
        // Predicated region
        $region49: #{baseline_forward.1} parent=47 // pred_check
          %p6213 = pneg %p153
        $region50: #{baseline_forward.1} parent=47 // pred_check_branch
          %6215 = sbr.rel (%p6213) target = $region52
        $region51: #{baseline_forward.1} parent=47 // pred_region
          %s6216 = sand.u32 %s138, 1
          %s6217 = scalar_lea.sflag [#allocation4], %s6216
          %s6218 = sand.u32 %s138, 1
          %s6219 = smul.addr %s6218, 8
          %s6220 = scalar_lea.vmem [#allocation3], %s6219
          %6221 = dma.done %s6217, 128
        $region52: #{baseline_forward.1} parent=47 // pred_fallthru
          _
      $region48: #{baseline_forward.1} parent=5 // pred_fallthru
        _
    $region6: #{baseline_forward.1} parent=1 // loop_footer
      %s18 = sadd.s32 1, %s14
    $region7: #{baseline_forward.1} parent=1 // loop_footer_branch
      %13 = sbr.rel target = $region3
    $region8: #{baseline_forward.1} parent=1 // loop_exit
      _
    %6222 = vsyncpa [#allocation4], 1
    %s6223 = scalar_lea.sflag [#allocation4], 1
    %6224 = vsyncpa %s6223, 1

</llo_original>
